<compile_context>
chip_gen: v6e
topology: v6e:2x2x1
jax: 0.10.0
libtpu: 0.0.40
codegen_flags: <defaults>
</compile_context>

<pallas_src>
import math

import jax
import jax.numpy as jnp
from jax.experimental import pallas as pl
from jax.experimental.pallas import tpu as pltpu

# ---- small synthetic config (real BioLinkBERT-base: H=768, 12 layers) ------
B = 2               # batch
S = 8               # sequence length ("max_length")
H = 256             # hidden size
NUM_HEADS = 2
DH = H // NUM_HEADS  # 128 -> per-head slices are 128-lane aligned
INTER = 512         # FFN intermediate size
VOCAB = 128
N_LAYERS = 2
LN_EPS = 1e-12      # BERT LayerNorm eps
NEG_INF = -1e9      # additive bias for padded key positions
BS = B * S


# --------------------------- shared math helpers ----------------------------
def _layernorm(x, gamma, beta):
    mu = jnp.mean(x, axis=-1, keepdims=True)
    var = jnp.mean((x - mu) ** 2, axis=-1, keepdims=True)
    return (x - mu) * jax.lax.rsqrt(var + LN_EPS) * gamma + beta


def _gelu(x):
    # TODO(synk): HF BERT uses erf-based GELU; tanh approximation used for a
    #             guaranteed clean Mosaic/EUP lowering (tiny numeric delta).
    c = math.sqrt(2.0 / math.pi)
    return 0.5 * x * (1.0 + jnp.tanh(c * (x + 0.044715 * x * x * x)))


# ------------------------------- fused kernel --------------------------------
def bert_fused_kernel(ids_ref,                          # (BS, 1) int32
                      bias_ref,                         # (B, 1, S) f32 mask bias
                      we_ref, pte_ref,                  # word emb, pos+type emb
                      eg_ref, eb_ref,                   # embedding LayerNorm
                      wqkv_ref, bqkv_ref,               # fused QKV (Q pre-scaled)
                      wo_ref, bo_ref, g1_ref, b1_ref,   # attn out proj + LN1
                      wi_ref, bi_ref, wf_ref, bf_ref,   # FFN
                      g2_ref, b2_ref,                   # LN2
                      out_ref,                          # (BS, H) f32
                      x_sc):                            # VMEM scratch (BS, H)
    layer = pl.program_id(0)
    last = pl.num_programs(0) - 1

    # ---- layer 0 only: vectorized embedding lookup (one-hot MXU gather) ----
    @pl.when(layer == 0)
    def _embed():
        iota = jax.lax.broadcasted_iota(jnp.int32, (BS, VOCAB), 1)
        one_hot = (iota == ids_ref[...]).astype(jnp.float32)     # (BS, VOCAB)
        emb = jnp.dot(one_hot, we_ref[...],                      # exact gather
                      preferred_element_type=jnp.float32)
        x_sc[...] = _layernorm(emb + pte_ref[...], eg_ref[...], eb_ref[...])

    # ---- transformer layer `layer` (activations resident in x_sc) ----------
    x = x_sc[...]                                                # (BS, H) f32
    xb = x.astype(jnp.bfloat16)

    # fused QKV projection: one full-width MXU matmul (BS,H)@(H,3H)
    qkv = jnp.dot(xb, wqkv_ref[...],
                  preferred_element_type=jnp.float32) + bqkv_ref[...]

    bias = bias_ref[...]                       # precomputed once in wrapper

    ctx_heads = []
    for h in range(NUM_HEADS):                 # trace-time unroll; DH=128 so
        qo, ko, vo = h * DH, H + h * DH, 2 * H + h * DH   # slices lane-aligned
        qh = qkv[:, qo:qo + DH].reshape(B, S, DH).astype(jnp.bfloat16)
        kh = qkv[:, ko:ko + DH].reshape(B, S, DH).astype(jnp.bfloat16)
        vh = qkv[:, vo:vo + DH].reshape(B, S, DH).astype(jnp.bfloat16)

        # 1/sqrt(DH) already folded into Wq/bq at init (frozen weights).
        s_ = jnp.einsum('bqd,bkd->bqk', qh, kh,
                        preferred_element_type=jnp.float32) + bias
        m = jnp.max(s_, axis=-1, keepdims=True)
        p = jnp.exp(s_ - m)
        p = p / jnp.sum(p, axis=-1, keepdims=True)        # exact (HF parity)
        ctx = jnp.einsum('bqk,bkd->bqd', p.astype(jnp.bfloat16), vh,
                         preferred_element_type=jnp.float32)
        ctx_heads.append(ctx.reshape(BS, DH))             # stays in registers

    ctx_all = jnp.concatenate(ctx_heads, axis=-1)         # (BS, H), no scratch

    # single full-width output projection over all heads
    attn = jnp.dot(ctx_all.astype(jnp.bfloat16), wo_ref[...],
                   preferred_element_type=jnp.float32) + bo_ref[...]

    # attention residual + LayerNorm (f32 elementwise)
    x1 = _layernorm(x + attn, g1_ref[...], b1_ref[...])

    # feed-forward (GELU) + residual + LayerNorm
    hmid = _gelu(jnp.dot(x1.astype(jnp.bfloat16), wi_ref[...],
                         preferred_element_type=jnp.float32) + bi_ref[...])
    ff = jnp.dot(hmid.astype(jnp.bfloat16), wf_ref[...],
                 preferred_element_type=jnp.float32) + bf_ref[...]
    y = _layernorm(x1 + ff, g2_ref[...], b2_ref[...])

    @pl.when(layer < last)
    def _carry():
        x_sc[...] = y                          # carry activations to next layer

    @pl.when(layer == last)
    def _finalize():
        out_ref[...] = y                       # write output directly, once


# --------------------------- pallas_call wrapper -----------------------------
def _bert_forward_call(ids2, bias3, p):
    fixed2 = lambda l: (0, 0)                  # layer-invariant 2-D inputs
    fixed3 = lambda l: (0, 0, 0)               # layer-invariant 3-D inputs
    perlyr = lambda l: (l, 0, 0)               # stacked per-layer weights

    in_specs = [
        pl.BlockSpec((BS, 1), fixed2),             # token ids (int32)
        pl.BlockSpec((B, 1, S), fixed3),           # precomputed mask bias
        pl.BlockSpec((VOCAB, H), fixed2),          # word embeddings (f32)
        pl.BlockSpec((BS, H), fixed2),             # pos+type emb, pre-tiled
        pl.BlockSpec((1, H), fixed2),              # emb LN gamma
        pl.BlockSpec((1, H), fixed2),              # emb LN beta
        pl.BlockSpec((None, H, 3 * H), perlyr),    # Wqkv (bf16, Q pre-scaled)
        pl.BlockSpec((None, 1, 3 * H), perlyr),    # bqkv
        pl.BlockSpec((None, H, H), perlyr),        # Wo (bf16)
        pl.BlockSpec((None, 1, H), perlyr),        # bo
        pl.BlockSpec((None, 1, H), perlyr),        # LN1 gamma
        pl.BlockSpec((None, 1, H), perlyr),        # LN1 beta
        pl.BlockSpec((None, H, INTER), perlyr),    # Wi (bf16)
        pl.BlockSpec((None, 1, INTER), perlyr),    # bi
        pl.BlockSpec((None, INTER, H), perlyr),    # Wf (bf16)
        pl.BlockSpec((None, 1, H), perlyr),        # bf
        pl.BlockSpec((None, 1, H), perlyr),        # LN2 gamma
        pl.BlockSpec((None, 1, H), perlyr),        # LN2 beta
    ]

    grid_spec = pltpu.PrefetchScalarGridSpec(
        num_scalar_prefetch=0,
        grid=(N_LAYERS,),
        in_specs=in_specs,
        out_specs=pl.BlockSpec((BS, H), fixed2),   # resident across layers
        scratch_shapes=[pltpu.VMEM((BS, H), jnp.float32)],   # activations
    )

    return pl.pallas_call(
        bert_fused_kernel,
        out_shape=jax.ShapeDtypeStruct((BS, H), jnp.float32),
        grid_spec=grid_spec,
        compiler_params=pltpu.CompilerParams(
            dimension_semantics=("arbitrary",)),
    )(ids2, bias3, p['word_emb'], p['pos_type_emb'],
      p['emb_gamma'], p['emb_beta'],
      p['wqkv'], p['bqkv'], p['wo'], p['bo'], p['ln1_g'], p['ln1_b'],
      p['wi'], p['bi'], p['wf'], p['bf'], p['ln2_g'], p['ln2_b'])


# ------------------------- parameter construction ---------------------------
def init_params(key):
    def normal(k, shape, scale=0.02):
        return scale * jax.random.normal(k, shape, dtype=jnp.float32)

    keys = jax.random.split(key, 3 + N_LAYERS)
    word_emb = normal(keys[0], (VOCAB, H))
    pos_emb = normal(keys[1], (S, H))
    type_row = normal(keys[2], (1, H))                    # token_type_ids == 0
    # frozen model: position + token-type embeddings are constants -> pre-add
    # and pre-tile over the batch once here.
    pos_type_emb = jnp.tile(pos_emb, (B, 1)) + type_row   # (BS, H)

    inv_sqrt_dh = 1.0 / math.sqrt(DH)
    wqkv, bqkv, wo, bo, wi, bi, wf, bf = ([] for _ in range(8))
    for li in range(N_LAYERS):
        lk = jax.random.split(keys[3 + li], 12)
        # fold the 1/sqrt(DH) attention scale into the frozen Q projection
        wq = normal(lk[0], (H, H)) * inv_sqrt_dh
        bq = normal(lk[1], (1, H)) * inv_sqrt_dh
        wk, bk = normal(lk[2], (H, H)), normal(lk[3], (1, H))
        wv, bv = normal(lk[4], (H, H)), normal(lk[5], (1, H))
        wqkv.append(jnp.concatenate([wq, wk, wv], axis=1))    # (H, 3H)
        bqkv.append(jnp.concatenate([bq, bk, bv], axis=1))    # (1, 3H)
        wo.append(normal(lk[6], (H, H))); bo.append(normal(lk[7], (1, H)))
        wi.append(normal(lk[8], (H, INTER))); bi.append(normal(lk[9], (1, INTER)))
        wf.append(normal(lk[10], (INTER, H))); bf.append(normal(lk[11], (1, H)))

    # frozen matmul weights stored in bf16; biases / LN / embeddings stay f32
    return {
        'word_emb': word_emb,
        'pos_type_emb': pos_type_emb,
        'emb_gamma': jnp.ones((1, H), jnp.float32),
        'emb_beta': jnp.zeros((1, H), jnp.float32),
        'wqkv': jnp.stack(wqkv).astype(jnp.bfloat16),
        'bqkv': jnp.stack(bqkv),
        'wo': jnp.stack(wo).astype(jnp.bfloat16),
        'bo': jnp.stack(bo),
        'ln1_g': jnp.ones((N_LAYERS, 1, H), jnp.float32),
        'ln1_b': jnp.zeros((N_LAYERS, 1, H), jnp.float32),
        'wi': jnp.stack(wi).astype(jnp.bfloat16),
        'bi': jnp.stack(bi),
        'wf': jnp.stack(wf).astype(jnp.bfloat16),
        'bf': jnp.stack(bf),
        'ln2_g': jnp.ones((N_LAYERS, 1, H), jnp.float32),
        'ln2_b': jnp.zeros((N_LAYERS, 1, H), jnp.float32),
    }


# ----------------------------- forward pass ----------------------------------
def bert_embedder_forward(input_ids, attention_mask, params):
    """Mirrors BertEmbedder.forward: returns (tokens, last_hidden_state, mask)."""
    # TODO(synk): HuggingFace tokenizer (text -> input_ids) has no kernel
    #             equivalent; pre-tokenized ids are used instead.
    ids2 = input_ids.reshape(BS, 1).astype(jnp.int32)
    bias3 = (1.0 - attention_mask.astype(jnp.float32)).reshape(B, 1, S) * NEG_INF
    z = _bert_forward_call(ids2, bias3, params).reshape(B, S, H)
    return input_ids, z, attention_mask


# ------------------------- pure-JAX reference (check) ------------------------
def bert_reference(input_ids, attention_mask, p):
    ids = input_ids.reshape(BS)
    x = p['word_emb'][ids] + p['pos_type_emb']
    x = _layernorm(x, p['emb_gamma'], p['emb_beta'])
    bias = (1.0 - attention_mask.astype(jnp.float32)).reshape(B, 1, S) * NEG_INF
    for l in range(N_LAYERS):
        xb = x.astype(jnp.bfloat16)
        qkv = jnp.dot(xb, p['wqkv'][l],
                      preferred_element_type=jnp.float32) + p['bqkv'][l]
        ctx_heads = []
        for h in range(NUM_HEADS):
            qo, ko, vo = h * DH, H + h * DH, 2 * H + h * DH
            qh = qkv[:, qo:qo + DH].reshape(B, S, DH).astype(jnp.bfloat16)
            kh = qkv[:, ko:ko + DH].reshape(B, S, DH).astype(jnp.bfloat16)
            vh = qkv[:, vo:vo + DH].reshape(B, S, DH).astype(jnp.bfloat16)
            s_ = jnp.einsum('bqd,bkd->bqk', qh, kh,
                            preferred_element_type=jnp.float32) + bias
            pr = jnp.exp(s_ - jnp.max(s_, axis=-1, keepdims=True))
            pr = pr / jnp.sum(pr, axis=-1, keepdims=True)
            ctx = jnp.einsum('bqk,bkd->bqd', pr.astype(jnp.bfloat16), vh,
                             preferred_element_type=jnp.float32)
            ctx_heads.append(ctx.reshape(BS, DH))
        ctx_all = jnp.concatenate(ctx_heads, axis=-1)
        attn = jnp.dot(ctx_all.astype(jnp.bfloat16), p['wo'][l],
                       preferred_element_type=jnp.float32) + p['bo'][l]
        x1 = _layernorm(x + attn, p['ln1_g'][l], p['ln1_b'][l])
        hmid = _gelu(jnp.dot(x1.astype(jnp.bfloat16), p['wi'][l],
                             preferred_element_type=jnp.float32) + p['bi'][l])
        ff = jnp.dot(hmid.astype(jnp.bfloat16), p['wf'][l],
                     preferred_element_type=jnp.float32) + p['bf'][l]
        x = _layernorm(x1 + ff, p['ln2_g'][l], p['ln2_b'][l])
    return x.reshape(B, S, H)


# --------------------------------- main ---------------------------------------
if __name__ == "__main__":
    key = jax.random.PRNGKey(0)
    pkey, dkey = jax.random.split(key)
    params = init_params(pkey)

    # deterministic "tokenized" batch: ids in [1, VOCAB), with padding at the
    # end of the second sequence (pad token id 0, attention_mask 0 there).
    input_ids = jax.random.randint(dkey, (B, S), 1, VOCAB, dtype=jnp.int32)
    attention_mask = jnp.ones((B, S), dtype=jnp.int32)
    attention_mask = attention_mask.at[1, S - 2:].set(0)
    input_ids = jnp.where(attention_mask == 1, input_ids, 0)

    tokens, z, mask = bert_embedder_forward(input_ids, attention_mask, params)
    z = jax.block_until_ready(z)

    z_ref = bert_reference(input_ids, attention_mask, params)

    assert tokens.shape == (B, S)
    assert z.shape == (B, S, H) and z.dtype == jnp.float32
    assert mask.shape == (B, S)
    assert bool(jnp.all(jnp.isfinite(z)))
    assert bool(jnp.allclose(z, z_ref, rtol=1e-2, atol=1e-2)), \
        float(jnp.max(jnp.abs(z - z_ref)))
    print("KERNEL_OK")
</pallas_src>

<mosaic_0001>
module attributes {stable_mosaic.version = 11 : i64} {
  func.func @bert_fused_kernel(%arg0: i32, %arg1: memref<16x1xi32, #tpu.memory_space<vmem>>, %arg2: memref<2x1x8xf32, #tpu.memory_space<vmem>>, %arg3: memref<128x256xf32, #tpu.memory_space<vmem>>, %arg4: memref<16x256xf32, #tpu.memory_space<vmem>>, %arg5: memref<1x256xf32, #tpu.memory_space<vmem>>, %arg6: memref<1x256xf32, #tpu.memory_space<vmem>>, %arg7: memref<1x256x768xbf16, #tpu.memory_space<vmem>>, %arg8: memref<1x1x768xf32, #tpu.memory_space<vmem>>, %arg9: memref<1x256x256xbf16, #tpu.memory_space<vmem>>, %arg10: memref<1x1x256xf32, #tpu.memory_space<vmem>>, %arg11: memref<1x1x256xf32, #tpu.memory_space<vmem>>, %arg12: memref<1x1x256xf32, #tpu.memory_space<vmem>>, %arg13: memref<1x256x512xbf16, #tpu.memory_space<vmem>>, %arg14: memref<1x1x512xf32, #tpu.memory_space<vmem>>, %arg15: memref<1x512x256xbf16, #tpu.memory_space<vmem>>, %arg16: memref<1x1x256xf32, #tpu.memory_space<vmem>>, %arg17: memref<1x1x256xf32, #tpu.memory_space<vmem>>, %arg18: memref<1x1x256xf32, #tpu.memory_space<vmem>>, %arg19: memref<16x256xf32, #tpu.memory_space<vmem>>, %arg20: memref<16x256xf32, #tpu.memory_space<vmem>>) attributes {dimension_semantics = [#tpu.dimension_semantics<arbitrary>], iteration_bounds = array<i64: 2>, scalar_prefetch = 0 : i64, scratch_operands = 1 : i64, tpu.core_type = #tpu.core_type<tc>, window_params = [{pipeline_mode = #tpu.pipeline_mode<synchronous>, transform_indices = @transform_0, window_bounds = array<i64: 16, 1>}, {pipeline_mode = #tpu.pipeline_mode<synchronous>, transform_indices = @transform_1, window_bounds = array<i64: 2, 1, 8>}, {pipeline_mode = #tpu.pipeline_mode<synchronous>, transform_indices = @transform_2, window_bounds = array<i64: 128, 256>}, {pipeline_mode = #tpu.pipeline_mode<synchronous>, transform_indices = @transform_3, window_bounds = array<i64: 16, 256>}, {pipeline_mode = #tpu.pipeline_mode<synchronous>, transform_indices = @transform_4, window_bounds = array<i64: 1, 256>}, {pipeline_mode = #tpu.pipeline_mode<synchronous>, transform_indices = @transform_5, window_bounds = array<i64: 1, 256>}, {transform_indices = @transform_6, window_bounds = array<i64: 1, 256, 768>}, {transform_indices = @transform_7, window_bounds = array<i64: 1, 1, 768>}, {transform_indices = @transform_8, window_bounds = array<i64: 1, 256, 256>}, {transform_indices = @transform_9, window_bounds = array<i64: 1, 1, 256>}, {transform_indices = @transform_10, window_bounds = array<i64: 1, 1, 256>}, {transform_indices = @transform_11, window_bounds = array<i64: 1, 1, 256>}, {transform_indices = @transform_12, window_bounds = array<i64: 1, 256, 512>}, {transform_indices = @transform_13, window_bounds = array<i64: 1, 1, 512>}, {transform_indices = @transform_14, window_bounds = array<i64: 1, 512, 256>}, {transform_indices = @transform_15, window_bounds = array<i64: 1, 1, 256>}, {transform_indices = @transform_16, window_bounds = array<i64: 1, 1, 256>}, {transform_indices = @transform_17, window_bounds = array<i64: 1, 1, 256>}, {pipeline_mode = #tpu.pipeline_mode<synchronous>, transform_indices = @transform_18, window_bounds = array<i64: 16, 256>}]} {
    %c0_i32 = arith.constant 0 : i32
    %0 = arith.cmpi eq, %arg0, %c0_i32 : i32
    %1 = arith.extui %0 : i1 to i32
    %c0_i32_0 = arith.constant 0 : i32
    %2 = arith.cmpi ne, %1, %c0_i32_0 : i32
    scf.if %2 {
      %159 = tpu.iota {dimensions = array<i32: 1>} : vector<16x128xi32>
      %c0_69 = arith.constant 0 : index
      %c0_70 = arith.constant 0 : index
      %160 = vector.load %arg1[%c0_69, %c0_70] : memref<16x1xi32, #tpu.memory_space<vmem>>, vector<16x1xi32>
      %161 = vector.broadcast %160 : vector<16x1xi32> to vector<16x128xi32>
      %162 = arith.cmpi eq, %159, %161 : vector<16x128xi32>
      %163 = arith.extui %162 : vector<16x128xi1> to vector<16x128xi32>
      %164 = arith.sitofp %163 : vector<16x128xi32> to vector<16x128xf32>
      %c0_71 = arith.constant 0 : index
      %c0_72 = arith.constant 0 : index
      %165 = vector.load %arg3[%c0_71, %c0_72] : memref<128x256xf32, #tpu.memory_space<vmem>>, vector<128x256xf32>
      %cst_73 = arith.constant dense<0.000000e+00> : vector<16x256xf32>
      %166 = tpu.matmul %164, %165, %cst_73 {dimension_numbers = #tpu.dot_dimension_numbers<[1], [0], [0], [1], [0, 0, 1, 1], [], []>} : vector<16x128xf32>, vector<128x256xf32>, vector<16x256xf32> -> vector<16x256xf32>
      %c0_74 = arith.constant 0 : index
      %c0_75 = arith.constant 0 : index
      %167 = vector.load %arg4[%c0_74, %c0_75] : memref<16x256xf32, #tpu.memory_space<vmem>>, vector<16x256xf32>
      %168 = arith.addf %166, %167 : vector<16x256xf32>
      %c0_76 = arith.constant 0 : index
      %c0_77 = arith.constant 0 : index
      %169 = vector.load %arg5[%c0_76, %c0_77] : memref<1x256xf32, #tpu.memory_space<vmem>>, vector<1x256xf32>
      %c0_78 = arith.constant 0 : index
      %c0_79 = arith.constant 0 : index
      %170 = vector.load %arg6[%c0_78, %c0_79] : memref<1x256xf32, #tpu.memory_space<vmem>>, vector<1x256xf32>
      %cst_80 = arith.constant dense<0.000000e+00> : vector<16xf32>
      %171 = vector.multi_reduction <add>, %168, %cst_80 [1] : vector<16x256xf32> to vector<16xf32>
      %172 = vector.shape_cast %171 : vector<16xf32> to vector<16x1xf32>
      %cst_81 = arith.constant 2.560000e+02 : f32
      %173 = vector.broadcast %cst_81 : f32 to vector<16x1xf32>
      %174 = arith.divf %172, %173 : vector<16x1xf32>
      %175 = vector.broadcast %174 : vector<16x1xf32> to vector<16x256xf32>
      %176 = arith.subf %168, %175 : vector<16x256xf32>
      %177 = arith.mulf %176, %176 : vector<16x256xf32>
      %cst_82 = arith.constant dense<0.000000e+00> : vector<16xf32>
      %178 = vector.multi_reduction <add>, %177, %cst_82 [1] : vector<16x256xf32> to vector<16xf32>
      %179 = vector.shape_cast %178 : vector<16xf32> to vector<16x1xf32>
      %cst_83 = arith.constant 2.560000e+02 : f32
      %180 = vector.broadcast %cst_83 : f32 to vector<16x1xf32>
      %181 = arith.divf %179, %180 : vector<16x1xf32>
      %182 = vector.broadcast %174 : vector<16x1xf32> to vector<16x256xf32>
      %183 = arith.subf %168, %182 : vector<16x256xf32>
      %cst_84 = arith.constant 9.99999996E-13 : f32
      %184 = vector.broadcast %cst_84 : f32 to vector<16x1xf32>
      %185 = arith.addf %181, %184 : vector<16x1xf32>
      %186 = math.rsqrt %185 : vector<16x1xf32>
      %187 = vector.broadcast %186 : vector<16x1xf32> to vector<16x256xf32>
      %188 = arith.mulf %183, %187 : vector<16x256xf32>
      %189 = vector.broadcast %169 : vector<1x256xf32> to vector<16x256xf32>
      %190 = arith.mulf %188, %189 : vector<16x256xf32>
      %191 = vector.broadcast %170 : vector<1x256xf32> to vector<16x256xf32>
      %192 = arith.addf %190, %191 : vector<16x256xf32>
      %c0_85 = arith.constant 0 : index
      %c0_86 = arith.constant 0 : index
      %193 = vector.load %arg20[%c0_85, %c0_86] : memref<16x256xf32, #tpu.memory_space<vmem>>, vector<16x256xf32>
      tpu.vector_store %arg20[%c0_85, %c0_86], %192 {strides = array<i32>} : memref<16x256xf32, #tpu.memory_space<vmem>>, vector<16x256xf32>,
    } else {
    }
    %c0 = arith.constant 0 : index
    %c0_1 = arith.constant 0 : index
    %3 = vector.load %arg20[%c0, %c0_1] : memref<16x256xf32, #tpu.memory_space<vmem>>, vector<16x256xf32>
    %4 = arith.truncf %3 : vector<16x256xf32> to vector<16x256xbf16>
    %c0_2 = arith.constant 0 : index
    %c0_3 = arith.constant 0 : index
    %c0_4 = arith.constant 0 : index
    %5 = vector.load %arg7[%c0_2, %c0_3, %c0_4] : memref<1x256x768xbf16, #tpu.memory_space<vmem>>, vector<1x256x768xbf16>
    %6 = vector.shape_cast %5 : vector<1x256x768xbf16> to vector<256x768xbf16>
    %cst = arith.constant dense<0.000000e+00> : vector<16x768xf32>
    %7 = tpu.matmul %4, %6, %cst {dimension_numbers = #tpu.dot_dimension_numbers<[1], [0], [0], [1], [0, 0, 1, 1], [], []>} : vector<16x256xbf16>, vector<256x768xbf16>, vector<16x768xf32> -> vector<16x768xf32>
    %c0_5 = arith.constant 0 : index
    %c0_6 = arith.constant 0 : index
    %c0_7 = arith.constant 0 : index
    %8 = vector.load %arg8[%c0_5, %c0_6, %c0_7] : memref<1x1x768xf32, #tpu.memory_space<vmem>>, vector<1x1x768xf32>
    %9 = vector.shape_cast %8 : vector<1x1x768xf32> to vector<1x768xf32>
    %10 = vector.broadcast %9 : vector<1x768xf32> to vector<16x768xf32>
    %11 = arith.addf %7, %10 : vector<16x768xf32>
    %c0_8 = arith.constant 0 : index
    %c0_9 = arith.constant 0 : index
    %c0_10 = arith.constant 0 : index
    %12 = vector.load %arg2[%c0_8, %c0_9, %c0_10] : memref<2x1x8xf32, #tpu.memory_space<vmem>>, vector<2x1x8xf32>
    %13 = vector.extract_strided_slice %11 {offsets = [0, 0], sizes = [16, 128], strides = [1, 1]} : vector<16x768xf32> to vector<16x128xf32>
    %14 = vector.shape_cast %13 : vector<16x128xf32> to vector<2x8x128xf32>
    %15 = arith.truncf %14 : vector<2x8x128xf32> to vector<2x8x128xbf16>
    %16 = vector.extract_strided_slice %11 {offsets = [0, 256], sizes = [16, 128], strides = [1, 1]} : vector<16x768xf32> to vector<16x128xf32>
    %17 = vector.shape_cast %16 : vector<16x128xf32> to vector<2x8x128xf32>
    %18 = arith.truncf %17 : vector<2x8x128xf32> to vector<2x8x128xbf16>
    %19 = vector.extract_strided_slice %11 {offsets = [0, 512], sizes = [16, 128], strides = [1, 1]} : vector<16x768xf32> to vector<16x128xf32>
    %20 = vector.shape_cast %19 : vector<16x128xf32> to vector<2x8x128xf32>
    %21 = arith.truncf %20 : vector<2x8x128xf32> to vector<2x8x128xbf16>
    "tpu.trace_start"() <{level = 10 : i32, message = "bqd,bkd->bqk"}> : () -> ()
    %cst_11 = arith.constant dense<0.000000e+00> : vector<2x8x8xf32>
    %22 = tpu.matmul %15, %18, %cst_11 {dimension_numbers = #tpu.dot_dimension_numbers<[2], [2], [1], [1], [0, 0, 0, 1, 1, 1], [0], [0]>} : vector<2x8x128xbf16>, vector<2x8x128xbf16>, vector<2x8x8xf32> -> vector<2x8x8xf32>
    "tpu.trace_stop"() : () -> ()
    %23 = vector.broadcast %12 : vector<2x1x8xf32> to vector<2x8x8xf32>
    %24 = arith.addf %22, %23 : vector<2x8x8xf32>
    %cst_12 = arith.constant dense<0xFF800000> : vector<2x8xf32>
    %25 = vector.multi_reduction <maximumf>, %24, %cst_12 [2] : vector<2x8x8xf32> to vector<2x8xf32>
    %26 = vector.shape_cast %25 : vector<2x8xf32> to vector<2x8x1xf32>
    %27 = vector.broadcast %26 : vector<2x8x1xf32> to vector<2x8x8xf32>
    %28 = arith.subf %24, %27 : vector<2x8x8xf32>
    %29 = math.exp %28 : vector<2x8x8xf32>
    %cst_13 = arith.constant dense<0.000000e+00> : vector<2x8xf32>
    %30 = vector.multi_reduction <add>, %29, %cst_13 [2] : vector<2x8x8xf32> to vector<2x8xf32>
    %31 = vector.shape_cast %30 : vector<2x8xf32> to vector<2x8x1xf32>
    %32 = vector.broadcast %31 : vector<2x8x1xf32> to vector<2x8x8xf32>
    %33 = arith.divf %29, %32 : vector<2x8x8xf32>
    %34 = arith.truncf %33 : vector<2x8x8xf32> to vector<2x8x8xbf16>
    "tpu.trace_start"() <{level = 10 : i32, message = "bqk,bkd->bqd"}> : () -> ()
    %cst_14 = arith.constant dense<0.000000e+00> : vector<2x8x128xf32>
    %35 = tpu.matmul %34, %21, %cst_14 {dimension_numbers = #tpu.dot_dimension_numbers<[2], [1], [1], [2], [0, 0, 0, 1, 1, 2], [0], [0]>} : vector<2x8x8xbf16>, vector<2x8x128xbf16>, vector<2x8x128xf32> -> vector<2x8x128xf32>
    "tpu.trace_stop"() : () -> ()
    %36 = vector.shape_cast %35 : vector<2x8x128xf32> to vector<16x128xf32>
    %37 = vector.extract_strided_slice %11 {offsets = [0, 128], sizes = [16, 128], strides = [1, 1]} : vector<16x768xf32> to vector<16x128xf32>
    %38 = vector.shape_cast %37 : vector<16x128xf32> to vector<2x8x128xf32>
    %39 = arith.truncf %38 : vector<2x8x128xf32> to vector<2x8x128xbf16>
    %40 = vector.extract_strided_slice %11 {offsets = [0, 384], sizes = [16, 128], strides = [1, 1]} : vector<16x768xf32> to vector<16x128xf32>
    %41 = vector.shape_cast %40 : vector<16x128xf32> to vector<2x8x128xf32>
    %42 = arith.truncf %41 : vector<2x8x128xf32> to vector<2x8x128xbf16>
    %43 = vector.extract_strided_slice %11 {offsets = [0, 640], sizes = [16, 128], strides = [1, 1]} : vector<16x768xf32> to vector<16x128xf32>
    %44 = vector.shape_cast %43 : vector<16x128xf32> to vector<2x8x128xf32>
    %45 = arith.truncf %44 : vector<2x8x128xf32> to vector<2x8x128xbf16>
    "tpu.trace_start"() <{level = 10 : i32, message = "bqd,bkd->bqk"}> : () -> ()
    %cst_15 = arith.constant dense<0.000000e+00> : vector<2x8x8xf32>
    %46 = tpu.matmul %39, %42, %cst_15 {dimension_numbers = #tpu.dot_dimension_numbers<[2], [2], [1], [1], [0, 0, 0, 1, 1, 1], [0], [0]>} : vector<2x8x128xbf16>, vector<2x8x128xbf16>, vector<2x8x8xf32> -> vector<2x8x8xf32>
    "tpu.trace_stop"() : () -> ()
    %47 = vector.broadcast %12 : vector<2x1x8xf32> to vector<2x8x8xf32>
    %48 = arith.addf %46, %47 : vector<2x8x8xf32>
    %cst_16 = arith.constant dense<0xFF800000> : vector<2x8xf32>
    %49 = vector.multi_reduction <maximumf>, %48, %cst_16 [2] : vector<2x8x8xf32> to vector<2x8xf32>
    %50 = vector.shape_cast %49 : vector<2x8xf32> to vector<2x8x1xf32>
    %51 = vector.broadcast %50 : vector<2x8x1xf32> to vector<2x8x8xf32>
    %52 = arith.subf %48, %51 : vector<2x8x8xf32>
    %53 = math.exp %52 : vector<2x8x8xf32>
    %cst_17 = arith.constant dense<0.000000e+00> : vector<2x8xf32>
    %54 = vector.multi_reduction <add>, %53, %cst_17 [2] : vector<2x8x8xf32> to vector<2x8xf32>
    %55 = vector.shape_cast %54 : vector<2x8xf32> to vector<2x8x1xf32>
    %56 = vector.broadcast %55 : vector<2x8x1xf32> to vector<2x8x8xf32>
    %57 = arith.divf %53, %56 : vector<2x8x8xf32>
    %58 = arith.truncf %57 : vector<2x8x8xf32> to vector<2x8x8xbf16>
    "tpu.trace_start"() <{level = 10 : i32, message = "bqk,bkd->bqd"}> : () -> ()
    %cst_18 = arith.constant dense<0.000000e+00> : vector<2x8x128xf32>
    %59 = tpu.matmul %58, %45, %cst_18 {dimension_numbers = #tpu.dot_dimension_numbers<[2], [1], [1], [2], [0, 0, 0, 1, 1, 2], [0], [0]>} : vector<2x8x8xbf16>, vector<2x8x128xbf16>, vector<2x8x128xf32> -> vector<2x8x128xf32>
    "tpu.trace_stop"() : () -> ()
    %60 = vector.shape_cast %59 : vector<2x8x128xf32> to vector<16x128xf32>
    %61 = tpu.concatenate %36, %60 in 1 : vector<16x128xf32>, vector<16x128xf32> -> vector<16x256xf32>
    %62 = arith.truncf %61 : vector<16x256xf32> to vector<16x256xbf16>
    %c0_19 = arith.constant 0 : index
    %c0_20 = arith.constant 0 : index
    %c0_21 = arith.constant 0 : index
    %63 = vector.load %arg9[%c0_19, %c0_20, %c0_21] : memref<1x256x256xbf16, #tpu.memory_space<vmem>>, vector<1x256x256xbf16>
    %64 = vector.shape_cast %63 : vector<1x256x256xbf16> to vector<256x256xbf16>
    %cst_22 = arith.constant dense<0.000000e+00> : vector<16x256xf32>
    %65 = tpu.matmul %62, %64, %cst_22 {dimension_numbers = #tpu.dot_dimension_numbers<[1], [0], [0], [1], [0, 0, 1, 1], [], []>} : vector<16x256xbf16>, vector<256x256xbf16>, vector<16x256xf32> -> vector<16x256xf32>
    %c0_23 = arith.constant 0 : index
    %c0_24 = arith.constant 0 : index
    %c0_25 = arith.constant 0 : index
    %66 = vector.load %arg10[%c0_23, %c0_24, %c0_25] : memref<1x1x256xf32, #tpu.memory_space<vmem>>, vector<1x1x256xf32>
    %67 = vector.shape_cast %66 : vector<1x1x256xf32> to vector<1x256xf32>
    %68 = vector.broadcast %67 : vector<1x256xf32> to vector<16x256xf32>
    %69 = arith.addf %65, %68 : vector<16x256xf32>
    %70 = arith.addf %3, %69 : vector<16x256xf32>
    %c0_26 = arith.constant 0 : index
    %c0_27 = arith.constant 0 : index
    %c0_28 = arith.constant 0 : index
    %71 = vector.load %arg11[%c0_26, %c0_27, %c0_28] : memref<1x1x256xf32, #tpu.memory_space<vmem>>, vector<1x1x256xf32>
    %72 = vector.shape_cast %71 : vector<1x1x256xf32> to vector<1x256xf32>
    %c0_29 = arith.constant 0 : index
    %c0_30 = arith.constant 0 : index
    %c0_31 = arith.constant 0 : index
    %73 = vector.load %arg12[%c0_29, %c0_30, %c0_31] : memref<1x1x256xf32, #tpu.memory_space<vmem>>, vector<1x1x256xf32>
    %74 = vector.shape_cast %73 : vector<1x1x256xf32> to vector<1x256xf32>
    %cst_32 = arith.constant dense<0.000000e+00> : vector<16xf32>
    %75 = vector.multi_reduction <add>, %70, %cst_32 [1] : vector<16x256xf32> to vector<16xf32>
    %76 = vector.shape_cast %75 : vector<16xf32> to vector<16x1xf32>
    %cst_33 = arith.constant 2.560000e+02 : f32
    %77 = vector.broadcast %cst_33 : f32 to vector<16x1xf32>
    %78 = arith.divf %76, %77 : vector<16x1xf32>
    %79 = vector.broadcast %78 : vector<16x1xf32> to vector<16x256xf32>
    %80 = arith.subf %70, %79 : vector<16x256xf32>
    %81 = arith.mulf %80, %80 : vector<16x256xf32>
    %cst_34 = arith.constant dense<0.000000e+00> : vector<16xf32>
    %82 = vector.multi_reduction <add>, %81, %cst_34 [1] : vector<16x256xf32> to vector<16xf32>
    %83 = vector.shape_cast %82 : vector<16xf32> to vector<16x1xf32>
    %cst_35 = arith.constant 2.560000e+02 : f32
    %84 = vector.broadcast %cst_35 : f32 to vector<16x1xf32>
    %85 = arith.divf %83, %84 : vector<16x1xf32>
    %86 = vector.broadcast %78 : vector<16x1xf32> to vector<16x256xf32>
    %87 = arith.subf %70, %86 : vector<16x256xf32>
    %cst_36 = arith.constant 9.99999996E-13 : f32
    %88 = vector.broadcast %cst_36 : f32 to vector<16x1xf32>
    %89 = arith.addf %85, %88 : vector<16x1xf32>
    %90 = math.rsqrt %89 : vector<16x1xf32>
    %91 = vector.broadcast %90 : vector<16x1xf32> to vector<16x256xf32>
    %92 = arith.mulf %87, %91 : vector<16x256xf32>
    %93 = vector.broadcast %72 : vector<1x256xf32> to vector<16x256xf32>
    %94 = arith.mulf %92, %93 : vector<16x256xf32>
    %95 = vector.broadcast %74 : vector<1x256xf32> to vector<16x256xf32>
    %96 = arith.addf %94, %95 : vector<16x256xf32>
    %97 = arith.truncf %96 : vector<16x256xf32> to vector<16x256xbf16>
    %c0_37 = arith.constant 0 : index
    %c0_38 = arith.constant 0 : index
    %c0_39 = arith.constant 0 : index
    %98 = vector.load %arg13[%c0_37, %c0_38, %c0_39] : memref<1x256x512xbf16, #tpu.memory_space<vmem>>, vector<1x256x512xbf16>
    %99 = vector.shape_cast %98 : vector<1x256x512xbf16> to vector<256x512xbf16>
    %cst_40 = arith.constant dense<0.000000e+00> : vector<16x512xf32>
    %100 = tpu.matmul %97, %99, %cst_40 {dimension_numbers = #tpu.dot_dimension_numbers<[1], [0], [0], [1], [0, 0, 1, 1], [], []>} : vector<16x256xbf16>, vector<256x512xbf16>, vector<16x512xf32> -> vector<16x512xf32>
    %c0_41 = arith.constant 0 : index
    %c0_42 = arith.constant 0 : index
    %c0_43 = arith.constant 0 : index
    %101 = vector.load %arg14[%c0_41, %c0_42, %c0_43] : memref<1x1x512xf32, #tpu.memory_space<vmem>>, vector<1x1x512xf32>
    %102 = vector.shape_cast %101 : vector<1x1x512xf32> to vector<1x512xf32>
    %103 = vector.broadcast %102 : vector<1x512xf32> to vector<16x512xf32>
    %104 = arith.addf %100, %103 : vector<16x512xf32>
    %cst_44 = arith.constant 5.000000e-01 : f32
    %105 = vector.broadcast %cst_44 : f32 to vector<16x512xf32>
    %106 = arith.mulf %105, %104 : vector<16x512xf32>
    %cst_45 = arith.constant 4.471500e-02 : f32
    %107 = vector.broadcast %cst_45 : f32 to vector<16x512xf32>
    %108 = arith.mulf %107, %104 : vector<16x512xf32>
    %109 = arith.mulf %108, %104 : vector<16x512xf32>
    %110 = arith.mulf %109, %104 : vector<16x512xf32>
    %111 = arith.addf %104, %110 : vector<16x512xf32>
    %cst_46 = arith.constant 0.797884583 : f32
    %112 = vector.broadcast %cst_46 : f32 to vector<16x512xf32>
    %113 = arith.mulf %112, %111 : vector<16x512xf32>
    %114 = math.tanh %113 : vector<16x512xf32>
    %cst_47 = arith.constant 1.000000e+00 : f32
    %115 = vector.broadcast %cst_47 : f32 to vector<16x512xf32>
    %116 = arith.addf %115, %114 : vector<16x512xf32>
    %117 = arith.mulf %106, %116 : vector<16x512xf32>
    %118 = arith.truncf %117 : vector<16x512xf32> to vector<16x512xbf16>
    %c0_48 = arith.constant 0 : index
    %c0_49 = arith.constant 0 : index
    %c0_50 = arith.constant 0 : index
    %119 = vector.load %arg15[%c0_48, %c0_49, %c0_50] : memref<1x512x256xbf16, #tpu.memory_space<vmem>>, vector<1x512x256xbf16>
    %120 = vector.shape_cast %119 : vector<1x512x256xbf16> to vector<512x256xbf16>
    %cst_51 = arith.constant dense<0.000000e+00> : vector<16x256xf32>
    %121 = tpu.matmul %118, %120, %cst_51 {dimension_numbers = #tpu.dot_dimension_numbers<[1], [0], [0], [1], [0, 0, 1, 1], [], []>} : vector<16x512xbf16>, vector<512x256xbf16>, vector<16x256xf32> -> vector<16x256xf32>
    %c0_52 = arith.constant 0 : index
    %c0_53 = arith.constant 0 : index
    %c0_54 = arith.constant 0 : index
    %122 = vector.load %arg16[%c0_52, %c0_53, %c0_54] : memref<1x1x256xf32, #tpu.memory_space<vmem>>, vector<1x1x256xf32>
    %123 = vector.shape_cast %122 : vector<1x1x256xf32> to vector<1x256xf32>
    %124 = vector.broadcast %123 : vector<1x256xf32> to vector<16x256xf32>
    %125 = arith.addf %121, %124 : vector<16x256xf32>
    %126 = arith.addf %96, %125 : vector<16x256xf32>
    %c0_55 = arith.constant 0 : index
    %c0_56 = arith.constant 0 : index
    %c0_57 = arith.constant 0 : index
    %127 = vector.load %arg17[%c0_55, %c0_56, %c0_57] : memref<1x1x256xf32, #tpu.memory_space<vmem>>, vector<1x1x256xf32>
    %128 = vector.shape_cast %127 : vector<1x1x256xf32> to vector<1x256xf32>
    %c0_58 = arith.constant 0 : index
    %c0_59 = arith.constant 0 : index
    %c0_60 = arith.constant 0 : index
    %129 = vector.load %arg18[%c0_58, %c0_59, %c0_60] : memref<1x1x256xf32, #tpu.memory_space<vmem>>, vector<1x1x256xf32>
    %130 = vector.shape_cast %129 : vector<1x1x256xf32> to vector<1x256xf32>
    %cst_61 = arith.constant dense<0.000000e+00> : vector<16xf32>
    %131 = vector.multi_reduction <add>, %126, %cst_61 [1] : vector<16x256xf32> to vector<16xf32>
    %132 = vector.shape_cast %131 : vector<16xf32> to vector<16x1xf32>
    %cst_62 = arith.constant 2.560000e+02 : f32
    %133 = vector.broadcast %cst_62 : f32 to vector<16x1xf32>
    %134 = arith.divf %132, %133 : vector<16x1xf32>
    %135 = vector.broadcast %134 : vector<16x1xf32> to vector<16x256xf32>
    %136 = arith.subf %126, %135 : vector<16x256xf32>
    %137 = arith.mulf %136, %136 : vector<16x256xf32>
    %cst_63 = arith.constant dense<0.000000e+00> : vector<16xf32>
    %138 = vector.multi_reduction <add>, %137, %cst_63 [1] : vector<16x256xf32> to vector<16xf32>
    %139 = vector.shape_cast %138 : vector<16xf32> to vector<16x1xf32>
    %cst_64 = arith.constant 2.560000e+02 : f32
    %140 = vector.broadcast %cst_64 : f32 to vector<16x1xf32>
    %141 = arith.divf %139, %140 : vector<16x1xf32>
    %142 = vector.broadcast %134 : vector<16x1xf32> to vector<16x256xf32>
    %143 = arith.subf %126, %142 : vector<16x256xf32>
    %cst_65 = arith.constant 9.99999996E-13 : f32
    %144 = vector.broadcast %cst_65 : f32 to vector<16x1xf32>
    %145 = arith.addf %141, %144 : vector<16x1xf32>
    %146 = math.rsqrt %145 : vector<16x1xf32>
    %147 = vector.broadcast %146 : vector<16x1xf32> to vector<16x256xf32>
    %148 = arith.mulf %143, %147 : vector<16x256xf32>
    %149 = vector.broadcast %128 : vector<1x256xf32> to vector<16x256xf32>
    %150 = arith.mulf %148, %149 : vector<16x256xf32>
    %151 = vector.broadcast %130 : vector<1x256xf32> to vector<16x256xf32>
    %152 = arith.addf %150, %151 : vector<16x256xf32>
    %c1_i32 = arith.constant 1 : i32
    %153 = arith.cmpi slt, %arg0, %c1_i32 : i32
    %154 = arith.extui %153 : i1 to i32
    %c0_i32_66 = arith.constant 0 : i32
    %155 = arith.cmpi ne, %154, %c0_i32_66 : i32
    scf.if %155 {
      %c0_69 = arith.constant 0 : index
      %c0_70 = arith.constant 0 : index
      %159 = vector.load %arg20[%c0_69, %c0_70] : memref<16x256xf32, #tpu.memory_space<vmem>>, vector<16x256xf32>
      tpu.vector_store %arg20[%c0_69, %c0_70], %152 {strides = array<i32>} : memref<16x256xf32, #tpu.memory_space<vmem>>, vector<16x256xf32>,
    } else {
    }
    %c1_i32_67 = arith.constant 1 : i32
    %156 = arith.cmpi eq, %arg0, %c1_i32_67 : i32
    %157 = arith.extui %156 : i1 to i32
    %c0_i32_68 = arith.constant 0 : i32
    %158 = arith.cmpi ne, %157, %c0_i32_68 : i32
    scf.if %158 {
      %c0_69 = arith.constant 0 : index
      %c0_70 = arith.constant 0 : index
      %159 = vector.load %arg19[%c0_69, %c0_70] : memref<16x256xf32, #tpu.memory_space<vmem>>, vector<16x256xf32>
      tpu.vector_store %arg19[%c0_69, %c0_70], %152 {strides = array<i32>} : memref<16x256xf32, #tpu.memory_space<vmem>>, vector<16x256xf32>,
    } else {
    }
    return
  }
  func.func @transform_0(%arg0: i32) -> (i32, i32) {
    %c0_i32 = arith.constant 0 : i32
    %c0_i32_0 = arith.constant 0 : i32
    %c0_i32_1 = arith.constant 0 : i32
    return %c0_i32, %c0_i32_0 : i32, i32
  }
  func.func @transform_1(%arg0: i32) -> (i32, i32, i32) {
    %c0_i32 = arith.constant 0 : i32
    %c0_i32_0 = arith.constant 0 : i32
    %c0_i32_1 = arith.constant 0 : i32
    %c0_i32_2 = arith.constant 0 : i32
    return %c0_i32, %c0_i32_0, %c0_i32_1 : i32, i32, i32
  }
  func.func @transform_2(%arg0: i32) -> (i32, i32) {
    %c0_i32 = arith.constant 0 : i32
    %c0_i32_0 = arith.constant 0 : i32
    %c0_i32_1 = arith.constant 0 : i32
    return %c0_i32, %c0_i32_0 : i32, i32
  }
  func.func @transform_3(%arg0: i32) -> (i32, i32) {
    %c0_i32 = arith.constant 0 : i32
    %c0_i32_0 = arith.constant 0 : i32
    %c0_i32_1 = arith.constant 0 : i32
    return %c0_i32, %c0_i32_0 : i32, i32
  }
  func.func @transform_4(%arg0: i32) -> (i32, i32) {
    %c0_i32 = arith.constant 0 : i32
    %c0_i32_0 = arith.constant 0 : i32
    %c0_i32_1 = arith.constant 0 : i32
    return %c0_i32, %c0_i32_0 : i32, i32
  }
  func.func @transform_5(%arg0: i32) -> (i32, i32) {
    %c0_i32 = arith.constant 0 : i32
    %c0_i32_0 = arith.constant 0 : i32
    %c0_i32_1 = arith.constant 0 : i32
    return %c0_i32, %c0_i32_0 : i32, i32
  }
  func.func @transform_6(%arg0: i32) -> (i32, i32, i32) {
    %c0_i32 = arith.constant 0 : i32
    %c0_i32_0 = arith.constant 0 : i32
    %c0_i32_1 = arith.constant 0 : i32
    return %arg0, %c0_i32, %c0_i32_0 : i32, i32, i32
  }
  func.func @transform_7(%arg0: i32) -> (i32, i32, i32) {
    %c0_i32 = arith.constant 0 : i32
    %c0_i32_0 = arith.constant 0 : i32
    %c0_i32_1 = arith.constant 0 : i32
    return %arg0, %c0_i32, %c0_i32_0 : i32, i32, i32
  }
  func.func @transform_8(%arg0: i32) -> (i32, i32, i32) {
    %c0_i32 = arith.constant 0 : i32
    %c0_i32_0 = arith.constant 0 : i32
    %c0_i32_1 = arith.constant 0 : i32
    return %arg0, %c0_i32, %c0_i32_0 : i32, i32, i32
  }
  func.func @transform_9(%arg0: i32) -> (i32, i32, i32) {
    %c0_i32 = arith.constant 0 : i32
    %c0_i32_0 = arith.constant 0 : i32
    %c0_i32_1 = arith.constant 0 : i32
    return %arg0, %c0_i32, %c0_i32_0 : i32, i32, i32
  }
  func.func @transform_10(%arg0: i32) -> (i32, i32, i32) {
    %c0_i32 = arith.constant 0 : i32
    %c0_i32_0 = arith.constant 0 : i32
    %c0_i32_1 = arith.constant 0 : i32
    return %arg0, %c0_i32, %c0_i32_0 : i32, i32, i32
  }
  func.func @transform_11(%arg0: i32) -> (i32, i32, i32) {
    %c0_i32 = arith.constant 0 : i32
    %c0_i32_0 = arith.constant 0 : i32
    %c0_i32_1 = arith.constant 0 : i32
    return %arg0, %c0_i32, %c0_i32_0 : i32, i32, i32
  }
  func.func @transform_12(%arg0: i32) -> (i32, i32, i32) {
    %c0_i32 = arith.constant 0 : i32
    %c0_i32_0 = arith.constant 0 : i32
    %c0_i32_1 = arith.constant 0 : i32
    return %arg0, %c0_i32, %c0_i32_0 : i32, i32, i32
  }
  func.func @transform_13(%arg0: i32) -> (i32, i32, i32) {
    %c0_i32 = arith.constant 0 : i32
    %c0_i32_0 = arith.constant 0 : i32
    %c0_i32_1 = arith.constant 0 : i32
    return %arg0, %c0_i32, %c0_i32_0 : i32, i32, i32
  }
  func.func @transform_14(%arg0: i32) -> (i32, i32, i32) {
    %c0_i32 = arith.constant 0 : i32
    %c0_i32_0 = arith.constant 0 : i32
    %c0_i32_1 = arith.constant 0 : i32
    return %arg0, %c0_i32, %c0_i32_0 : i32, i32, i32
  }
  func.func @transform_15(%arg0: i32) -> (i32, i32, i32) {
    %c0_i32 = arith.constant 0 : i32
    %c0_i32_0 = arith.constant 0 : i32
    %c0_i32_1 = arith.constant 0 : i32
    return %arg0, %c0_i32, %c0_i32_0 : i32, i32, i32
  }
  func.func @transform_16(%arg0: i32) -> (i32, i32, i32) {
    %c0_i32 = arith.constant 0 : i32
    %c0_i32_0 = arith.constant 0 : i32
    %c0_i32_1 = arith.constant 0 : i32
    return %arg0, %c0_i32, %c0_i32_0 : i32, i32, i32
  }
  func.func @transform_17(%arg0: i32) -> (i32, i32, i32) {
    %c0_i32 = arith.constant 0 : i32
    %c0_i32_0 = arith.constant 0 : i32
    %c0_i32_1 = arith.constant 0 : i32
    return %arg0, %c0_i32, %c0_i32_0 : i32, i32, i32
  }
  func.func @transform_18(%arg0: i32) -> (i32, i32) {
    %c0_i32 = arith.constant 0 : i32
    %c0_i32_0 = arith.constant 0 : i32
    %c0_i32_1 = arith.constant 0 : i32
    return %c0_i32, %c0_i32_0 : i32, i32
  }
}

</mosaic_0001>

<llo_original>
// kernel: tpu_custom_call.1
$region0: #{tpu_custom_call.1}
  #allocation0 [shape = 'u32[]', space=smem, size = 0x4, offset = 0x4, fixed_abs, tag = 'smem constant byte address 0x4 - core index']
  #allocation1 [shape = 'u32[144,128]{1,0:T(1,128)}', space=vmem, size = 0x12000, scoped, tag = 'internal scratch']
  #allocation2 [shape = 'f32[16,256]{1,0:T(8,128)}', space=vmem, size = 0x4000, scoped, tag = 'scratch operand']
  %s0 = inlined_call_operand.vmem [shape: s32[16,1], index: 0, kind: input, shape index: {}]
  %s1 = inlined_call_operand.hbm [shape: f32[2,1,8], index: 1, kind: input, shape index: {}]
  %s2 = inlined_call_operand.hbm [shape: f32[128,256], index: 2, kind: input, shape index: {}]
  %s3 = inlined_call_operand.hbm [shape: f32[16,256], index: 3, kind: input, shape index: {}]
  %s4 = inlined_call_operand.hbm [shape: f32[1,256], index: 4, kind: input, shape index: {}]
  %s5 = inlined_call_operand.hbm [shape: f32[1,256], index: 5, kind: input, shape index: {}]
  %s6 = inlined_call_operand.hbm [shape: bf16[2,256,768], index: 6, kind: input, shape index: {}]
  %s7 = inlined_call_operand.vmem [shape: f32[2,1,768], index: 7, kind: input, shape index: {}]
  %s8 = inlined_call_operand.hbm [shape: bf16[2,256,256], index: 8, kind: input, shape index: {}]
  %s9 = inlined_call_operand.vmem [shape: f32[2,1,256], index: 9, kind: input, shape index: {}]
  %s10 = inlined_call_operand.vmem [shape: f32[2,1,256], index: 10, kind: input, shape index: {}]
  %s11 = inlined_call_operand.vmem [shape: f32[2,1,256], index: 11, kind: input, shape index: {}]
  %s12 = inlined_call_operand.hbm [shape: bf16[2,256,512], index: 12, kind: input, shape index: {}]
  %s13 = inlined_call_operand.vmem [shape: f32[2,1,512], index: 13, kind: input, shape index: {}]
  %s14 = inlined_call_operand.hbm [shape: bf16[2,512,256], index: 14, kind: input, shape index: {}]
  %s15 = inlined_call_operand.vmem [shape: f32[2,1,256], index: 15, kind: input, shape index: {}]
  %s16 = inlined_call_operand.vmem [shape: f32[2,1,256], index: 16, kind: input, shape index: {}]
  %s17 = inlined_call_operand.vmem [shape: f32[2,1,256], index: 17, kind: input, shape index: {}]
  %s18 = inlined_call_operand.hbm [shape: f32[16,256], index: 18, kind: output, shape index: {}]
  %s19 = sld [smem:[#allocation0]]
  $region153: #{tpu_custom_call.1} parent=0
    _
  %s21 = ssub.s32 1, %s19
  %s22 = scalar_select 0, %s21, %s19
  $region1: #{tpu_custom_call.1} parent=0
    #allocation3 [shape = 'u8[1024]{0}', space=vmem, size = 0x400, scoped, tag = 'input window, operand 1, single buffered']
    #allocation4 [shape = 's32[2]{0}', space=sflag, size = 0x8, scoped, tag = 'scoped memory for tpu_custom_call.1']
    #allocation5 [shape = 's32[2]{0}', space=sflag, size = 0x8, scoped, tag = 'scoped memory for tpu_custom_call.1']
    #allocation6 [shape = 'u8[131072]{0}', space=vmem, size = 0x20000, scoped, tag = 'input window, operand 2, single buffered']
    #allocation7 [shape = 's32[1]{0}', space=sflag, size = 0x4, scoped, tag = 'scoped memory for tpu_custom_call.1']
    #allocation8 [shape = 'u8[16384]{0}', space=vmem, size = 0x4000, scoped, tag = 'input window, operand 3, single buffered']
    #allocation9 [shape = 'u8[1024]{0}', space=vmem, size = 0x400, scoped, tag = 'input window, operand 4, single buffered']
    #allocation10 [shape = 's32[1]{0}', space=sflag, size = 0x4, scoped, tag = 'scoped memory for tpu_custom_call.1']
    #allocation11 [shape = 'u8[1024]{0}', space=vmem, size = 0x400, scoped, tag = 'input window, operand 5, single buffered']
    #allocation12 [shape = 'u8[786432]{0}', space=vmem, size = 0xc0000, scoped, tag = 'input window, operand 6']
    #allocation13 [shape = 's32[2]{0}', space=sflag, size = 0x8, scoped, tag = 'scoped memory for tpu_custom_call.1']
    #allocation14 [shape = 'u8[262144]{0}', space=vmem, size = 0x40000, scoped, tag = 'input window, operand 8']
    #allocation15 [shape = 'u8[524288]{0}', space=vmem, size = 0x80000, scoped, tag = 'input window, operand 12']
    #allocation16 [shape = 's32[2]{0}', space=sflag, size = 0x8, scoped, tag = 'scoped memory for tpu_custom_call.1']
    #allocation17 [shape = 'u8[524288]{0}', space=vmem, size = 0x80000, scoped, tag = 'input window, operand 14']
    #allocation18 [shape = 'u8[16384]{0}', space=vmem, size = 0x4000, scoped, tag = 'output window, operand 0, single buffered']
    %23 = vsyncpa [#allocation4], 0
    %24 = vsyncpa [#allocation7], 0
    %25 = vsyncpa [#allocation10], 0
    %26 = vsyncpa [#allocation13], 0
    %s27 = scalar_lea.sflag [#allocation13], 1
    %28 = vsyncpa %s27, 0
    %29 = vsyncpa [#allocation16], 0
    %s30 = scalar_lea.sflag [#allocation16], 1
    %31 = vsyncpa %s30, 0
    %32 = vsyncpa [#allocation5], 0
    loop: start=0, step=1, limit=4
    $region2: #{tpu_custom_call.1} parent=1 // loop_pre_header
      _
    $region3: #{tpu_custom_call.1} parent=1 // loop_header
      %s34 = sphi 0, %s38
      %p35 = scmp.ge.s32.totalorder %s34, 4
      %s42 = sphi 0, %s42
      %s44 = sphi 0, %s42
      %s45 = sphi 0, %s44
      %s59 = sphi 0, %s45
      %s63 = sphi 0, %s63
      %s65 = sphi 0, %s63
      %s66 = sphi 0, %s65
      %s80 = sphi 0, %s66
      %s84 = sphi 0, %s84
      %s86 = sphi 0, %s84
      %s87 = sphi 0, %s86
      %s101 = sphi 0, %s87
      %s105 = sphi 0, %s105
      %s107 = sphi 0, %s105
      %s108 = sphi 0, %s107
      %s122 = sphi 0, %s108
      %s126 = sphi 0, %s126
      %s128 = sphi 0, %s126
      %s129 = sphi 0, %s128
      %s143 = sphi 0, %s129
      %s147 = sphi 0, %s147
      %s149 = sphi 0, %s147
      %s150 = sphi 0, %s149
      %s164 = sphi 0, %s150
      %s170 = sphi 0, %s172
      %s173 = sphi 0, %s170
      %s174 = sphi 0, %s173
      %s190 = sphi 0, %s174
      %s196 = sphi 0, %s198
      %s199 = sphi 0, %s196
      %s200 = sphi 0, %s199
      %s216 = sphi 0, %s200
      %s222 = sphi 0, %s224
      %s225 = sphi 0, %s222
      %s226 = sphi 0, %s225
      %s242 = sphi 0, %s226
      %s248 = sphi 0, %s250
      %s251 = sphi 0, %s248
      %s252 = sphi 0, %s251
      %s268 = sphi 0, %s252
      %s274 = sphi 0, %s276
      %s277 = sphi 0, %s274
      %s278 = sphi 0, %s277
      %s294 = sphi 0, %s278
      %s300 = sphi 0, %s302
      %s303 = sphi 0, %s300
      %s304 = sphi 0, %s303
      %s320 = sphi 0, %s304
      %s326 = sphi 0, %s328
      %s329 = sphi 0, %s326
      %s330 = sphi 0, %s329
      %s346 = sphi 0, %s330
      %s352 = sphi 0, %s354
      %s355 = sphi 0, %s352
      %s356 = sphi 0, %s355
      %s372 = sphi 0, %s356
      %s378 = sphi 0, %s380
      %s381 = sphi 0, %s378
      %s382 = sphi 0, %s381
      %s398 = sphi 0, %s382
      %s404 = sphi 0, %s406
      %s407 = sphi 0, %s404
      %s408 = sphi 0, %s407
      %s424 = sphi 0, %s408
      %s430 = sphi 0, %s432
      %s433 = sphi 0, %s430
      %s434 = sphi 0, %s433
      %s450 = sphi 0, %s434
      %s456 = sphi 0, %s458
      %s459 = sphi 0, %s456
      %s460 = sphi 0, %s459
      %s476 = sphi 0, %s460
      %s480 = sphi 0, %s480
      %s482 = sphi 0, %s480
      %s483 = sphi 0, %s482
      %s497 = sphi 0, %s483
    $region4: #{tpu_custom_call.1} parent=1 // loop_header_branch
      %37 = sbr.rel (%p35) target = $region8
    $region5: #{tpu_custom_call.1} parent=1 // loop_body
      %s39 = ssub.s32 %s34, 1
      %s40 = ssub.s32 %s34, 2
      %s41 = sadd.s32 %s34, 1
      %s43 = sadd.s32 %s42, 1
      %p46 = scmp.eq.s32.totalorder %s34, 1
      %p47 = scmp.ne.s32.totalorder %s42, %s44
      %p48 = scmp.eq.s32.totalorder %s34, 0
      %p49 = por %p47, %p48
      %p50 = scmp.ne.s32.totalorder %s42, %s44
      %p51 = scmp.eq.s32.totalorder %s39, 1
      %p52 = por %p50, %p51
      %p53 = scmp.ne.s32.totalorder %s44, %s45
      %p54 = scmp.eq.s32.totalorder %s39, 0
      %p55 = por %p53, %p54
      %p56 = scmp.ne.s32.totalorder %s44, %s45
      %p57 = scmp.eq.s32.totalorder %s40, 1
      %p58 = por %p56, %p57
      %p60 = scmp.ne.s32.totalorder %s45, %s59
      %p61 = scmp.eq.s32.totalorder %s40, 0
      %p62 = por %p60, %p61
      %s64 = sadd.s32 %s63, 1
      %p67 = scmp.eq.s32.totalorder %s34, 1
      %p68 = scmp.ne.s32.totalorder %s63, %s65
      %p69 = scmp.eq.s32.totalorder %s34, 0
      %p70 = por %p68, %p69
      %p71 = scmp.ne.s32.totalorder %s63, %s65
      %p72 = scmp.eq.s32.totalorder %s39, 1
      %p73 = por %p71, %p72
      %p74 = scmp.ne.s32.totalorder %s65, %s66
      %p75 = scmp.eq.s32.totalorder %s39, 0
      %p76 = por %p74, %p75
      %p77 = scmp.ne.s32.totalorder %s65, %s66
      %p78 = scmp.eq.s32.totalorder %s40, 1
      %p79 = por %p77, %p78
      %p81 = scmp.ne.s32.totalorder %s66, %s80
      %p82 = scmp.eq.s32.totalorder %s40, 0
      %p83 = por %p81, %p82
      %s85 = sadd.s32 %s84, 1
      %p88 = scmp.eq.s32.totalorder %s34, 1
      %p89 = scmp.ne.s32.totalorder %s84, %s86
      %p90 = scmp.eq.s32.totalorder %s34, 0
      %p91 = por %p89, %p90
      %p92 = scmp.ne.s32.totalorder %s84, %s86
      %p93 = scmp.eq.s32.totalorder %s39, 1
      %p94 = por %p92, %p93
      %p95 = scmp.ne.s32.totalorder %s86, %s87
      %p96 = scmp.eq.s32.totalorder %s39, 0
      %p97 = por %p95, %p96
      %p98 = scmp.ne.s32.totalorder %s86, %s87
      %p99 = scmp.eq.s32.totalorder %s40, 1
      %p100 = por %p98, %p99
      %p102 = scmp.ne.s32.totalorder %s87, %s101
      %p103 = scmp.eq.s32.totalorder %s40, 0
      %p104 = por %p102, %p103
      %s106 = sadd.s32 %s105, 1
      %p109 = scmp.eq.s32.totalorder %s34, 1
      %p110 = scmp.ne.s32.totalorder %s105, %s107
      %p111 = scmp.eq.s32.totalorder %s34, 0
      %p112 = por %p110, %p111
      %p113 = scmp.ne.s32.totalorder %s105, %s107
      %p114 = scmp.eq.s32.totalorder %s39, 1
      %p115 = por %p113, %p114
      %p116 = scmp.ne.s32.totalorder %s107, %s108
      %p117 = scmp.eq.s32.totalorder %s39, 0
      %p118 = por %p116, %p117
      %p119 = scmp.ne.s32.totalorder %s107, %s108
      %p120 = scmp.eq.s32.totalorder %s40, 1
      %p121 = por %p119, %p120
      %p123 = scmp.ne.s32.totalorder %s108, %s122
      %p124 = scmp.eq.s32.totalorder %s40, 0
      %p125 = por %p123, %p124
      %s127 = sadd.s32 %s126, 1
      %p130 = scmp.eq.s32.totalorder %s34, 1
      %p131 = scmp.ne.s32.totalorder %s126, %s128
      %p132 = scmp.eq.s32.totalorder %s34, 0
      %p133 = por %p131, %p132
      %p134 = scmp.ne.s32.totalorder %s126, %s128
      %p135 = scmp.eq.s32.totalorder %s39, 1
      %p136 = por %p134, %p135
      %p137 = scmp.ne.s32.totalorder %s128, %s129
      %p138 = scmp.eq.s32.totalorder %s39, 0
      %p139 = por %p137, %p138
      %p140 = scmp.ne.s32.totalorder %s128, %s129
      %p141 = scmp.eq.s32.totalorder %s40, 1
      %p142 = por %p140, %p141
      %p144 = scmp.ne.s32.totalorder %s129, %s143
      %p145 = scmp.eq.s32.totalorder %s40, 0
      %p146 = por %p144, %p145
      %s148 = sadd.s32 %s147, 1
      %p151 = scmp.eq.s32.totalorder %s34, 1
      %p152 = scmp.ne.s32.totalorder %s147, %s149
      %p153 = scmp.eq.s32.totalorder %s34, 0
      %p154 = por %p152, %p153
      %p155 = scmp.ne.s32.totalorder %s147, %s149
      %p156 = scmp.eq.s32.totalorder %s39, 1
      %p157 = por %p155, %p156
      %p158 = scmp.ne.s32.totalorder %s149, %s150
      %p159 = scmp.eq.s32.totalorder %s39, 0
      %p160 = por %p158, %p159
      %p161 = scmp.ne.s32.totalorder %s149, %s150
      %p162 = scmp.eq.s32.totalorder %s40, 1
      %p163 = por %p161, %p162
      %p165 = scmp.ne.s32.totalorder %s150, %s164
      %p166 = scmp.eq.s32.totalorder %s40, 0
      %p167 = por %p165, %p166
      %s168 = ssub.s32 %s34, %s41
      %p169 = scmp.eq.s32.totalorder %s168, 0
      %s171 = sadd.s32 %s170, 1
      %s172 = scalar_select %p169, %s170, %s171
      %p175 = pneg %p169
      %p176 = scmp.eq.s32.totalorder %s34, 1
      %p177 = por %p175, %p176
      %p178 = scmp.ne.s32.totalorder %s170, %s173
      %p179 = scmp.eq.s32.totalorder %s34, 0
      %p180 = por %p178, %p179
      %p181 = scmp.ne.s32.totalorder %s170, %s173
      %p182 = scmp.eq.s32.totalorder %s39, 1
      %p183 = por %p181, %p182
      %p184 = scmp.ne.s32.totalorder %s173, %s174
      %p185 = scmp.eq.s32.totalorder %s39, 0
      %p186 = por %p184, %p185
      %p187 = scmp.ne.s32.totalorder %s173, %s174
      %p188 = scmp.eq.s32.totalorder %s40, 1
      %p189 = por %p187, %p188
      %p191 = scmp.ne.s32.totalorder %s174, %s190
      %p192 = scmp.eq.s32.totalorder %s40, 0
      %p193 = por %p191, %p192
      %s194 = ssub.s32 %s34, %s41
      %p195 = scmp.eq.s32.totalorder %s194, 0
      %s197 = sadd.s32 %s196, 1
      %s198 = scalar_select %p195, %s196, %s197
      %p201 = pneg %p195
      %p202 = scmp.eq.s32.totalorder %s34, 1
      %p203 = por %p201, %p202
      %p204 = scmp.ne.s32.totalorder %s196, %s199
      %p205 = scmp.eq.s32.totalorder %s34, 0
      %p206 = por %p204, %p205
      %p207 = scmp.ne.s32.totalorder %s196, %s199
      %p208 = scmp.eq.s32.totalorder %s39, 1
      %p209 = por %p207, %p208
      %p210 = scmp.ne.s32.totalorder %s199, %s200
      %p211 = scmp.eq.s32.totalorder %s39, 0
      %p212 = por %p210, %p211
      %p213 = scmp.ne.s32.totalorder %s199, %s200
      %p214 = scmp.eq.s32.totalorder %s40, 1
      %p215 = por %p213, %p214
      %p217 = scmp.ne.s32.totalorder %s200, %s216
      %p218 = scmp.eq.s32.totalorder %s40, 0
      %p219 = por %p217, %p218
      %s220 = ssub.s32 %s34, %s41
      %p221 = scmp.eq.s32.totalorder %s220, 0
      %s223 = sadd.s32 %s222, 1
      %s224 = scalar_select %p221, %s222, %s223
      %p227 = pneg %p221
      %p228 = scmp.eq.s32.totalorder %s34, 1
      %p229 = por %p227, %p228
      %p230 = scmp.ne.s32.totalorder %s222, %s225
      %p231 = scmp.eq.s32.totalorder %s34, 0
      %p232 = por %p230, %p231
      %p233 = scmp.ne.s32.totalorder %s222, %s225
      %p234 = scmp.eq.s32.totalorder %s39, 1
      %p235 = por %p233, %p234
      %p236 = scmp.ne.s32.totalorder %s225, %s226
      %p237 = scmp.eq.s32.totalorder %s39, 0
      %p238 = por %p236, %p237
      %p239 = scmp.ne.s32.totalorder %s225, %s226
      %p240 = scmp.eq.s32.totalorder %s40, 1
      %p241 = por %p239, %p240
      %p243 = scmp.ne.s32.totalorder %s226, %s242
      %p244 = scmp.eq.s32.totalorder %s40, 0
      %p245 = por %p243, %p244
      %s246 = ssub.s32 %s34, %s41
      %p247 = scmp.eq.s32.totalorder %s246, 0
      %s249 = sadd.s32 %s248, 1
      %s250 = scalar_select %p247, %s248, %s249
      %p253 = pneg %p247
      %p254 = scmp.eq.s32.totalorder %s34, 1
      %p255 = por %p253, %p254
      %p256 = scmp.ne.s32.totalorder %s248, %s251
      %p257 = scmp.eq.s32.totalorder %s34, 0
      %p258 = por %p256, %p257
      %p259 = scmp.ne.s32.totalorder %s248, %s251
      %p260 = scmp.eq.s32.totalorder %s39, 1
      %p261 = por %p259, %p260
      %p262 = scmp.ne.s32.totalorder %s251, %s252
      %p263 = scmp.eq.s32.totalorder %s39, 0
      %p264 = por %p262, %p263
      %p265 = scmp.ne.s32.totalorder %s251, %s252
      %p266 = scmp.eq.s32.totalorder %s40, 1
      %p267 = por %p265, %p266
      %p269 = scmp.ne.s32.totalorder %s252, %s268
      %p270 = scmp.eq.s32.totalorder %s40, 0
      %p271 = por %p269, %p270
      %s272 = ssub.s32 %s34, %s41
      %p273 = scmp.eq.s32.totalorder %s272, 0
      %s275 = sadd.s32 %s274, 1
      %s276 = scalar_select %p273, %s274, %s275
      %p279 = pneg %p273
      %p280 = scmp.eq.s32.totalorder %s34, 1
      %p281 = por %p279, %p280
      %p282 = scmp.ne.s32.totalorder %s274, %s277
      %p283 = scmp.eq.s32.totalorder %s34, 0
      %p284 = por %p282, %p283
      %p285 = scmp.ne.s32.totalorder %s274, %s277
      %p286 = scmp.eq.s32.totalorder %s39, 1
      %p287 = por %p285, %p286
      %p288 = scmp.ne.s32.totalorder %s277, %s278
      %p289 = scmp.eq.s32.totalorder %s39, 0
      %p290 = por %p288, %p289
      %p291 = scmp.ne.s32.totalorder %s277, %s278
      %p292 = scmp.eq.s32.totalorder %s40, 1
      %p293 = por %p291, %p292
      %p295 = scmp.ne.s32.totalorder %s278, %s294
      %p296 = scmp.eq.s32.totalorder %s40, 0
      %p297 = por %p295, %p296
      %s298 = ssub.s32 %s34, %s41
      %p299 = scmp.eq.s32.totalorder %s298, 0
      %s301 = sadd.s32 %s300, 1
      %s302 = scalar_select %p299, %s300, %s301
      %p305 = pneg %p299
      %p306 = scmp.eq.s32.totalorder %s34, 1
      %p307 = por %p305, %p306
      %p308 = scmp.ne.s32.totalorder %s300, %s303
      %p309 = scmp.eq.s32.totalorder %s34, 0
      %p310 = por %p308, %p309
      %p311 = scmp.ne.s32.totalorder %s300, %s303
      %p312 = scmp.eq.s32.totalorder %s39, 1
      %p313 = por %p311, %p312
      %p314 = scmp.ne.s32.totalorder %s303, %s304
      %p315 = scmp.eq.s32.totalorder %s39, 0
      %p316 = por %p314, %p315
      %p317 = scmp.ne.s32.totalorder %s303, %s304
      %p318 = scmp.eq.s32.totalorder %s40, 1
      %p319 = por %p317, %p318
      %p321 = scmp.ne.s32.totalorder %s304, %s320
      %p322 = scmp.eq.s32.totalorder %s40, 0
      %p323 = por %p321, %p322
      %s324 = ssub.s32 %s34, %s41
      %p325 = scmp.eq.s32.totalorder %s324, 0
      %s327 = sadd.s32 %s326, 1
      %s328 = scalar_select %p325, %s326, %s327
      %p331 = pneg %p325
      %p332 = scmp.eq.s32.totalorder %s34, 1
      %p333 = por %p331, %p332
      %p334 = scmp.ne.s32.totalorder %s326, %s329
      %p335 = scmp.eq.s32.totalorder %s34, 0
      %p336 = por %p334, %p335
      %p337 = scmp.ne.s32.totalorder %s326, %s329
      %p338 = scmp.eq.s32.totalorder %s39, 1
      %p339 = por %p337, %p338
      %p340 = scmp.ne.s32.totalorder %s329, %s330
      %p341 = scmp.eq.s32.totalorder %s39, 0
      %p342 = por %p340, %p341
      %p343 = scmp.ne.s32.totalorder %s329, %s330
      %p344 = scmp.eq.s32.totalorder %s40, 1
      %p345 = por %p343, %p344
      %p347 = scmp.ne.s32.totalorder %s330, %s346
      %p348 = scmp.eq.s32.totalorder %s40, 0
      %p349 = por %p347, %p348
      %s350 = ssub.s32 %s34, %s41
      %p351 = scmp.eq.s32.totalorder %s350, 0
      %s353 = sadd.s32 %s352, 1
      %s354 = scalar_select %p351, %s352, %s353
      %p357 = pneg %p351
      %p358 = scmp.eq.s32.totalorder %s34, 1
      %p359 = por %p357, %p358
      %p360 = scmp.ne.s32.totalorder %s352, %s355
      %p361 = scmp.eq.s32.totalorder %s34, 0
      %p362 = por %p360, %p361
      %p363 = scmp.ne.s32.totalorder %s352, %s355
      %p364 = scmp.eq.s32.totalorder %s39, 1
      %p365 = por %p363, %p364
      %p366 = scmp.ne.s32.totalorder %s355, %s356
      %p367 = scmp.eq.s32.totalorder %s39, 0
      %p368 = por %p366, %p367
      %p369 = scmp.ne.s32.totalorder %s355, %s356
      %p370 = scmp.eq.s32.totalorder %s40, 1
      %p371 = por %p369, %p370
      %p373 = scmp.ne.s32.totalorder %s356, %s372
      %p374 = scmp.eq.s32.totalorder %s40, 0
      %p375 = por %p373, %p374
      %s376 = ssub.s32 %s34, %s41
      %p377 = scmp.eq.s32.totalorder %s376, 0
      %s379 = sadd.s32 %s378, 1
      %s380 = scalar_select %p377, %s378, %s379
      %p383 = pneg %p377
      %p384 = scmp.eq.s32.totalorder %s34, 1
      %p385 = por %p383, %p384
      %p386 = scmp.ne.s32.totalorder %s378, %s381
      %p387 = scmp.eq.s32.totalorder %s34, 0
      %p388 = por %p386, %p387
      %p389 = scmp.ne.s32.totalorder %s378, %s381
      %p390 = scmp.eq.s32.totalorder %s39, 1
      %p391 = por %p389, %p390
      %p392 = scmp.ne.s32.totalorder %s381, %s382
      %p393 = scmp.eq.s32.totalorder %s39, 0
      %p394 = por %p392, %p393
      %p395 = scmp.ne.s32.totalorder %s381, %s382
      %p396 = scmp.eq.s32.totalorder %s40, 1
      %p397 = por %p395, %p396
      %p399 = scmp.ne.s32.totalorder %s382, %s398
      %p400 = scmp.eq.s32.totalorder %s40, 0
      %p401 = por %p399, %p400
      %s402 = ssub.s32 %s34, %s41
      %p403 = scmp.eq.s32.totalorder %s402, 0
      %s405 = sadd.s32 %s404, 1
      %s406 = scalar_select %p403, %s404, %s405
      %p409 = pneg %p403
      %p410 = scmp.eq.s32.totalorder %s34, 1
      %p411 = por %p409, %p410
      %p412 = scmp.ne.s32.totalorder %s404, %s407
      %p413 = scmp.eq.s32.totalorder %s34, 0
      %p414 = por %p412, %p413
      %p415 = scmp.ne.s32.totalorder %s404, %s407
      %p416 = scmp.eq.s32.totalorder %s39, 1
      %p417 = por %p415, %p416
      %p418 = scmp.ne.s32.totalorder %s407, %s408
      %p419 = scmp.eq.s32.totalorder %s39, 0
      %p420 = por %p418, %p419
      %p421 = scmp.ne.s32.totalorder %s407, %s408
      %p422 = scmp.eq.s32.totalorder %s40, 1
      %p423 = por %p421, %p422
      %p425 = scmp.ne.s32.totalorder %s408, %s424
      %p426 = scmp.eq.s32.totalorder %s40, 0
      %p427 = por %p425, %p426
      %s428 = ssub.s32 %s34, %s41
      %p429 = scmp.eq.s32.totalorder %s428, 0
      %s431 = sadd.s32 %s430, 1
      %s432 = scalar_select %p429, %s430, %s431
      %p435 = pneg %p429
      %p436 = scmp.eq.s32.totalorder %s34, 1
      %p437 = por %p435, %p436
      %p438 = scmp.ne.s32.totalorder %s430, %s433
      %p439 = scmp.eq.s32.totalorder %s34, 0
      %p440 = por %p438, %p439
      %p441 = scmp.ne.s32.totalorder %s430, %s433
      %p442 = scmp.eq.s32.totalorder %s39, 1
      %p443 = por %p441, %p442
      %p444 = scmp.ne.s32.totalorder %s433, %s434
      %p445 = scmp.eq.s32.totalorder %s39, 0
      %p446 = por %p444, %p445
      %p447 = scmp.ne.s32.totalorder %s433, %s434
      %p448 = scmp.eq.s32.totalorder %s40, 1
      %p449 = por %p447, %p448
      %p451 = scmp.ne.s32.totalorder %s434, %s450
      %p452 = scmp.eq.s32.totalorder %s40, 0
      %p453 = por %p451, %p452
      %s454 = ssub.s32 %s34, %s41
      %p455 = scmp.eq.s32.totalorder %s454, 0
      %s457 = sadd.s32 %s456, 1
      %s458 = scalar_select %p455, %s456, %s457
      %p461 = pneg %p455
      %p462 = scmp.eq.s32.totalorder %s34, 1
      %p463 = por %p461, %p462
      %p464 = scmp.ne.s32.totalorder %s456, %s459
      %p465 = scmp.eq.s32.totalorder %s34, 0
      %p466 = por %p464, %p465
      %p467 = scmp.ne.s32.totalorder %s456, %s459
      %p468 = scmp.eq.s32.totalorder %s39, 1
      %p469 = por %p467, %p468
      %p470 = scmp.ne.s32.totalorder %s459, %s460
      %p471 = scmp.eq.s32.totalorder %s39, 0
      %p472 = por %p470, %p471
      %p473 = scmp.ne.s32.totalorder %s459, %s460
      %p474 = scmp.eq.s32.totalorder %s40, 1
      %p475 = por %p473, %p474
      %p477 = scmp.ne.s32.totalorder %s460, %s476
      %p478 = scmp.eq.s32.totalorder %s40, 0
      %p479 = por %p477, %p478
      %s481 = sadd.s32 %s480, 1
      %p484 = scmp.eq.s32.totalorder %s34, 1
      %p485 = scmp.ne.s32.totalorder %s480, %s482
      %p486 = scmp.eq.s32.totalorder %s34, 0
      %p487 = por %p485, %p486
      %p488 = scmp.ne.s32.totalorder %s480, %s482
      %p489 = scmp.eq.s32.totalorder %s39, 1
      %p490 = por %p488, %p489
      %p491 = scmp.ne.s32.totalorder %s482, %s483
      %p492 = scmp.eq.s32.totalorder %s39, 0
      %p493 = por %p491, %p492
      %p494 = scmp.ne.s32.totalorder %s482, %s483
      %p495 = scmp.eq.s32.totalorder %s40, 1
      %p496 = por %p494, %p495
      %p498 = scmp.ne.s32.totalorder %s483, %s497
      %p499 = scmp.eq.s32.totalorder %s40, 0
      %p500 = por %p498, %p499
      %p501 = scmp.le.s32.totalorder 1, %s34
      %p502 = scmp.lt.s32.totalorder %s34, 3
      %p503 = pnand %p501, %p502
      %p504 = pneg %p503
      // Predicated region
      $region9: #{tpu_custom_call.1} parent=5 // pred_check
        _
      $region10: #{tpu_custom_call.1} parent=5 // pred_check_branch
        %506 = sbr.rel (%p503) target = $region12
      $region11: #{tpu_custom_call.1} parent=5 // pred_region
        %s507 = ssub.s32 %s34, 1
        // Predicated region
        $region13: #{tpu_custom_call.1} parent=11 // pred_check
          %p508 = pneg %p55
        $region14: #{tpu_custom_call.1} parent=11 // pred_check_branch
          %510 = sbr.rel (%p508) target = $region16
        $region15: #{tpu_custom_call.1} parent=11 // pred_region
          _
        $region16: #{tpu_custom_call.1} parent=11 // pred_fallthru
          _
        // Predicated region
        $region17: #{tpu_custom_call.1} parent=11 // pred_check
          %p511 = pneg %p76
        $region18: #{tpu_custom_call.1} parent=11 // pred_check_branch
          %513 = sbr.rel (%p511) target = $region20
        $region19: #{tpu_custom_call.1} parent=11 // pred_region
          %s515 = ssub.s32 32, 32
          %516 = vsyncadd [#allocation4], %s515
          %s517 = sshll.u32 [#allocation3], 4
          %s518 = int_to_ptr.vmem [resolvable:$true] %s517
          %523 = dma.hbm_to_vmem [thread:$0]  %s1, 32, %s518, [#allocation4], 16, 16, 1
        $region20: #{tpu_custom_call.1} parent=11 // pred_fallthru
          _
        // Predicated region
        $region21: #{tpu_custom_call.1} parent=11 // pred_check
          %p524 = pneg %p97
        $region22: #{tpu_custom_call.1} parent=11 // pred_check_branch
          %526 = sbr.rel (%p524) target = $region24
        $region23: #{tpu_custom_call.1} parent=11 // pred_region
          %s528 = ssub.s32 4096, 4096
          %529 = vsyncadd [#allocation7], %s528
          %s530 = sshll.u32 [#allocation6], 4
          %s531 = int_to_ptr.vmem [resolvable:$true] %s530
          %536 = dma.hbm_to_vmem [thread:$0]  %s2, 4096, %s531, [#allocation7], 256, 256, 16
        $region24: #{tpu_custom_call.1} parent=11 // pred_fallthru
          _
        // Predicated region
        $region25: #{tpu_custom_call.1} parent=11 // pred_check
          %p537 = pneg %p118
        $region26: #{tpu_custom_call.1} parent=11 // pred_check_branch
          %539 = sbr.rel (%p537) target = $region28
        $region27: #{tpu_custom_call.1} parent=11 // pred_region
          %s541 = ssub.s32 512, 512
          %542 = vsyncadd [#allocation7], %s541
          %s543 = sshll.u32 [#allocation8], 4
          %s544 = int_to_ptr.vmem [resolvable:$true] %s543
          %549 = dma.hbm_to_vmem [thread:$0]  %s3, 512, %s544, [#allocation7], 256, 256, 16
        $region28: #{tpu_custom_call.1} parent=11 // pred_fallthru
          _
        // Predicated region
        $region29: #{tpu_custom_call.1} parent=11 // pred_check
          %p550 = pneg %p139
        $region30: #{tpu_custom_call.1} parent=11 // pred_check_branch
          %552 = sbr.rel (%p550) target = $region32
        $region31: #{tpu_custom_call.1} parent=11 // pred_region
          %s554 = ssub.s32 32, 32
          %555 = vsyncadd [#allocation10], %s554
          %s557 = sshll.u32 [#allocation9], 4
          %s558 = int_to_ptr.vmem [resolvable:$true] %s557
          %560 = dma.hbm_to_vmem [thread:$0]  %s4, 32, %s558, [#allocation10]
        $region32: #{tpu_custom_call.1} parent=11 // pred_fallthru
          _
        // Predicated region
        $region33: #{tpu_custom_call.1} parent=11 // pred_check
          %p561 = pneg %p160
        $region34: #{tpu_custom_call.1} parent=11 // pred_check_branch
          %563 = sbr.rel (%p561) target = $region36
        $region35: #{tpu_custom_call.1} parent=11 // pred_region
          %s565 = ssub.s32 32, 32
          %566 = vsyncadd [#allocation10], %s565
          %s568 = sshll.u32 [#allocation11], 4
          %s569 = int_to_ptr.vmem [resolvable:$true] %s568
          %571 = dma.hbm_to_vmem [thread:$0]  %s5, 32, %s569, [#allocation10]
        $region36: #{tpu_custom_call.1} parent=11 // pred_fallthru
          _
      $region12: #{tpu_custom_call.1} parent=5 // pred_fallthru
        _
      %p572 = scmp.lt.s32.totalorder %s34, 2
      // Predicated region
      $region37: #{tpu_custom_call.1} parent=5 // pred_check
        %p573 = pneg %p572
      $region38: #{tpu_custom_call.1} parent=5 // pred_check_branch
        %575 = sbr.rel (%p573) target = $region40
      $region39: #{tpu_custom_call.1} parent=5 // pred_region
        // Predicated region
        $region41: #{tpu_custom_call.1} parent=39 // pred_check
          %p576 = pneg %p180
        $region42: #{tpu_custom_call.1} parent=39 // pred_check_branch
          %578 = sbr.rel (%p576) target = $region44
        $region43: #{tpu_custom_call.1} parent=39 // pred_region
          %s579 = sand.u32 %s34, 1
          %s580 = scalar_lea.sflag [#allocation13], %s579
          %s581 = sand.u32 %s170, 1
          %s582 = smul.addr %s581, 768
          %s583 = scalar_lea.vmem [#allocation12], %s582
          %s585 = ssub.s32 12288, 12288
          %586 = vsyncadd %s580, %s585
          %s587 = smul.addr %s34, 192
          %s588 = smul.addr %s587, 64
          %s589 = scalar_lea.hbm %s6, %s588
          %s590 = sshll.u32 %s583, 4
          %s591 = int_to_ptr.vmem [resolvable:$true] %s590
          %596 = dma.hbm_to_vmem [thread:$0]  %s589, 12288, %s591, %s580, 384, 384, 24
        $region44: #{tpu_custom_call.1} parent=39 // pred_fallthru
          _
        // Predicated region
        $region45: #{tpu_custom_call.1} parent=39 // pred_check
          %p597 = pneg %p206
        $region46: #{tpu_custom_call.1} parent=39 // pred_check_branch
          %599 = sbr.rel (%p597) target = $region48
        $region47: #{tpu_custom_call.1} parent=39 // pred_region
          %p600 = scmp.lt.s32.totalorder %s34, 1
          %s601 = scalar_select %p600, %s34, 1
          %s602 = smul.addr %s601, 6
          %s603 = scalar_lea.vmem %s7, %s602
        $region48: #{tpu_custom_call.1} parent=39 // pred_fallthru
          _
        // Predicated region
        $region49: #{tpu_custom_call.1} parent=39 // pred_check
          %p604 = pneg %p232
        $region50: #{tpu_custom_call.1} parent=39 // pred_check_branch
          %606 = sbr.rel (%p604) target = $region52
        $region51: #{tpu_custom_call.1} parent=39 // pred_region
          %s607 = sand.u32 %s34, 1
          %s608 = scalar_lea.sflag [#allocation13], %s607
          %s609 = sand.u32 %s222, 1
          %s610 = smul.addr %s609, 256
          %s611 = scalar_lea.vmem [#allocation14], %s610
          %s613 = ssub.s32 4096, 4096
          %614 = vsyncadd %s608, %s613
          %s615 = smul.addr %s34, 64
          %s616 = smul.addr %s615, 64
          %s617 = scalar_lea.hbm %s8, %s616
          %s618 = sshll.u32 %s611, 4
          %s619 = int_to_ptr.vmem [resolvable:$true] %s618
          %624 = dma.hbm_to_vmem [thread:$0]  %s617, 4096, %s619, %s608, 128, 128, 8
        $region52: #{tpu_custom_call.1} parent=39 // pred_fallthru
          _
        // Predicated region
        $region53: #{tpu_custom_call.1} parent=39 // pred_check
          %p625 = pneg %p258
        $region54: #{tpu_custom_call.1} parent=39 // pred_check_branch
          %627 = sbr.rel (%p625) target = $region56
        $region55: #{tpu_custom_call.1} parent=39 // pred_region
          %p628 = scmp.lt.s32.totalorder %s34, 1
          %s629 = scalar_select %p628, %s34, 1
          %s630 = smul.addr %s629, 2
          %s631 = scalar_lea.vmem %s9, %s630
        $region56: #{tpu_custom_call.1} parent=39 // pred_fallthru
          _
        // Predicated region
        $region57: #{tpu_custom_call.1} parent=39 // pred_check
          %p632 = pneg %p284
        $region58: #{tpu_custom_call.1} parent=39 // pred_check_branch
          %634 = sbr.rel (%p632) target = $region60
        $region59: #{tpu_custom_call.1} parent=39 // pred_region
          %p635 = scmp.lt.s32.totalorder %s34, 1
          %s636 = scalar_select %p635, %s34, 1
          %s637 = smul.addr %s636, 2
          %s638 = scalar_lea.vmem %s10, %s637
        $region60: #{tpu_custom_call.1} parent=39 // pred_fallthru
          _
        // Predicated region
        $region61: #{tpu_custom_call.1} parent=39 // pred_check
          %p639 = pneg %p310
        $region62: #{tpu_custom_call.1} parent=39 // pred_check_branch
          %641 = sbr.rel (%p639) target = $region64
        $region63: #{tpu_custom_call.1} parent=39 // pred_region
          %p642 = scmp.lt.s32.totalorder %s34, 1
          %s643 = scalar_select %p642, %s34, 1
          %s644 = smul.addr %s643, 2
          %s645 = scalar_lea.vmem %s11, %s644
        $region64: #{tpu_custom_call.1} parent=39 // pred_fallthru
          _
        // Predicated region
        $region65: #{tpu_custom_call.1} parent=39 // pred_check
          %p646 = pneg %p336
        $region66: #{tpu_custom_call.1} parent=39 // pred_check_branch
          %648 = sbr.rel (%p646) target = $region68
        $region67: #{tpu_custom_call.1} parent=39 // pred_region
          %s649 = sand.u32 %s34, 1
          %s650 = scalar_lea.sflag [#allocation16], %s649
          %s651 = sand.u32 %s326, 1
          %s652 = smul.addr %s651, 512
          %s653 = scalar_lea.vmem [#allocation15], %s652
          %s655 = ssub.s32 8192, 8192
          %656 = vsyncadd %s650, %s655
          %s657 = smul.addr %s34, 128
          %s658 = smul.addr %s657, 64
          %s659 = scalar_lea.hbm %s12, %s658
          %s660 = sshll.u32 %s653, 4
          %s661 = int_to_ptr.vmem [resolvable:$true] %s660
          %666 = dma.hbm_to_vmem [thread:$0]  %s659, 8192, %s661, %s650, 256, 256, 16
        $region68: #{tpu_custom_call.1} parent=39 // pred_fallthru
          _
        // Predicated region
        $region69: #{tpu_custom_call.1} parent=39 // pred_check
          %p667 = pneg %p362
        $region70: #{tpu_custom_call.1} parent=39 // pred_check_branch
          %669 = sbr.rel (%p667) target = $region72
        $region71: #{tpu_custom_call.1} parent=39 // pred_region
          %p670 = scmp.lt.s32.totalorder %s34, 1
          %s671 = scalar_select %p670, %s34, 1
          %s672 = smul.addr %s671, 4
          %s673 = scalar_lea.vmem %s13, %s672
        $region72: #{tpu_custom_call.1} parent=39 // pred_fallthru
          _
        // Predicated region
        $region73: #{tpu_custom_call.1} parent=39 // pred_check
          %p674 = pneg %p388
        $region74: #{tpu_custom_call.1} parent=39 // pred_check_branch
          %676 = sbr.rel (%p674) target = $region76
        $region75: #{tpu_custom_call.1} parent=39 // pred_region
          %s677 = sand.u32 %s34, 1
          %s678 = scalar_lea.sflag [#allocation16], %s677
          %s679 = sand.u32 %s378, 1
          %s680 = smul.addr %s679, 512
          %s681 = scalar_lea.vmem [#allocation17], %s680
          %s683 = ssub.s32 8192, 8192
          %684 = vsyncadd %s678, %s683
          %s685 = smul.addr %s34, 128
          %s686 = smul.addr %s685, 64
          %s687 = scalar_lea.hbm %s14, %s686
          %s688 = sshll.u32 %s681, 4
          %s689 = int_to_ptr.vmem [resolvable:$true] %s688
          %694 = dma.hbm_to_vmem [thread:$0]  %s687, 8192, %s689, %s678, 128, 128, 8
        $region76: #{tpu_custom_call.1} parent=39 // pred_fallthru
          _
        // Predicated region
        $region77: #{tpu_custom_call.1} parent=39 // pred_check
          %p695 = pneg %p414
        $region78: #{tpu_custom_call.1} parent=39 // pred_check_branch
          %697 = sbr.rel (%p695) target = $region80
        $region79: #{tpu_custom_call.1} parent=39 // pred_region
          %p698 = scmp.lt.s32.totalorder %s34, 1
          %s699 = scalar_select %p698, %s34, 1
          %s700 = smul.addr %s699, 2
          %s701 = scalar_lea.vmem %s15, %s700
        $region80: #{tpu_custom_call.1} parent=39 // pred_fallthru
          _
        // Predicated region
        $region81: #{tpu_custom_call.1} parent=39 // pred_check
          %p702 = pneg %p440
        $region82: #{tpu_custom_call.1} parent=39 // pred_check_branch
          %704 = sbr.rel (%p702) target = $region84
        $region83: #{tpu_custom_call.1} parent=39 // pred_region
          %p705 = scmp.lt.s32.totalorder %s34, 1
          %s706 = scalar_select %p705, %s34, 1
          %s707 = smul.addr %s706, 2
          %s708 = scalar_lea.vmem %s16, %s707
        $region84: #{tpu_custom_call.1} parent=39 // pred_fallthru
          _
        // Predicated region
        $region85: #{tpu_custom_call.1} parent=39 // pred_check
          %p709 = pneg %p466
        $region86: #{tpu_custom_call.1} parent=39 // pred_check_branch
          %711 = sbr.rel (%p709) target = $region88
        $region87: #{tpu_custom_call.1} parent=39 // pred_region
          %p712 = scmp.lt.s32.totalorder %s34, 1
          %s713 = scalar_select %p712, %s34, 1
          %s714 = smul.addr %s713, 2
          %s715 = scalar_lea.vmem %s17, %s714
        $region88: #{tpu_custom_call.1} parent=39 // pred_fallthru
          _
      $region40: #{tpu_custom_call.1} parent=5 // pred_fallthru
        _
      %p716 = scmp.le.s32.totalorder 1, %s34
      %p717 = scmp.lt.s32.totalorder %s34, 3
      %p718 = pnand %p716, %p717
      %p719 = pneg %p718
      // Predicated region
      $region89: #{tpu_custom_call.1} parent=5 // pred_check
        _
      $region90: #{tpu_custom_call.1} parent=5 // pred_check_branch
        %721 = sbr.rel (%p718) target = $region92
      $region91: #{tpu_custom_call.1} parent=5 // pred_region
        %s722 = ssub.s32 %s34, 1
        // Predicated region
        $region93: #{tpu_custom_call.1} parent=91 // pred_check
          %p723 = pneg %p76
        $region94: #{tpu_custom_call.1} parent=91 // pred_check_branch
          %725 = sbr.rel (%p723) target = $region96
        $region95: #{tpu_custom_call.1} parent=91 // pred_region
          %726 = dma.done [#allocation4], 32
        $region96: #{tpu_custom_call.1} parent=91 // pred_fallthru
          _
        // Predicated region
        $region97: #{tpu_custom_call.1} parent=91 // pred_check
          %p727 = pneg %p97
        $region98: #{tpu_custom_call.1} parent=91 // pred_check_branch
          %729 = sbr.rel (%p727) target = $region100
        $region99: #{tpu_custom_call.1} parent=91 // pred_region
          %730 = dma.done [#allocation7], 4096
        $region100: #{tpu_custom_call.1} parent=91 // pred_fallthru
          _
        // Predicated region
        $region101: #{tpu_custom_call.1} parent=91 // pred_check
          %p731 = pneg %p118
        $region102: #{tpu_custom_call.1} parent=91 // pred_check_branch
          %733 = sbr.rel (%p731) target = $region104
        $region103: #{tpu_custom_call.1} parent=91 // pred_region
          %734 = dma.done [#allocation7], 512
        $region104: #{tpu_custom_call.1} parent=91 // pred_fallthru
          _
        // Predicated region
        $region105: #{tpu_custom_call.1} parent=91 // pred_check
          %p735 = pneg %p139
        $region106: #{tpu_custom_call.1} parent=91 // pred_check_branch
          %737 = sbr.rel (%p735) target = $region108
        $region107: #{tpu_custom_call.1} parent=91 // pred_region
          %738 = dma.done [#allocation10], 32
        $region108: #{tpu_custom_call.1} parent=91 // pred_fallthru
          _
        // Predicated region
        $region109: #{tpu_custom_call.1} parent=91 // pred_check
          %p739 = pneg %p160
        $region110: #{tpu_custom_call.1} parent=91 // pred_check_branch
          %741 = sbr.rel (%p739) target = $region112
        $region111: #{tpu_custom_call.1} parent=91 // pred_region
          %742 = dma.done [#allocation10], 32
        $region112: #{tpu_custom_call.1} parent=91 // pred_fallthru
          _
        %s743 = sand.u32 %s39, 1
        %s744 = scalar_lea.sflag [#allocation13], %s743
        %s745 = sand.u32 %s173, 1
        %s746 = smul.addr %s745, 768
        %s747 = scalar_lea.vmem [#allocation12], %s746
        // Predicated region
        $region113: #{tpu_custom_call.1} parent=91 // pred_check
          %p748 = pneg %p186
        $region114: #{tpu_custom_call.1} parent=91 // pred_check_branch
          %750 = sbr.rel (%p748) target = $region116
        $region115: #{tpu_custom_call.1} parent=91 // pred_region
          %751 = dma.done %s744, 12288
        $region116: #{tpu_custom_call.1} parent=91 // pred_fallthru
          _
        %s752 = sand.u32 %s39, 1
        %s753 = scalar_lea.sflag [#allocation13], %s752
        %s754 = sand.u32 %s225, 1
        %s755 = smul.addr %s754, 256
        %s756 = scalar_lea.vmem [#allocation14], %s755
        // Predicated region
        $region117: #{tpu_custom_call.1} parent=91 // pred_check
          %p757 = pneg %p238
        $region118: #{tpu_custom_call.1} parent=91 // pred_check_branch
          %759 = sbr.rel (%p757) target = $region120
        $region119: #{tpu_custom_call.1} parent=91 // pred_region
          %760 = dma.done %s753, 4096
        $region120: #{tpu_custom_call.1} parent=91 // pred_fallthru
          _
        %s761 = sand.u32 %s39, 1
        %s762 = scalar_lea.sflag [#allocation16], %s761
        %s763 = sand.u32 %s329, 1
        %s764 = smul.addr %s763, 512
        %s765 = scalar_lea.vmem [#allocation15], %s764
        // Predicated region
        $region121: #{tpu_custom_call.1} parent=91 // pred_check
          %p766 = pneg %p342
        $region122: #{tpu_custom_call.1} parent=91 // pred_check_branch
          %768 = sbr.rel (%p766) target = $region124
        $region123: #{tpu_custom_call.1} parent=91 // pred_region
          %769 = dma.done %s762, 8192
        $region124: #{tpu_custom_call.1} parent=91 // pred_fallthru
          _
        %s770 = sand.u32 %s39, 1
        %s771 = scalar_lea.sflag [#allocation16], %s770
        %s772 = sand.u32 %s381, 1
        %s773 = smul.addr %s772, 512
        %s774 = scalar_lea.vmem [#allocation17], %s773
        // Predicated region
        $region125: #{tpu_custom_call.1} parent=91 // pred_check
          %p775 = pneg %p394
        $region126: #{tpu_custom_call.1} parent=91 // pred_check_branch
          %777 = sbr.rel (%p775) target = $region128
        $region127: #{tpu_custom_call.1} parent=91 // pred_region
          %778 = dma.done %s771, 8192
        $region128: #{tpu_custom_call.1} parent=91 // pred_fallthru
          _
        %p779 = pneg %p55
        %p780 = pneg %p52
        %p781 = pneg %p76
        %p782 = pneg %p73
        %p783 = pneg %p97
        %p784 = pneg %p94
        %p785 = pneg %p118
        %p786 = pneg %p115
        %p787 = pneg %p139
        %p788 = pneg %p136
        %p789 = pneg %p160
        %p790 = pneg %p157
        %s791 = sand.u32 %s39, 1
        %s792 = scalar_lea.sflag [#allocation13], %s791
        %s793 = sand.u32 %s173, 1
        %s794 = smul.addr %s793, 768
        %s795 = scalar_lea.vmem [#allocation12], %s794
        %p796 = pneg %p186
        %p797 = pneg %p183
        %p798 = scmp.lt.s32.totalorder %s39, 1
        %s799 = scalar_select %p798, %s39, 1
        %s800 = smul.addr %s799, 6
        %s801 = scalar_lea.vmem %s7, %s800
        %p802 = pneg %p212
        %p803 = pneg %p209
        %s804 = sand.u32 %s39, 1
        %s805 = scalar_lea.sflag [#allocation13], %s804
        %s806 = sand.u32 %s225, 1
        %s807 = smul.addr %s806, 256
        %s808 = scalar_lea.vmem [#allocation14], %s807
        %p809 = pneg %p238
        %p810 = pneg %p235
        %p811 = scmp.lt.s32.totalorder %s39, 1
        %s812 = scalar_select %p811, %s39, 1
        %s813 = smul.addr %s812, 2
        %s814 = scalar_lea.vmem %s9, %s813
        %p815 = pneg %p264
        %p816 = pneg %p261
        %p817 = scmp.lt.s32.totalorder %s39, 1
        %s818 = scalar_select %p817, %s39, 1
        %s819 = smul.addr %s818, 2
        %s820 = scalar_lea.vmem %s10, %s819
        %p821 = pneg %p290
        %p822 = pneg %p287
        %p823 = scmp.lt.s32.totalorder %s39, 1
        %s824 = scalar_select %p823, %s39, 1
        %s825 = smul.addr %s824, 2
        %s826 = scalar_lea.vmem %s11, %s825
        %p827 = pneg %p316
        %p828 = pneg %p313
        %s829 = sand.u32 %s39, 1
        %s830 = scalar_lea.sflag [#allocation16], %s829
        %s831 = sand.u32 %s329, 1
        %s832 = smul.addr %s831, 512
        %s833 = scalar_lea.vmem [#allocation15], %s832
        %p834 = pneg %p342
        %p835 = pneg %p339
        %p836 = scmp.lt.s32.totalorder %s39, 1
        %s837 = scalar_select %p836, %s39, 1
        %s838 = smul.addr %s837, 4
        %s839 = scalar_lea.vmem %s13, %s838
        %p840 = pneg %p368
        %p841 = pneg %p365
        %s842 = sand.u32 %s39, 1
        %s843 = scalar_lea.sflag [#allocation16], %s842
        %s844 = sand.u32 %s381, 1
        %s845 = smul.addr %s844, 512
        %s846 = scalar_lea.vmem [#allocation17], %s845
        %p847 = pneg %p394
        %p848 = pneg %p391
        %p849 = scmp.lt.s32.totalorder %s39, 1
        %s850 = scalar_select %p849, %s39, 1
        %s851 = smul.addr %s850, 2
        %s852 = scalar_lea.vmem %s15, %s851
        %p853 = pneg %p420
        %p854 = pneg %p417
        %p855 = scmp.lt.s32.totalorder %s39, 1
        %s856 = scalar_select %p855, %s39, 1
        %s857 = smul.addr %s856, 2
        %s858 = scalar_lea.vmem %s16, %s857
        %p859 = pneg %p446
        %p860 = pneg %p443
        %p861 = scmp.lt.s32.totalorder %s39, 1
        %s862 = scalar_select %p861, %s39, 1
        %s863 = smul.addr %s862, 2
        %s864 = scalar_lea.vmem %s17, %s863
        %p865 = pneg %p472
        %p866 = pneg %p469
        %p867 = pneg %p493
        %p868 = pneg %p490
        %p869 = scmp.lt.s32.totalorder %s39, 1
        %s870 = scalar_select %p869, %s39, 1
        %s871 = smul.addr %s870, 6
        %s872 = scalar_lea.vmem %s7, %s871
        %p873 = scmp.lt.s32.totalorder %s39, 1
        %s874 = scalar_select %p873, %s39, 1
        %s875 = smul.addr %s874, 2
        %s876 = scalar_lea.vmem %s9, %s875
        %p877 = scmp.lt.s32.totalorder %s39, 1
        %s878 = scalar_select %p877, %s39, 1
        %s879 = smul.addr %s878, 2
        %s880 = scalar_lea.vmem %s10, %s879
        %p881 = scmp.lt.s32.totalorder %s39, 1
        %s882 = scalar_select %p881, %s39, 1
        %s883 = smul.addr %s882, 2
        %s884 = scalar_lea.vmem %s11, %s883
        %p885 = scmp.lt.s32.totalorder %s39, 1
        %s886 = scalar_select %p885, %s39, 1
        %s887 = smul.addr %s886, 4
        %s888 = scalar_lea.vmem %s13, %s887
        %p889 = scmp.lt.s32.totalorder %s39, 1
        %s890 = scalar_select %p889, %s39, 1
        %s891 = smul.addr %s890, 2
        %s892 = scalar_lea.vmem %s15, %s891
        %p893 = scmp.lt.s32.totalorder %s39, 1
        %s894 = scalar_select %p893, %s39, 1
        %s895 = smul.addr %s894, 2
        %s896 = scalar_lea.vmem %s16, %s895
        %p897 = scmp.lt.s32.totalorder %s39, 1
        %s898 = scalar_select %p897, %s39, 1
        %s899 = smul.addr %s898, 2
        %s900 = scalar_lea.vmem %s17, %s899
        %p902 = scmp.eq.s32.totalorder %s39, 0
        // Predicated region
        $region129: #{tpu_custom_call.1} parent=91 // pred_check
          %p903 = pneg %p902
        $region130: #{tpu_custom_call.1} parent=91 // pred_check_branch
          %905 = sbr.rel (%p903) target = $region132
        $region131: #{tpu_custom_call.1} parent=91 // pred_region
          %v906 = vlaneseq
          %v907 = vand.u32 %v906, 127
          %v908 = vld [vmem:[%s0] sm:$0xff]
          %v909 = vld [vmem:[%s0 + $0x8] sm:$0xff]
          %910 = vset.pattern.permute.xlu0 0
          %911 = vperm.xlu0 %910, %v908
          %v912 = vpop.permute.xlu0 %911
          %913 = vset.pattern.permute.xlu0 0
          %914 = vperm.xlu0 %913, %v909
          %v915 = vpop.permute.xlu0 %914
          %vm916 = vcmp.eq.s32.totalorder %v907, %v912
          %vm917 = vcmp.eq.s32.totalorder %v907, %v915
          %v918 = vsel %vm916, 1, 0
          %v919 = vsel %vm917, 1, 0
          %v920 = vcvt.s32.f32 %v918
          %v921 = vcvt.s32.f32 %v919
          %v922 = vld [vmem:[#allocation6] sm:$0xff]
          %v923 = vld [vmem:[#allocation6 + $0x8] sm:$0xff]
          %v924 = vld [vmem:[#allocation6 + $0x10] sm:$0xff]
          %v925 = vld [vmem:[#allocation6 + $0x18] sm:$0xff]
          %v926 = vld [vmem:[#allocation6 + $0x20] sm:$0xff]
          %v927 = vld [vmem:[#allocation6 + $0x28] sm:$0xff]
          %v928 = vld [vmem:[#allocation6 + $0x30] sm:$0xff]
          %v929 = vld [vmem:[#allocation6 + $0x38] sm:$0xff]
          %v930 = vld [vmem:[#allocation6 + $0x40] sm:$0xff]
          %v931 = vld [vmem:[#allocation6 + $0x48] sm:$0xff]
          %v932 = vld [vmem:[#allocation6 + $0x50] sm:$0xff]
          %v933 = vld [vmem:[#allocation6 + $0x58] sm:$0xff]
          %v934 = vld [vmem:[#allocation6 + $0x60] sm:$0xff]
          %v935 = vld [vmem:[#allocation6 + $0x68] sm:$0xff]
          %v936 = vld [vmem:[#allocation6 + $0x70] sm:$0xff]
          %v937 = vld [vmem:[#allocation6 + $0x78] sm:$0xff]
          %v938 = vld [vmem:[#allocation6 + $0x80] sm:$0xff]
          %v939 = vld [vmem:[#allocation6 + $0x88] sm:$0xff]
          %v940 = vld [vmem:[#allocation6 + $0x90] sm:$0xff]
          %v941 = vld [vmem:[#allocation6 + $0x98] sm:$0xff]
          %v942 = vld [vmem:[#allocation6 + $0xa0] sm:$0xff]
          %v943 = vld [vmem:[#allocation6 + $0xa8] sm:$0xff]
          %v944 = vld [vmem:[#allocation6 + $0xb0] sm:$0xff]
          %v945 = vld [vmem:[#allocation6 + $0xb8] sm:$0xff]
          %v946 = vld [vmem:[#allocation6 + $0xc0] sm:$0xff]
          %v947 = vld [vmem:[#allocation6 + $0xc8] sm:$0xff]
          %v948 = vld [vmem:[#allocation6 + $0xd0] sm:$0xff]
          %v949 = vld [vmem:[#allocation6 + $0xd8] sm:$0xff]
          %v950 = vld [vmem:[#allocation6 + $0xe0] sm:$0xff]
          %v951 = vld [vmem:[#allocation6 + $0xe8] sm:$0xff]
          %v952 = vld [vmem:[#allocation6 + $0xf0] sm:$0xff]
          %v953 = vld [vmem:[#allocation6 + $0xf8] sm:$0xff]
          %v954 = vld [vmem:[#allocation8] sm:$0xff]
          %v955 = vld [vmem:[#allocation8 + $0x8] sm:$0xff]
          %v956 = vld [vmem:[#allocation8 + $0x10] sm:$0xff]
          %v957 = vld [vmem:[#allocation8 + $0x18] sm:$0xff]
          %958 = vmatprep.subr.mxu0 %v953
          %959 = vmatpush1.msra.mxu0 %v952
          %960 = vmatprep.subr.mxu0 %v951
          %961 = vmatpush1.msra.mxu0 %v950
          %962 = vmatprep.subr.mxu0 %v949
          %963 = vmatpush1.msra.mxu0 %v948
          %964 = vmatprep.subr.mxu0 %v947
          %965 = vmatpush1.msra.mxu0 %v946
          %966 = vmatprep.subr.mxu0 %v945
          %967 = vmatpush1.msra.mxu0 %v944
          %968 = vmatprep.subr.mxu0 %v943
          %969 = vmatpush1.msra.mxu0 %v942
          %970 = vmatprep.subr.mxu0 %v941
          %971 = vmatpush1.msra.mxu0 %v940
          %972 = vmatprep.subr.mxu0 %v939
          %973 = vmatpush1.msra.mxu0 %v938
          %974 = vmatprep.subr.mxu0 %v937
          %975 = vmatpush1.msra.mxu0 %v936
          %976 = vmatprep.subr.mxu0 %v935
          %977 = vmatpush1.msra.mxu0 %v934
          %978 = vmatprep.subr.mxu0 %v933
          %979 = vmatpush1.msra.mxu0 %v932
          %980 = vmatprep.subr.mxu0 %v931
          %981 = vmatpush1.msra.mxu0 %v930
          %982 = vmatprep.subr.mxu0 %v929
          %983 = vmatpush1.msra.mxu0 %v928
          %984 = vmatprep.subr.mxu0 %v927
          %985 = vmatpush1.msra.mxu0 %v926
          %986 = vmatprep.subr.mxu0 %v925
          %987 = vmatpush1.msra.mxu0 %v924
          %988 = vmatprep.subr.mxu0 %v923
          %989 = vmatpush1.msra.mxu0 %v922
          %990 = vmatprep.subr.mxu0 0.0
          %991 = vmatpush2.msra.mxu0 0.0
          %992 = vmatprep.subr.mxu0 0.0
          %993 = vmatpush2.msra.mxu0 0.0
          %994 = vmatprep.subr.mxu0 0.0
          %995 = vmatpush2.msra.mxu0 0.0
          %996 = vmatprep.subr.mxu0 0.0
          %997 = vmatpush2.msra.mxu0 0.0
          %998 = vmatprep.subr.mxu0 0.0
          %999 = vmatpush2.msra.mxu0 0.0
          %1000 = vmatprep.subr.mxu0 0.0
          %1001 = vmatpush2.msra.mxu0 0.0
          %1002 = vmatprep.subr.mxu0 0.0
          %1003 = vmatpush2.msra.mxu0 0.0
          %1004 = vmatprep.subr.mxu0 0.0
          %1005 = vmatpush2.msra.mxu0 0.0
          %1006 = vmatprep.subr.mxu0 0.0
          %1007 = vmatpush2.msra.mxu0 0.0
          %1008 = vmatprep.subr.mxu0 0.0
          %1009 = vmatpush2.msra.mxu0 0.0
          %1010 = vmatprep.subr.mxu0 0.0
          %1011 = vmatpush2.msra.mxu0 0.0
          %1012 = vmatprep.subr.mxu0 0.0
          %1013 = vmatpush2.msra.mxu0 0.0
          %1014 = vmatprep.subr.mxu0 0.0
          %1015 = vmatpush2.msra.mxu0 0.0
          %1016 = vmatprep.subr.mxu0 0.0
          %1017 = vmatpush2.msra.mxu0 0.0
          %1018 = vmatprep.subr.mxu0 0.0
          %1019 = vmatpush2.msra.mxu0 0.0
          %1020 = vmatprep.subr.mxu0 0.0
          %1021 = vmatpush2.msra.mxu0 0.0
          %1022 = vmatprep.mubr.f32.mxu0 0.0
          %1023 = vmatmul.mubr.f32.gmra.mxu0 %v920
          %v1024 = vpop.f32.mrf.mxu0
          %v1025 = vadd.f32 %v954, %v1024
          %v1026 = vpop.f32.mrf.mxu0
          %v1027 = vadd.f32 %v955, %v1026
          %1028 = vmatprep.mubr.f32.mxu0 0.0
          %1029 = vmatmul.mubr.f32.gmra.mxu0 %v921
          %v1030 = vpop.f32.mrf.mxu0
          %v1031 = vadd.f32 %v956, %v1030
          %v1032 = vpop.f32.mrf.mxu0
          %v1033 = vadd.f32 %v957, %v1032
          %1034 = vdwg.mxu0
          %v1035 = vld [vmem:[#allocation9] sm:$0x3]
          %v1036 = vld [vmem:[#allocation11] sm:$0x3]
          %v1037 = vadd.f32 %v1025, %v1027
          %1038 = vadd.xlane.f32.xlu0 %v1037
          %v1039 = vpop.xlane.xlu0 %1038
          %v1040 = vadd.f32 %v1031, %v1033
          %1041 = vadd.xlane.f32.xlu0 %v1040
          %v1042 = vpop.xlane.xlu0 %1041
          %v1043 = vrcp.pop 256.0
          %v1044 = vmul.f32 %v1039, %v1043
          %v1045 = vmul.f32 %v1042, %v1043
          %v1046 = vsub.f32 %v1025, %v1044
          %v1047 = vsub.f32 %v1027, %v1044
          %v1048 = vsub.f32 %v1031, %v1045
          %v1049 = vsub.f32 %v1033, %v1045
          %v1050 = vmul.f32 %v1046, %v1046
          %v1051 = vmul.f32 %v1047, %v1047
          %v1052 = vmul.f32 %v1048, %v1048
          %v1053 = vmul.f32 %v1049, %v1049
          %v1054 = vadd.f32 %v1050, %v1051
          %1055 = vadd.xlane.f32.xlu0 %v1054
          %v1056 = vpop.xlane.xlu0 %1055
          %v1057 = vadd.f32 %v1052, %v1053
          %1058 = vadd.xlane.f32.xlu0 %v1057
          %v1059 = vpop.xlane.xlu0 %1058
          %v1060 = vmul.f32 %v1056, %v1043
          %v1061 = vmul.f32 %v1059, %v1043
          %v1062 = vadd.f32 %v1060, 1e-12
          %v1063 = vadd.f32 %v1061, 1e-12
          %v1064 = vrsqrt.pop %v1062
          %v1065 = vrsqrt.pop %v1063
          %v1066 = vmul.f32 %v1046, %v1064
          %v1067 = vmul.f32 %v1047, %v1064
          %v1068 = vmul.f32 %v1048, %v1065
          %v1069 = vmul.f32 %v1049, %v1065
          %v1071 = vlaneseq
          %v1072 = vshrl.u32 %v1071, 7
          %v1073 = vsub.s32 0, %v1072
          %v1074 = vrot.slane %v1035, %v1073
          %v1075 = vlaneseq
          %v1076 = vshrl.u32 %v1075, 7
          %v1077 = vsub.s32 1, %v1076
          %v1078 = vrot.slane %v1035, %v1077
          %v1081 = vmul.f32 %v1066, %v1074
          %v1082 = vmul.f32 %v1067, %v1078
          %v1083 = vmul.f32 %v1068, %v1074
          %v1084 = vmul.f32 %v1069, %v1078
          %v1086 = vlaneseq
          %v1087 = vshrl.u32 %v1086, 7
          %v1088 = vsub.s32 0, %v1087
          %v1089 = vrot.slane %v1036, %v1088
          %v1090 = vlaneseq
          %v1091 = vshrl.u32 %v1090, 7
          %v1092 = vsub.s32 1, %v1091
          %v1093 = vrot.slane %v1036, %v1092
          %v1096 = vadd.f32 %v1081, %v1089
          %v1097 = vadd.f32 %v1082, %v1093
          %v1098 = vadd.f32 %v1083, %v1089
          %v1099 = vadd.f32 %v1084, %v1093
          %1100 = vst [vmem:[#allocation2] sm:$0xff] %v1096
          %1101 = vst [vmem:[#allocation2 + $0x8] sm:$0xff] %v1097
          %1102 = vst [vmem:[#allocation2 + $0x10] sm:$0xff] %v1098
          %1103 = vst [vmem:[#allocation2 + $0x18] sm:$0xff] %v1099
        $region132: #{tpu_custom_call.1} parent=91 // pred_fallthru
          _
        %v1104 = vld [vmem:[#allocation2] sm:$0xff]
        %v1105 = vld [vmem:[#allocation2 + $0x8] sm:$0xff]
        %v1106 = vld [vmem:[#allocation2 + $0x10] sm:$0xff]
        %v1107 = vld [vmem:[#allocation2 + $0x18] sm:$0xff]
        %v1108 = vpack.c.bf16 %v1106, %v1104
        %v1109 = vpack.c.bf16 %v1107, %v1105
        %v1110 = vld [vmem:[%s747] sm:$0xff]
        %v1111 = vld [vmem:[%s747 + $0x8] sm:$0xff]
        %v1112 = vld [vmem:[%s747 + $0x10] sm:$0xff]
        %v1113 = vld [vmem:[%s747 + $0x18] sm:$0xff]
        %v1114 = vld [vmem:[%s747 + $0x20] sm:$0xff]
        %v1115 = vld [vmem:[%s747 + $0x28] sm:$0xff]
        %v1116 = vld [vmem:[%s747 + $0x30] sm:$0xff]
        %v1117 = vld [vmem:[%s747 + $0x38] sm:$0xff]
        %v1118 = vld [vmem:[%s747 + $0x40] sm:$0xff]
        %v1119 = vld [vmem:[%s747 + $0x48] sm:$0xff]
        %v1120 = vld [vmem:[%s747 + $0x50] sm:$0xff]
        %v1121 = vld [vmem:[%s747 + $0x58] sm:$0xff]
        %v1122 = vld [vmem:[%s747 + $0x60] sm:$0xff]
        %v1123 = vld [vmem:[%s747 + $0x68] sm:$0xff]
        %v1124 = vld [vmem:[%s747 + $0x70] sm:$0xff]
        %v1125 = vld [vmem:[%s747 + $0x78] sm:$0xff]
        %v1126 = vld [vmem:[%s747 + $0x80] sm:$0xff]
        %v1127 = vld [vmem:[%s747 + $0x88] sm:$0xff]
        %v1128 = vld [vmem:[%s747 + $0x90] sm:$0xff]
        %v1129 = vld [vmem:[%s747 + $0x98] sm:$0xff]
        %v1130 = vld [vmem:[%s747 + $0xa0] sm:$0xff]
        %v1131 = vld [vmem:[%s747 + $0xa8] sm:$0xff]
        %v1132 = vld [vmem:[%s747 + $0xb0] sm:$0xff]
        %v1133 = vld [vmem:[%s747 + $0xb8] sm:$0xff]
        %v1134 = vld [vmem:[%s747 + $0xc0] sm:$0xff]
        %v1135 = vld [vmem:[%s747 + $0xc8] sm:$0xff]
        %v1136 = vld [vmem:[%s747 + $0xd0] sm:$0xff]
        %v1137 = vld [vmem:[%s747 + $0xd8] sm:$0xff]
        %v1138 = vld [vmem:[%s747 + $0xe0] sm:$0xff]
        %v1139 = vld [vmem:[%s747 + $0xe8] sm:$0xff]
        %v1140 = vld [vmem:[%s747 + $0xf0] sm:$0xff]
        %v1141 = vld [vmem:[%s747 + $0xf8] sm:$0xff]
        %v1142 = vld [vmem:[%s747 + $0x100] sm:$0xff]
        %v1143 = vld [vmem:[%s747 + $0x108] sm:$0xff]
        %v1144 = vld [vmem:[%s747 + $0x110] sm:$0xff]
        %v1145 = vld [vmem:[%s747 + $0x118] sm:$0xff]
        %v1146 = vld [vmem:[%s747 + $0x120] sm:$0xff]
        %v1147 = vld [vmem:[%s747 + $0x128] sm:$0xff]
        %v1148 = vld [vmem:[%s747 + $0x130] sm:$0xff]
        %v1149 = vld [vmem:[%s747 + $0x138] sm:$0xff]
        %v1150 = vld [vmem:[%s747 + $0x140] sm:$0xff]
        %v1151 = vld [vmem:[%s747 + $0x148] sm:$0xff]
        %v1152 = vld [vmem:[%s747 + $0x150] sm:$0xff]
        %v1153 = vld [vmem:[%s747 + $0x158] sm:$0xff]
        %v1154 = vld [vmem:[%s747 + $0x160] sm:$0xff]
        %v1155 = vld [vmem:[%s747 + $0x168] sm:$0xff]
        %v1156 = vld [vmem:[%s747 + $0x170] sm:$0xff]
        %v1157 = vld [vmem:[%s747 + $0x178] sm:$0xff]
        %v1158 = vld [vmem:[%s747 + $0x180] sm:$0xff]
        %v1159 = vld [vmem:[%s747 + $0x188] sm:$0xff]
        %v1160 = vld [vmem:[%s747 + $0x190] sm:$0xff]
        %v1161 = vld [vmem:[%s747 + $0x198] sm:$0xff]
        %v1162 = vld [vmem:[%s747 + $0x1a0] sm:$0xff]
        %v1163 = vld [vmem:[%s747 + $0x1a8] sm:$0xff]
        %v1164 = vld [vmem:[%s747 + $0x1b0] sm:$0xff]
        %v1165 = vld [vmem:[%s747 + $0x1b8] sm:$0xff]
        %v1166 = vld [vmem:[%s747 + $0x1c0] sm:$0xff]
        %v1167 = vld [vmem:[%s747 + $0x1c8] sm:$0xff]
        %v1168 = vld [vmem:[%s747 + $0x1d0] sm:$0xff]
        %v1169 = vld [vmem:[%s747 + $0x1d8] sm:$0xff]
        %v1170 = vld [vmem:[%s747 + $0x1e0] sm:$0xff]
        %v1171 = vld [vmem:[%s747 + $0x1e8] sm:$0xff]
        %v1172 = vld [vmem:[%s747 + $0x1f0] sm:$0xff]
        %v1173 = vld [vmem:[%s747 + $0x1f8] sm:$0xff]
        %v1174 = vld [vmem:[%s747 + $0x200] sm:$0xff]
        %v1175 = vld [vmem:[%s747 + $0x208] sm:$0xff]
        %v1176 = vld [vmem:[%s747 + $0x210] sm:$0xff]
        %v1177 = vld [vmem:[%s747 + $0x218] sm:$0xff]
        %v1178 = vld [vmem:[%s747 + $0x220] sm:$0xff]
        %v1179 = vld [vmem:[%s747 + $0x228] sm:$0xff]
        %v1180 = vld [vmem:[%s747 + $0x230] sm:$0xff]
        %v1181 = vld [vmem:[%s747 + $0x238] sm:$0xff]
        %v1182 = vld [vmem:[%s747 + $0x240] sm:$0xff]
        %v1183 = vld [vmem:[%s747 + $0x248] sm:$0xff]
        %v1184 = vld [vmem:[%s747 + $0x250] sm:$0xff]
        %v1185 = vld [vmem:[%s747 + $0x258] sm:$0xff]
        %v1186 = vld [vmem:[%s747 + $0x260] sm:$0xff]
        %v1187 = vld [vmem:[%s747 + $0x268] sm:$0xff]
        %v1188 = vld [vmem:[%s747 + $0x270] sm:$0xff]
        %v1189 = vld [vmem:[%s747 + $0x278] sm:$0xff]
        %v1190 = vld [vmem:[%s747 + $0x280] sm:$0xff]
        %v1191 = vld [vmem:[%s747 + $0x288] sm:$0xff]
        %v1192 = vld [vmem:[%s747 + $0x290] sm:$0xff]
        %v1193 = vld [vmem:[%s747 + $0x298] sm:$0xff]
        %v1194 = vld [vmem:[%s747 + $0x2a0] sm:$0xff]
        %v1195 = vld [vmem:[%s747 + $0x2a8] sm:$0xff]
        %v1196 = vld [vmem:[%s747 + $0x2b0] sm:$0xff]
        %v1197 = vld [vmem:[%s747 + $0x2b8] sm:$0xff]
        %v1198 = vld [vmem:[%s747 + $0x2c0] sm:$0xff]
        %v1199 = vld [vmem:[%s747 + $0x2c8] sm:$0xff]
        %v1200 = vld [vmem:[%s747 + $0x2d0] sm:$0xff]
        %v1201 = vld [vmem:[%s747 + $0x2d8] sm:$0xff]
        %v1202 = vld [vmem:[%s747 + $0x2e0] sm:$0xff]
        %v1203 = vld [vmem:[%s747 + $0x2e8] sm:$0xff]
        %v1204 = vld [vmem:[%s747 + $0x2f0] sm:$0xff]
        %v1205 = vld [vmem:[%s747 + $0x2f8] sm:$0xff]
        %v1206 = vld [vmem:[%s872] sm:$0x3f]
        %v1208 = vlaneseq
        %v1209 = vshrl.u32 %v1208, 7
        %v1210 = vsub.s32 0, %v1209
        %v1211 = vrot.slane %v1206, %v1210
        %v1212 = vlaneseq
        %v1213 = vshrl.u32 %v1212, 7
        %v1214 = vsub.s32 1, %v1213
        %v1215 = vrot.slane %v1206, %v1214
        %v1216 = vlaneseq
        %v1217 = vshrl.u32 %v1216, 7
        %v1218 = vsub.s32 2, %v1217
        %v1219 = vrot.slane %v1206, %v1218
        %v1220 = vlaneseq
        %v1221 = vshrl.u32 %v1220, 7
        %v1222 = vsub.s32 3, %v1221
        %v1223 = vrot.slane %v1206, %v1222
        %v1224 = vlaneseq
        %v1225 = vshrl.u32 %v1224, 7
        %v1226 = vsub.s32 4, %v1225
        %v1227 = vrot.slane %v1206, %v1226
        %v1228 = vlaneseq
        %v1229 = vshrl.u32 %v1228, 7
        %v1230 = vsub.s32 5, %v1229
        %v1231 = vrot.slane %v1206, %v1230
        %v1334 = vunpack.c.l.b16 %v1110
        %v1335 = vunpack.c.h.b16 %v1110
        %v1336 = vunpack.c.l.b16 %v1111
        %v1337 = vunpack.c.h.b16 %v1111
        %v1338 = vunpack.c.l.b16 %v1112
        %v1339 = vunpack.c.h.b16 %v1112
        %v1340 = vunpack.c.l.b16 %v1113
        %v1341 = vunpack.c.h.b16 %v1113
        %v1342 = vunpack.c.l.b16 %v1114
        %v1343 = vunpack.c.h.b16 %v1114
        %v1344 = vunpack.c.l.b16 %v1115
        %v1345 = vunpack.c.h.b16 %v1115
        %v1346 = vunpack.c.l.b16 %v1116
        %v1347 = vunpack.c.h.b16 %v1116
        %v1348 = vunpack.c.l.b16 %v1117
        %v1349 = vunpack.c.h.b16 %v1117
        %v1350 = vunpack.c.l.b16 %v1118
        %v1351 = vunpack.c.h.b16 %v1118
        %v1352 = vunpack.c.l.b16 %v1119
        %v1353 = vunpack.c.h.b16 %v1119
        %v1354 = vunpack.c.l.b16 %v1120
        %v1355 = vunpack.c.h.b16 %v1120
        %v1356 = vunpack.c.l.b16 %v1121
        %v1357 = vunpack.c.h.b16 %v1121
        %v1358 = vunpack.c.l.b16 %v1122
        %v1359 = vunpack.c.h.b16 %v1122
        %v1360 = vunpack.c.l.b16 %v1123
        %v1361 = vunpack.c.h.b16 %v1123
        %v1362 = vunpack.c.l.b16 %v1124
        %v1363 = vunpack.c.h.b16 %v1124
        %v1364 = vunpack.c.l.b16 %v1125
        %v1365 = vunpack.c.h.b16 %v1125
        %v1366 = vunpack.c.l.b16 %v1126
        %v1367 = vunpack.c.h.b16 %v1126
        %v1368 = vunpack.c.l.b16 %v1127
        %v1369 = vunpack.c.h.b16 %v1127
        %v1370 = vunpack.c.l.b16 %v1128
        %v1371 = vunpack.c.h.b16 %v1128
        %v1372 = vunpack.c.l.b16 %v1129
        %v1373 = vunpack.c.h.b16 %v1129
        %v1374 = vunpack.c.l.b16 %v1130
        %v1375 = vunpack.c.h.b16 %v1130
        %v1376 = vunpack.c.l.b16 %v1131
        %v1377 = vunpack.c.h.b16 %v1131
        %v1378 = vunpack.c.l.b16 %v1132
        %v1379 = vunpack.c.h.b16 %v1132
        %v1380 = vunpack.c.l.b16 %v1133
        %v1381 = vunpack.c.h.b16 %v1133
        %v1382 = vunpack.c.l.b16 %v1134
        %v1383 = vunpack.c.h.b16 %v1134
        %v1384 = vunpack.c.l.b16 %v1135
        %v1385 = vunpack.c.h.b16 %v1135
        %v1386 = vunpack.c.l.b16 %v1136
        %v1387 = vunpack.c.h.b16 %v1136
        %v1388 = vunpack.c.l.b16 %v1137
        %v1389 = vunpack.c.h.b16 %v1137
        %v1390 = vunpack.c.l.b16 %v1138
        %v1391 = vunpack.c.h.b16 %v1138
        %v1392 = vunpack.c.l.b16 %v1139
        %v1393 = vunpack.c.h.b16 %v1139
        %v1394 = vunpack.c.l.b16 %v1140
        %v1395 = vunpack.c.h.b16 %v1140
        %v1396 = vunpack.c.l.b16 %v1141
        %v1397 = vunpack.c.h.b16 %v1141
        %v1398 = vunpack.c.l.b16 %v1142
        %v1399 = vunpack.c.h.b16 %v1142
        %v1400 = vunpack.c.l.b16 %v1143
        %v1401 = vunpack.c.h.b16 %v1143
        %v1402 = vunpack.c.l.b16 %v1144
        %v1403 = vunpack.c.h.b16 %v1144
        %v1404 = vunpack.c.l.b16 %v1145
        %v1405 = vunpack.c.h.b16 %v1145
        %v1406 = vunpack.c.l.b16 %v1146
        %v1407 = vunpack.c.h.b16 %v1146
        %v1408 = vunpack.c.l.b16 %v1147
        %v1409 = vunpack.c.h.b16 %v1147
        %v1410 = vunpack.c.l.b16 %v1148
        %v1411 = vunpack.c.h.b16 %v1148
        %v1412 = vunpack.c.l.b16 %v1149
        %v1413 = vunpack.c.h.b16 %v1149
        %v1414 = vunpack.c.l.b16 %v1150
        %v1415 = vunpack.c.h.b16 %v1150
        %v1416 = vunpack.c.l.b16 %v1151
        %v1417 = vunpack.c.h.b16 %v1151
        %v1418 = vunpack.c.l.b16 %v1152
        %v1419 = vunpack.c.h.b16 %v1152
        %v1420 = vunpack.c.l.b16 %v1153
        %v1421 = vunpack.c.h.b16 %v1153
        %v1422 = vunpack.c.l.b16 %v1154
        %v1423 = vunpack.c.h.b16 %v1154
        %v1424 = vunpack.c.l.b16 %v1155
        %v1425 = vunpack.c.h.b16 %v1155
        %v1426 = vunpack.c.l.b16 %v1156
        %v1427 = vunpack.c.h.b16 %v1156
        %v1428 = vunpack.c.l.b16 %v1157
        %v1429 = vunpack.c.h.b16 %v1157
        %v1430 = vunpack.c.l.b16 %v1158
        %v1431 = vunpack.c.h.b16 %v1158
        %v1432 = vunpack.c.l.b16 %v1159
        %v1433 = vunpack.c.h.b16 %v1159
        %v1434 = vunpack.c.l.b16 %v1160
        %v1435 = vunpack.c.h.b16 %v1160
        %v1436 = vunpack.c.l.b16 %v1161
        %v1437 = vunpack.c.h.b16 %v1161
        %v1438 = vunpack.c.l.b16 %v1162
        %v1439 = vunpack.c.h.b16 %v1162
        %v1440 = vunpack.c.l.b16 %v1163
        %v1441 = vunpack.c.h.b16 %v1163
        %v1442 = vunpack.c.l.b16 %v1164
        %v1443 = vunpack.c.h.b16 %v1164
        %v1444 = vunpack.c.l.b16 %v1165
        %v1445 = vunpack.c.h.b16 %v1165
        %v1446 = vunpack.c.l.b16 %v1166
        %v1447 = vunpack.c.h.b16 %v1166
        %v1448 = vunpack.c.l.b16 %v1167
        %v1449 = vunpack.c.h.b16 %v1167
        %v1450 = vunpack.c.l.b16 %v1168
        %v1451 = vunpack.c.h.b16 %v1168
        %v1452 = vunpack.c.l.b16 %v1169
        %v1453 = vunpack.c.h.b16 %v1169
        %v1454 = vunpack.c.l.b16 %v1170
        %v1455 = vunpack.c.h.b16 %v1170
        %v1456 = vunpack.c.l.b16 %v1171
        %v1457 = vunpack.c.h.b16 %v1171
        %v1458 = vunpack.c.l.b16 %v1172
        %v1459 = vunpack.c.h.b16 %v1172
        %v1460 = vunpack.c.l.b16 %v1173
        %v1461 = vunpack.c.h.b16 %v1173
        %v1462 = vunpack.c.l.b16 %v1174
        %v1463 = vunpack.c.h.b16 %v1174
        %v1464 = vunpack.c.l.b16 %v1175
        %v1465 = vunpack.c.h.b16 %v1175
        %v1466 = vunpack.c.l.b16 %v1176
        %v1467 = vunpack.c.h.b16 %v1176
        %v1468 = vunpack.c.l.b16 %v1177
        %v1469 = vunpack.c.h.b16 %v1177
        %v1470 = vunpack.c.l.b16 %v1178
        %v1471 = vunpack.c.h.b16 %v1178
        %v1472 = vunpack.c.l.b16 %v1179
        %v1473 = vunpack.c.h.b16 %v1179
        %v1474 = vunpack.c.l.b16 %v1180
        %v1475 = vunpack.c.h.b16 %v1180
        %v1476 = vunpack.c.l.b16 %v1181
        %v1477 = vunpack.c.h.b16 %v1181
        %v1478 = vunpack.c.l.b16 %v1182
        %v1479 = vunpack.c.h.b16 %v1182
        %v1480 = vunpack.c.l.b16 %v1183
        %v1481 = vunpack.c.h.b16 %v1183
        %v1482 = vunpack.c.l.b16 %v1184
        %v1483 = vunpack.c.h.b16 %v1184
        %v1484 = vunpack.c.l.b16 %v1185
        %v1485 = vunpack.c.h.b16 %v1185
        %v1486 = vunpack.c.l.b16 %v1186
        %v1487 = vunpack.c.h.b16 %v1186
        %v1488 = vunpack.c.l.b16 %v1187
        %v1489 = vunpack.c.h.b16 %v1187
        %v1490 = vunpack.c.l.b16 %v1188
        %v1491 = vunpack.c.h.b16 %v1188
        %v1492 = vunpack.c.l.b16 %v1189
        %v1493 = vunpack.c.h.b16 %v1189
        %v1494 = vunpack.c.l.b16 %v1190
        %v1495 = vunpack.c.h.b16 %v1190
        %v1496 = vunpack.c.l.b16 %v1191
        %v1497 = vunpack.c.h.b16 %v1191
        %v1498 = vunpack.c.l.b16 %v1192
        %v1499 = vunpack.c.h.b16 %v1192
        %v1500 = vunpack.c.l.b16 %v1193
        %v1501 = vunpack.c.h.b16 %v1193
        %v1502 = vunpack.c.l.b16 %v1194
        %v1503 = vunpack.c.h.b16 %v1194
        %v1504 = vunpack.c.l.b16 %v1195
        %v1505 = vunpack.c.h.b16 %v1195
        %v1506 = vunpack.c.l.b16 %v1196
        %v1507 = vunpack.c.h.b16 %v1196
        %v1508 = vunpack.c.l.b16 %v1197
        %v1509 = vunpack.c.h.b16 %v1197
        %v1510 = vunpack.c.l.b16 %v1198
        %v1511 = vunpack.c.h.b16 %v1198
        %v1512 = vunpack.c.l.b16 %v1199
        %v1513 = vunpack.c.h.b16 %v1199
        %v1514 = vunpack.c.l.b16 %v1200
        %v1515 = vunpack.c.h.b16 %v1200
        %v1516 = vunpack.c.l.b16 %v1201
        %v1517 = vunpack.c.h.b16 %v1201
        %v1518 = vunpack.c.l.b16 %v1202
        %v1519 = vunpack.c.h.b16 %v1202
        %v1520 = vunpack.c.l.b16 %v1203
        %v1521 = vunpack.c.h.b16 %v1203
        %v1522 = vunpack.c.l.b16 %v1204
        %v1523 = vunpack.c.h.b16 %v1204
        %v1524 = vunpack.c.l.b16 %v1205
        %v1525 = vunpack.c.h.b16 %v1205
        %v1526 = vpack.c.b16 %v1340, %v1334
        %v1527 = vpack.c.b16 %v1341, %v1335
        %v1528 = vpack.c.b16 %v1342, %v1336
        %v1529 = vpack.c.b16 %v1343, %v1337
        %v1530 = vpack.c.b16 %v1344, %v1338
        %v1531 = vpack.c.b16 %v1345, %v1339
        %v1532 = vpack.c.b16 %v1352, %v1346
        %v1533 = vpack.c.b16 %v1353, %v1347
        %v1534 = vpack.c.b16 %v1354, %v1348
        %v1535 = vpack.c.b16 %v1355, %v1349
        %v1536 = vpack.c.b16 %v1356, %v1350
        %v1537 = vpack.c.b16 %v1357, %v1351
        %v1538 = vpack.c.b16 %v1364, %v1358
        %v1539 = vpack.c.b16 %v1365, %v1359
        %v1540 = vpack.c.b16 %v1366, %v1360
        %v1541 = vpack.c.b16 %v1367, %v1361
        %v1542 = vpack.c.b16 %v1368, %v1362
        %v1543 = vpack.c.b16 %v1369, %v1363
        %v1544 = vpack.c.b16 %v1376, %v1370
        %v1545 = vpack.c.b16 %v1377, %v1371
        %v1546 = vpack.c.b16 %v1378, %v1372
        %v1547 = vpack.c.b16 %v1379, %v1373
        %v1548 = vpack.c.b16 %v1380, %v1374
        %v1549 = vpack.c.b16 %v1381, %v1375
        %v1550 = vpack.c.b16 %v1388, %v1382
        %v1551 = vpack.c.b16 %v1389, %v1383
        %v1552 = vpack.c.b16 %v1390, %v1384
        %v1553 = vpack.c.b16 %v1391, %v1385
        %v1554 = vpack.c.b16 %v1392, %v1386
        %v1555 = vpack.c.b16 %v1393, %v1387
        %v1556 = vpack.c.b16 %v1400, %v1394
        %v1557 = vpack.c.b16 %v1401, %v1395
        %v1558 = vpack.c.b16 %v1402, %v1396
        %v1559 = vpack.c.b16 %v1403, %v1397
        %v1560 = vpack.c.b16 %v1404, %v1398
        %v1561 = vpack.c.b16 %v1405, %v1399
        %v1562 = vpack.c.b16 %v1412, %v1406
        %v1563 = vpack.c.b16 %v1413, %v1407
        %v1564 = vpack.c.b16 %v1414, %v1408
        %v1565 = vpack.c.b16 %v1415, %v1409
        %v1566 = vpack.c.b16 %v1416, %v1410
        %v1567 = vpack.c.b16 %v1417, %v1411
        %v1568 = vpack.c.b16 %v1424, %v1418
        %v1569 = vpack.c.b16 %v1425, %v1419
        %v1570 = vpack.c.b16 %v1426, %v1420
        %v1571 = vpack.c.b16 %v1427, %v1421
        %v1572 = vpack.c.b16 %v1428, %v1422
        %v1573 = vpack.c.b16 %v1429, %v1423
        %v1574 = vpack.c.b16 %v1436, %v1430
        %v1575 = vpack.c.b16 %v1437, %v1431
        %v1576 = vpack.c.b16 %v1438, %v1432
        %v1577 = vpack.c.b16 %v1439, %v1433
        %v1578 = vpack.c.b16 %v1440, %v1434
        %v1579 = vpack.c.b16 %v1441, %v1435
        %v1580 = vpack.c.b16 %v1448, %v1442
        %v1581 = vpack.c.b16 %v1449, %v1443
        %v1582 = vpack.c.b16 %v1450, %v1444
        %v1583 = vpack.c.b16 %v1451, %v1445
        %v1584 = vpack.c.b16 %v1452, %v1446
        %v1585 = vpack.c.b16 %v1453, %v1447
        %v1586 = vpack.c.b16 %v1460, %v1454
        %v1587 = vpack.c.b16 %v1461, %v1455
        %v1588 = vpack.c.b16 %v1462, %v1456
        %v1589 = vpack.c.b16 %v1463, %v1457
        %v1590 = vpack.c.b16 %v1464, %v1458
        %v1591 = vpack.c.b16 %v1465, %v1459
        %v1592 = vpack.c.b16 %v1472, %v1466
        %v1593 = vpack.c.b16 %v1473, %v1467
        %v1594 = vpack.c.b16 %v1474, %v1468
        %v1595 = vpack.c.b16 %v1475, %v1469
        %v1596 = vpack.c.b16 %v1476, %v1470
        %v1597 = vpack.c.b16 %v1477, %v1471
        %v1598 = vpack.c.b16 %v1484, %v1478
        %v1599 = vpack.c.b16 %v1485, %v1479
        %v1600 = vpack.c.b16 %v1486, %v1480
        %v1601 = vpack.c.b16 %v1487, %v1481
        %v1602 = vpack.c.b16 %v1488, %v1482
        %v1603 = vpack.c.b16 %v1489, %v1483
        %v1604 = vpack.c.b16 %v1496, %v1490
        %v1605 = vpack.c.b16 %v1497, %v1491
        %v1606 = vpack.c.b16 %v1498, %v1492
        %v1607 = vpack.c.b16 %v1499, %v1493
        %v1608 = vpack.c.b16 %v1500, %v1494
        %v1609 = vpack.c.b16 %v1501, %v1495
        %v1610 = vpack.c.b16 %v1508, %v1502
        %v1611 = vpack.c.b16 %v1509, %v1503
        %v1612 = vpack.c.b16 %v1510, %v1504
        %v1613 = vpack.c.b16 %v1511, %v1505
        %v1614 = vpack.c.b16 %v1512, %v1506
        %v1615 = vpack.c.b16 %v1513, %v1507
        %v1616 = vpack.c.b16 %v1520, %v1514
        %v1617 = vpack.c.b16 %v1521, %v1515
        %v1618 = vpack.c.b16 %v1522, %v1516
        %v1619 = vpack.c.b16 %v1523, %v1517
        %v1620 = vpack.c.b16 %v1524, %v1518
        %v1621 = vpack.c.b16 %v1525, %v1519
        %1718 = vmatprep.subr.bf16.mxu0 %v1569
        %1719 = vmatpush1.bf16.msra.mxu0 %v1568
        %1720 = vmatprep.subr.bf16.mxu0 %v1563
        %1721 = vmatpush1.bf16.msra.mxu0 %v1562
        %1722 = vmatprep.subr.bf16.mxu0 %v1557
        %1723 = vmatpush1.bf16.msra.mxu0 %v1556
        %1724 = vmatprep.subr.bf16.mxu0 %v1551
        %1725 = vmatpush1.bf16.msra.mxu0 %v1550
        %1726 = vmatprep.subr.bf16.mxu0 %v1545
        %1727 = vmatpush1.bf16.msra.mxu0 %v1544
        %1728 = vmatprep.subr.bf16.mxu0 %v1539
        %1729 = vmatpush1.bf16.msra.mxu0 %v1538
        %1730 = vmatprep.subr.bf16.mxu0 %v1533
        %1731 = vmatpush1.bf16.msra.mxu0 %v1532
        %1732 = vmatprep.subr.bf16.mxu0 %v1527
        %1733 = vmatpush1.bf16.msra.mxu0 %v1526
        %1734 = vmatprep.subr.bf16.mxu0 %v1617
        %1735 = vmatpush2.bf16.msra.mxu0 %v1616
        %1736 = vmatprep.subr.bf16.mxu0 %v1611
        %1737 = vmatpush2.bf16.msra.mxu0 %v1610
        %1738 = vmatprep.subr.bf16.mxu0 %v1605
        %1739 = vmatpush2.bf16.msra.mxu0 %v1604
        %1740 = vmatprep.subr.bf16.mxu0 %v1599
        %1741 = vmatpush2.bf16.msra.mxu0 %v1598
        %1742 = vmatprep.subr.bf16.mxu0 %v1593
        %1743 = vmatpush2.bf16.msra.mxu0 %v1592
        %1744 = vmatprep.subr.bf16.mxu0 %v1587
        %1745 = vmatpush2.bf16.msra.mxu0 %v1586
        %1746 = vmatprep.subr.bf16.mxu0 %v1581
        %1747 = vmatpush2.bf16.msra.mxu0 %v1580
        %1748 = vmatprep.subr.bf16.mxu0 %v1575
        %1749 = vmatpush2.bf16.msra.mxu0 %v1574
        %1750 = vmatprep.mubr.bf16.mxu0 %v1109
        %1751 = vmatmul.mubr.bf16.gmra.mxu0 %v1108
        %v1752 = vpop.f32.mrf.mxu0
        %v1753 = vadd.f32 %v1211, %v1752
        %v1754 = vpop.f32.mrf.mxu0
        %v1755 = vadd.f32 %v1215, %v1754
        %v1756 = vpop.f32.mrf.mxu0
        %v1757 = vadd.f32 %v1211, %v1756
        %v1758 = vpop.f32.mrf.mxu0
        %v1759 = vadd.f32 %v1215, %v1758
        %1760 = vdwg.mxu0
        %1761 = vmatprep.subr.bf16.mxu0 %v1571
        %1762 = vmatpush1.bf16.msra.mxu0 %v1570
        %1763 = vmatprep.subr.bf16.mxu0 %v1565
        %1764 = vmatpush1.bf16.msra.mxu0 %v1564
        %1765 = vmatprep.subr.bf16.mxu0 %v1559
        %1766 = vmatpush1.bf16.msra.mxu0 %v1558
        %1767 = vmatprep.subr.bf16.mxu0 %v1553
        %1768 = vmatpush1.bf16.msra.mxu0 %v1552
        %1769 = vmatprep.subr.bf16.mxu0 %v1547
        %1770 = vmatpush1.bf16.msra.mxu0 %v1546
        %1771 = vmatprep.subr.bf16.mxu0 %v1541
        %1772 = vmatpush1.bf16.msra.mxu0 %v1540
        %1773 = vmatprep.subr.bf16.mxu0 %v1535
        %1774 = vmatpush1.bf16.msra.mxu0 %v1534
        %1775 = vmatprep.subr.bf16.mxu0 %v1529
        %1776 = vmatpush1.bf16.msra.mxu0 %v1528
        %1777 = vmatprep.subr.bf16.mxu0 %v1619
        %1778 = vmatpush2.bf16.msra.mxu0 %v1618
        %1779 = vmatprep.subr.bf16.mxu0 %v1613
        %1780 = vmatpush2.bf16.msra.mxu0 %v1612
        %1781 = vmatprep.subr.bf16.mxu0 %v1607
        %1782 = vmatpush2.bf16.msra.mxu0 %v1606
        %1783 = vmatprep.subr.bf16.mxu0 %v1601
        %1784 = vmatpush2.bf16.msra.mxu0 %v1600
        %1785 = vmatprep.subr.bf16.mxu0 %v1595
        %1786 = vmatpush2.bf16.msra.mxu0 %v1594
        %1787 = vmatprep.subr.bf16.mxu0 %v1589
        %1788 = vmatpush2.bf16.msra.mxu0 %v1588
        %1789 = vmatprep.subr.bf16.mxu0 %v1583
        %1790 = vmatpush2.bf16.msra.mxu0 %v1582
        %1791 = vmatprep.subr.bf16.mxu0 %v1577
        %1792 = vmatpush2.bf16.msra.mxu0 %v1576
        %1793 = vmatprep.mubr.bf16.mxu0 %v1109
        %1794 = vmatmul.mubr.bf16.gmra.mxu0 %v1108
        %v1795 = vpop.f32.mrf.mxu0
        %v1796 = vadd.f32 %v1219, %v1795
        %v1797 = vpop.f32.mrf.mxu0
        %v1798 = vadd.f32 %v1223, %v1797
        %v1799 = vpop.f32.mrf.mxu0
        %v1800 = vadd.f32 %v1219, %v1799
        %v1801 = vpop.f32.mrf.mxu0
        %v1802 = vadd.f32 %v1223, %v1801
        %1803 = vdwg.mxu0
        %1804 = vmatprep.subr.bf16.mxu0 %v1573
        %1805 = vmatpush1.bf16.msra.mxu0 %v1572
        %1806 = vmatprep.subr.bf16.mxu0 %v1567
        %1807 = vmatpush1.bf16.msra.mxu0 %v1566
        %1808 = vmatprep.subr.bf16.mxu0 %v1561
        %1809 = vmatpush1.bf16.msra.mxu0 %v1560
        %1810 = vmatprep.subr.bf16.mxu0 %v1555
        %1811 = vmatpush1.bf16.msra.mxu0 %v1554
        %1812 = vmatprep.subr.bf16.mxu0 %v1549
        %1813 = vmatpush1.bf16.msra.mxu0 %v1548
        %1814 = vmatprep.subr.bf16.mxu0 %v1543
        %1815 = vmatpush1.bf16.msra.mxu0 %v1542
        %1816 = vmatprep.subr.bf16.mxu0 %v1537
        %1817 = vmatpush1.bf16.msra.mxu0 %v1536
        %1818 = vmatprep.subr.bf16.mxu0 %v1531
        %1819 = vmatpush1.bf16.msra.mxu0 %v1530
        %1820 = vmatprep.subr.bf16.mxu0 %v1621
        %1821 = vmatpush2.bf16.msra.mxu0 %v1620
        %1822 = vmatprep.subr.bf16.mxu0 %v1615
        %1823 = vmatpush2.bf16.msra.mxu0 %v1614
        %1824 = vmatprep.subr.bf16.mxu0 %v1609
        %1825 = vmatpush2.bf16.msra.mxu0 %v1608
        %1826 = vmatprep.subr.bf16.mxu0 %v1603
        %1827 = vmatpush2.bf16.msra.mxu0 %v1602
        %1828 = vmatprep.subr.bf16.mxu0 %v1597
        %1829 = vmatpush2.bf16.msra.mxu0 %v1596
        %1830 = vmatprep.subr.bf16.mxu0 %v1591
        %1831 = vmatpush2.bf16.msra.mxu0 %v1590
        %1832 = vmatprep.subr.bf16.mxu0 %v1585
        %1833 = vmatpush2.bf16.msra.mxu0 %v1584
        %1834 = vmatprep.subr.bf16.mxu0 %v1579
        %1835 = vmatpush2.bf16.msra.mxu0 %v1578
        %1836 = vmatprep.mubr.bf16.mxu0 %v1109
        %1837 = vmatmul.mubr.bf16.gmra.mxu0 %v1108
        %v1838 = vpop.f32.mrf.mxu0
        %v1839 = vadd.f32 %v1227, %v1838
        %v1840 = vpop.f32.mrf.mxu0
        %v1841 = vadd.f32 %v1231, %v1840
        %v1842 = vpop.f32.mrf.mxu0
        %v1843 = vadd.f32 %v1227, %v1842
        %v1844 = vpop.f32.mrf.mxu0
        %v1845 = vadd.f32 %v1231, %v1844
        %1846 = vdwg.mxu0
        %v1847 = vld [vmem:[#allocation3] sm:$0x1]
        %v1848 = vld [vmem:[#allocation3 + $0x1] sm:$0x1]
        %v1849 = vpack.c.bf16 %v1753, %v1753
        %v1850 = vpack.c.bf16 %v1757, %v1757
        %v1851 = vpack.c.bf16 %v1796, %v1796
        %v1852 = vpack.c.bf16 %v1800, %v1800
        %v1853 = vpack.c.bf16 %v1839, %v1839
        %v1854 = vpack.c.bf16 %v1843, %v1843
        %v1857 = vlaneseq
        %v1858 = vshrl.u32 %v1857, 7
        %v1859 = vsub.s32 0, %v1858
        %v1860 = vrot.slane %v1847, %v1859
        %v1861 = vlaneseq
        %v1862 = vshrl.u32 %v1861, 7
        %v1863 = vsub.s32 0, %v1862
        %v1864 = vrot.slane %v1848, %v1863
        %1867 = vmatprep.subr.bf16.mxu0 0
        %1868 = vmatpush1.bf16.xpose.msra.mxu0 0
        %1869 = vmatprep.subr.bf16.mxu0 0
        %1870 = vmatpush1.bf16.xpose.msra.mxu0 0
        %1871 = vmatprep.subr.bf16.mxu0 0
        %1872 = vmatpush1.bf16.xpose.msra.mxu0 0
        %1873 = vmatprep.subr.bf16.mxu0 0
        %1874 = vmatpush1.bf16.xpose.msra.mxu0 0
        %1875 = vmatprep.subr.bf16.mxu0 0
        %1876 = vmatpush1.bf16.xpose.msra.mxu0 0
        %1877 = vmatprep.subr.bf16.mxu0 0
        %1878 = vmatpush1.bf16.xpose.msra.mxu0 0
        %1879 = vmatprep.subr.bf16.mxu0 0
        %1880 = vmatpush1.bf16.xpose.msra.mxu0 0
        %1881 = vmatprep.subr.bf16.mxu0 0
        %1882 = vmatpush1.bf16.xpose.msra.mxu0 %v1851
        %1883 = vmatprep.subr.bf16.mxu0 0
        %1884 = vmatpush2.bf16.xpose.msra.mxu0 0
        %1885 = vmatprep.subr.bf16.mxu0 0
        %1886 = vmatpush2.bf16.xpose.msra.mxu0 0
        %1887 = vmatprep.subr.bf16.mxu0 0
        %1888 = vmatpush2.bf16.xpose.msra.mxu0 0
        %1889 = vmatprep.subr.bf16.mxu0 0
        %1890 = vmatpush2.bf16.xpose.msra.mxu0 0
        %1891 = vmatprep.subr.bf16.mxu0 0
        %1892 = vmatpush2.bf16.xpose.msra.mxu0 0
        %1893 = vmatprep.subr.bf16.mxu0 0
        %1894 = vmatpush2.bf16.xpose.msra.mxu0 0
        %1895 = vmatprep.subr.bf16.mxu0 0
        %1896 = vmatpush2.bf16.xpose.msra.mxu0 0
        %1897 = vmatprep.subr.bf16.mxu0 0
        %1898 = vmatpush2.bf16.xpose.msra.mxu0 0
        %1899 = vmatprep.mubr.bf16.mxu0 0
        %1900 = vmatmul.mubr.bf16.gmra.mxu0 %v1849
        %v1901 = vpop.f32.mrf.mxu0
        %v1902 = vadd.f32 %v1860, %v1901
        %v1903 = vpop.f32.mrf.mxu0
        %v1904 = vpop.f32.mrf.mxu0
        %v1905 = vpop.f32.mrf.mxu0
        %1906 = vdwg.mxu0
        %1907 = vmatprep.subr.bf16.mxu0 0
        %1908 = vmatpush1.bf16.xpose.msra.mxu0 0
        %1909 = vmatprep.subr.bf16.mxu0 0
        %1910 = vmatpush1.bf16.xpose.msra.mxu0 0
        %1911 = vmatprep.subr.bf16.mxu0 0
        %1912 = vmatpush1.bf16.xpose.msra.mxu0 0
        %1913 = vmatprep.subr.bf16.mxu0 0
        %1914 = vmatpush1.bf16.xpose.msra.mxu0 0
        %1915 = vmatprep.subr.bf16.mxu0 0
        %1916 = vmatpush1.bf16.xpose.msra.mxu0 0
        %1917 = vmatprep.subr.bf16.mxu0 0
        %1918 = vmatpush1.bf16.xpose.msra.mxu0 0
        %1919 = vmatprep.subr.bf16.mxu0 0
        %1920 = vmatpush1.bf16.xpose.msra.mxu0 0
        %1921 = vmatprep.subr.bf16.mxu0 0
        %1922 = vmatpush1.bf16.xpose.msra.mxu0 %v1852
        %1923 = vmatprep.subr.bf16.mxu0 0
        %1924 = vmatpush2.bf16.xpose.msra.mxu0 0
        %1925 = vmatprep.subr.bf16.mxu0 0
        %1926 = vmatpush2.bf16.xpose.msra.mxu0 0
        %1927 = vmatprep.subr.bf16.mxu0 0
        %1928 = vmatpush2.bf16.xpose.msra.mxu0 0
        %1929 = vmatprep.subr.bf16.mxu0 0
        %1930 = vmatpush2.bf16.xpose.msra.mxu0 0
        %1931 = vmatprep.subr.bf16.mxu0 0
        %1932 = vmatpush2.bf16.xpose.msra.mxu0 0
        %1933 = vmatprep.subr.bf16.mxu0 0
        %1934 = vmatpush2.bf16.xpose.msra.mxu0 0
        %1935 = vmatprep.subr.bf16.mxu0 0
        %1936 = vmatpush2.bf16.xpose.msra.mxu0 0
        %1937 = vmatprep.subr.bf16.mxu0 0
        %1938 = vmatpush2.bf16.xpose.msra.mxu0 0
        %1939 = vmatprep.mubr.bf16.mxu0 0
        %1940 = vmatmul.mubr.bf16.gmra.mxu0 %v1850
        %v1941 = vpop.f32.mrf.mxu0
        %v1942 = vadd.f32 %v1864, %v1941
        %v1943 = vpop.f32.mrf.mxu0
        %v1944 = vpop.f32.mrf.mxu0
        %v1945 = vpop.f32.mrf.mxu0
        %1946 = vdwg.mxu0
        %vm1947 = vcmask 64512
        %v1948 = vsel %vm1947, %v1902, -inf
        %1949 = vmax.xlane.f32.xlu0 %v1948
        %v1950 = vpop.xlane.xlu0 %1949
        %v1951 = vsel %vm1947, %v1942, -inf
        %1952 = vmax.xlane.f32.xlu0 %v1951
        %v1953 = vpop.xlane.xlu0 %1952
        %v1954 = vsub.f32 %v1902, %v1950
        %v1955 = vsub.f32 %v1942, %v1953
        %v1956 = vmul.f32 %v1954, 1.442695
        %v1957 = vpow.pop %v1956
        %v1958 = vmul.f32 %v1955, 1.442695
        %v1959 = vpow.pop %v1958
        %v1960 = vsel %vm1947, %v1957, 0.0
        %1961 = vadd.xlane.f32.xlu0 %v1960
        %v1962 = vpop.xlane.xlu0 %1961
        %v1963 = vsel %vm1947, %v1959, 0.0
        %1964 = vadd.xlane.f32.xlu0 %v1963
        %v1965 = vpop.xlane.xlu0 %1964
        %v1966 = vrcp.pop %v1962
        %v1967 = vmul.f32 %v1957, %v1966
        %v1968 = vrcp.pop %v1965
        %v1969 = vmul.f32 %v1959, %v1968
        %v1970 = vpack.c.bf16 %v1967, %v1967
        %v1971 = vpack.c.bf16 %v1969, %v1969
        %v1973 = vsel %vm1947, %v1970, 0
        %vm1975 = vcmask 1043456
        %v1977 = vsel %vm1975, %v1853, 0
        %1979 = vmatprep.subr.bf16.mxu0 0
        %1980 = vmatpush1.bf16.msra.mxu0 0
        %1981 = vmatprep.subr.bf16.mxu0 0
        %1982 = vmatpush1.bf16.msra.mxu0 0
        %1983 = vmatprep.subr.bf16.mxu0 0
        %1984 = vmatpush1.bf16.msra.mxu0 0
        %1985 = vmatprep.subr.bf16.mxu0 0
        %1986 = vmatpush1.bf16.msra.mxu0 0
        %1987 = vmatprep.subr.bf16.mxu0 0
        %1988 = vmatpush1.bf16.msra.mxu0 0
        %1989 = vmatprep.subr.bf16.mxu0 0
        %1990 = vmatpush1.bf16.msra.mxu0 0
        %1991 = vmatprep.subr.bf16.mxu0 0
        %1992 = vmatpush1.bf16.msra.mxu0 0
        %1993 = vmatprep.subr.bf16.mxu0 0
        %1994 = vmatpush1.bf16.msra.mxu0 %v1977
        %1995 = vmatprep.subr.bf16.mxu0 0
        %1996 = vmatpush2.bf16.msra.mxu0 0
        %1997 = vmatprep.subr.bf16.mxu0 0
        %1998 = vmatpush2.bf16.msra.mxu0 0
        %1999 = vmatprep.subr.bf16.mxu0 0
        %2000 = vmatpush2.bf16.msra.mxu0 0
        %2001 = vmatprep.subr.bf16.mxu0 0
        %2002 = vmatpush2.bf16.msra.mxu0 0
        %2003 = vmatprep.subr.bf16.mxu0 0
        %2004 = vmatpush2.bf16.msra.mxu0 0
        %2005 = vmatprep.subr.bf16.mxu0 0
        %2006 = vmatpush2.bf16.msra.mxu0 0
        %2007 = vmatprep.subr.bf16.mxu0 0
        %2008 = vmatpush2.bf16.msra.mxu0 0
        %2009 = vmatprep.subr.bf16.mxu0 0
        %2010 = vmatpush2.bf16.msra.mxu0 0
        %2011 = vmatprep.mubr.bf16.mxu0 0
        %2012 = vmatmul.mubr.bf16.gmra.mxu0 %v1973
        %v2013 = vpop.f32.mrf.mxu0
        %v2014 = vadd.f32 0.0, %v2013
        %v2015 = vpop.f32.mrf.mxu0
        %v2016 = vpop.f32.mrf.mxu0
        %v2017 = vpop.f32.mrf.mxu0
        %2018 = vdwg.mxu0
        %v2020 = vsel %vm1947, %v1971, 0
        %v2023 = vsel %vm1975, %v1854, 0
        %2025 = vmatprep.subr.bf16.mxu0 0
        %2026 = vmatpush1.bf16.msra.mxu0 0
        %2027 = vmatprep.subr.bf16.mxu0 0
        %2028 = vmatpush1.bf16.msra.mxu0 0
        %2029 = vmatprep.subr.bf16.mxu0 0
        %2030 = vmatpush1.bf16.msra.mxu0 0
        %2031 = vmatprep.subr.bf16.mxu0 0
        %2032 = vmatpush1.bf16.msra.mxu0 0
        %2033 = vmatprep.subr.bf16.mxu0 0
        %2034 = vmatpush1.bf16.msra.mxu0 0
        %2035 = vmatprep.subr.bf16.mxu0 0
        %2036 = vmatpush1.bf16.msra.mxu0 0
        %2037 = vmatprep.subr.bf16.mxu0 0
        %2038 = vmatpush1.bf16.msra.mxu0 0
        %2039 = vmatprep.subr.bf16.mxu0 0
        %2040 = vmatpush1.bf16.msra.mxu0 %v2023
        %2041 = vmatprep.subr.bf16.mxu0 0
        %2042 = vmatpush2.bf16.msra.mxu0 0
        %2043 = vmatprep.subr.bf16.mxu0 0
        %2044 = vmatpush2.bf16.msra.mxu0 0
        %2045 = vmatprep.subr.bf16.mxu0 0
        %2046 = vmatpush2.bf16.msra.mxu0 0
        %2047 = vmatprep.subr.bf16.mxu0 0
        %2048 = vmatpush2.bf16.msra.mxu0 0
        %2049 = vmatprep.subr.bf16.mxu0 0
        %2050 = vmatpush2.bf16.msra.mxu0 0
        %2051 = vmatprep.subr.bf16.mxu0 0
        %2052 = vmatpush2.bf16.msra.mxu0 0
        %2053 = vmatprep.subr.bf16.mxu0 0
        %2054 = vmatpush2.bf16.msra.mxu0 0
        %2055 = vmatprep.subr.bf16.mxu0 0
        %2056 = vmatpush2.bf16.msra.mxu0 0
        %2057 = vmatprep.mubr.bf16.mxu0 0
        %2058 = vmatmul.mubr.bf16.gmra.mxu0 %v2020
        %v2059 = vpop.f32.mrf.mxu0
        %v2060 = vadd.f32 0.0, %v2059
        %v2061 = vpop.f32.mrf.mxu0
        %v2062 = vpop.f32.mrf.mxu0
        %v2063 = vpop.f32.mrf.mxu0
        %2064 = vdwg.mxu0
        %v2065 = vpack.c.bf16 %v1755, %v1755
        %v2066 = vpack.c.bf16 %v1759, %v1759
        %v2067 = vpack.c.bf16 %v1798, %v1798
        %v2068 = vpack.c.bf16 %v1802, %v1802
        %v2069 = vpack.c.bf16 %v1841, %v1841
        %v2070 = vpack.c.bf16 %v1845, %v1845
        %2071 = vmatprep.subr.bf16.mxu0 0
        %2072 = vmatpush1.bf16.xpose.msra.mxu0 0
        %2073 = vmatprep.subr.bf16.mxu0 0
        %2074 = vmatpush1.bf16.xpose.msra.mxu0 0
        %2075 = vmatprep.subr.bf16.mxu0 0
        %2076 = vmatpush1.bf16.xpose.msra.mxu0 0
        %2077 = vmatprep.subr.bf16.mxu0 0
        %2078 = vmatpush1.bf16.xpose.msra.mxu0 0
        %2079 = vmatprep.subr.bf16.mxu0 0
        %2080 = vmatpush1.bf16.xpose.msra.mxu0 0
        %2081 = vmatprep.subr.bf16.mxu0 0
        %2082 = vmatpush1.bf16.xpose.msra.mxu0 0
        %2083 = vmatprep.subr.bf16.mxu0 0
        %2084 = vmatpush1.bf16.xpose.msra.mxu0 0
        %2085 = vmatprep.subr.bf16.mxu0 0
        %2086 = vmatpush1.bf16.xpose.msra.mxu0 %v2067
        %2087 = vmatprep.subr.bf16.mxu0 0
        %2088 = vmatpush2.bf16.xpose.msra.mxu0 0
        %2089 = vmatprep.subr.bf16.mxu0 0
        %2090 = vmatpush2.bf16.xpose.msra.mxu0 0
        %2091 = vmatprep.subr.bf16.mxu0 0
        %2092 = vmatpush2.bf16.xpose.msra.mxu0 0
        %2093 = vmatprep.subr.bf16.mxu0 0
        %2094 = vmatpush2.bf16.xpose.msra.mxu0 0
        %2095 = vmatprep.subr.bf16.mxu0 0
        %2096 = vmatpush2.bf16.xpose.msra.mxu0 0
        %2097 = vmatprep.subr.bf16.mxu0 0
        %2098 = vmatpush2.bf16.xpose.msra.mxu0 0
        %2099 = vmatprep.subr.bf16.mxu0 0
        %2100 = vmatpush2.bf16.xpose.msra.mxu0 0
        %2101 = vmatprep.subr.bf16.mxu0 0
        %2102 = vmatpush2.bf16.xpose.msra.mxu0 0
        %2103 = vmatprep.mubr.bf16.mxu0 0
        %2104 = vmatmul.mubr.bf16.gmra.mxu0 %v2065
        %v2105 = vpop.f32.mrf.mxu0
        %v2106 = vadd.f32 %v1860, %v2105
        %v2107 = vpop.f32.mrf.mxu0
        %v2108 = vpop.f32.mrf.mxu0
        %v2109 = vpop.f32.mrf.mxu0
        %2110 = vdwg.mxu0
        %2111 = vmatprep.subr.bf16.mxu0 0
        %2112 = vmatpush1.bf16.xpose.msra.mxu0 0
        %2113 = vmatprep.subr.bf16.mxu0 0
        %2114 = vmatpush1.bf16.xpose.msra.mxu0 0
        %2115 = vmatprep.subr.bf16.mxu0 0
        %2116 = vmatpush1.bf16.xpose.msra.mxu0 0
        %2117 = vmatprep.subr.bf16.mxu0 0
        %2118 = vmatpush1.bf16.xpose.msra.mxu0 0
        %2119 = vmatprep.subr.bf16.mxu0 0
        %2120 = vmatpush1.bf16.xpose.msra.mxu0 0
        %2121 = vmatprep.subr.bf16.mxu0 0
        %2122 = vmatpush1.bf16.xpose.msra.mxu0 0
        %2123 = vmatprep.subr.bf16.mxu0 0
        %2124 = vmatpush1.bf16.xpose.msra.mxu0 0
        %2125 = vmatprep.subr.bf16.mxu0 0
        %2126 = vmatpush1.bf16.xpose.msra.mxu0 %v2068
        %2127 = vmatprep.subr.bf16.mxu0 0
        %2128 = vmatpush2.bf16.xpose.msra.mxu0 0
        %2129 = vmatprep.subr.bf16.mxu0 0
        %2130 = vmatpush2.bf16.xpose.msra.mxu0 0
        %2131 = vmatprep.subr.bf16.mxu0 0
        %2132 = vmatpush2.bf16.xpose.msra.mxu0 0
        %2133 = vmatprep.subr.bf16.mxu0 0
        %2134 = vmatpush2.bf16.xpose.msra.mxu0 0
        %2135 = vmatprep.subr.bf16.mxu0 0
        %2136 = vmatpush2.bf16.xpose.msra.mxu0 0
        %2137 = vmatprep.subr.bf16.mxu0 0
        %2138 = vmatpush2.bf16.xpose.msra.mxu0 0
        %2139 = vmatprep.subr.bf16.mxu0 0
        %2140 = vmatpush2.bf16.xpose.msra.mxu0 0
        %2141 = vmatprep.subr.bf16.mxu0 0
        %2142 = vmatpush2.bf16.xpose.msra.mxu0 0
        %2143 = vmatprep.mubr.bf16.mxu0 0
        %2144 = vmatmul.mubr.bf16.gmra.mxu0 %v2066
        %v2145 = vpop.f32.mrf.mxu0
        %v2146 = vadd.f32 %v1864, %v2145
        %v2147 = vpop.f32.mrf.mxu0
        %v2148 = vpop.f32.mrf.mxu0
        %v2149 = vpop.f32.mrf.mxu0
        %2150 = vdwg.mxu0
        %v2151 = vsel %vm1947, %v2106, -inf
        %2152 = vmax.xlane.f32.xlu0 %v2151
        %v2153 = vpop.xlane.xlu0 %2152
        %v2154 = vsel %vm1947, %v2146, -inf
        %2155 = vmax.xlane.f32.xlu0 %v2154
        %v2156 = vpop.xlane.xlu0 %2155
        %v2157 = vsub.f32 %v2106, %v2153
        %v2158 = vsub.f32 %v2146, %v2156
        %v2159 = vmul.f32 %v2157, 1.442695
        %v2160 = vpow.pop %v2159
        %v2161 = vmul.f32 %v2158, 1.442695
        %v2162 = vpow.pop %v2161
        %v2163 = vsel %vm1947, %v2160, 0.0
        %2164 = vadd.xlane.f32.xlu0 %v2163
        %v2165 = vpop.xlane.xlu0 %2164
        %v2166 = vsel %vm1947, %v2162, 0.0
        %2167 = vadd.xlane.f32.xlu0 %v2166
        %v2168 = vpop.xlane.xlu0 %2167
        %v2169 = vrcp.pop %v2165
        %v2170 = vmul.f32 %v2160, %v2169
        %v2171 = vrcp.pop %v2168
        %v2172 = vmul.f32 %v2162, %v2171
        %v2173 = vpack.c.bf16 %v2170, %v2170
        %v2174 = vpack.c.bf16 %v2172, %v2172
        %v2176 = vsel %vm1947, %v2173, 0
        %v2179 = vsel %vm1975, %v2069, 0
        %2181 = vmatprep.subr.bf16.mxu0 0
        %2182 = vmatpush1.bf16.msra.mxu0 0
        %2183 = vmatprep.subr.bf16.mxu0 0
        %2184 = vmatpush1.bf16.msra.mxu0 0
        %2185 = vmatprep.subr.bf16.mxu0 0
        %2186 = vmatpush1.bf16.msra.mxu0 0
        %2187 = vmatprep.subr.bf16.mxu0 0
        %2188 = vmatpush1.bf16.msra.mxu0 0
        %2189 = vmatprep.subr.bf16.mxu0 0
        %2190 = vmatpush1.bf16.msra.mxu0 0
        %2191 = vmatprep.subr.bf16.mxu0 0
        %2192 = vmatpush1.bf16.msra.mxu0 0
        %2193 = vmatprep.subr.bf16.mxu0 0
        %2194 = vmatpush1.bf16.msra.mxu0 0
        %2195 = vmatprep.subr.bf16.mxu0 0
        %2196 = vmatpush1.bf16.msra.mxu0 %v2179
        %2197 = vmatprep.subr.bf16.mxu0 0
        %2198 = vmatpush2.bf16.msra.mxu0 0
        %2199 = vmatprep.subr.bf16.mxu0 0
        %2200 = vmatpush2.bf16.msra.mxu0 0
        %2201 = vmatprep.subr.bf16.mxu0 0
        %2202 = vmatpush2.bf16.msra.mxu0 0
        %2203 = vmatprep.subr.bf16.mxu0 0
        %2204 = vmatpush2.bf16.msra.mxu0 0
        %2205 = vmatprep.subr.bf16.mxu0 0
        %2206 = vmatpush2.bf16.msra.mxu0 0
        %2207 = vmatprep.subr.bf16.mxu0 0
        %2208 = vmatpush2.bf16.msra.mxu0 0
        %2209 = vmatprep.subr.bf16.mxu0 0
        %2210 = vmatpush2.bf16.msra.mxu0 0
        %2211 = vmatprep.subr.bf16.mxu0 0
        %2212 = vmatpush2.bf16.msra.mxu0 0
        %2213 = vmatprep.mubr.bf16.mxu0 0
        %2214 = vmatmul.mubr.bf16.gmra.mxu0 %v2176
        %v2215 = vpop.f32.mrf.mxu0
        %v2216 = vadd.f32 0.0, %v2215
        %v2217 = vpop.f32.mrf.mxu0
        %v2218 = vpop.f32.mrf.mxu0
        %v2219 = vpop.f32.mrf.mxu0
        %2220 = vdwg.mxu0
        %v2222 = vsel %vm1947, %v2174, 0
        %v2225 = vsel %vm1975, %v2070, 0
        %2227 = vmatprep.subr.bf16.mxu0 0
        %2228 = vmatpush1.bf16.msra.mxu0 0
        %2229 = vmatprep.subr.bf16.mxu0 0
        %2230 = vmatpush1.bf16.msra.mxu0 0
        %2231 = vmatprep.subr.bf16.mxu0 0
        %2232 = vmatpush1.bf16.msra.mxu0 0
        %2233 = vmatprep.subr.bf16.mxu0 0
        %2234 = vmatpush1.bf16.msra.mxu0 0
        %2235 = vmatprep.subr.bf16.mxu0 0
        %2236 = vmatpush1.bf16.msra.mxu0 0
        %2237 = vmatprep.subr.bf16.mxu0 0
        %2238 = vmatpush1.bf16.msra.mxu0 0
        %2239 = vmatprep.subr.bf16.mxu0 0
        %2240 = vmatpush1.bf16.msra.mxu0 0
        %2241 = vmatprep.subr.bf16.mxu0 0
        %2242 = vmatpush1.bf16.msra.mxu0 %v2225
        %2243 = vmatprep.subr.bf16.mxu0 0
        %2244 = vmatpush2.bf16.msra.mxu0 0
        %2245 = vmatprep.subr.bf16.mxu0 0
        %2246 = vmatpush2.bf16.msra.mxu0 0
        %2247 = vmatprep.subr.bf16.mxu0 0
        %2248 = vmatpush2.bf16.msra.mxu0 0
        %2249 = vmatprep.subr.bf16.mxu0 0
        %2250 = vmatpush2.bf16.msra.mxu0 0
        %2251 = vmatprep.subr.bf16.mxu0 0
        %2252 = vmatpush2.bf16.msra.mxu0 0
        %2253 = vmatprep.subr.bf16.mxu0 0
        %2254 = vmatpush2.bf16.msra.mxu0 0
        %2255 = vmatprep.subr.bf16.mxu0 0
        %2256 = vmatpush2.bf16.msra.mxu0 0
        %2257 = vmatprep.subr.bf16.mxu0 0
        %2258 = vmatpush2.bf16.msra.mxu0 0
        %2259 = vmatprep.mubr.bf16.mxu0 0
        %2260 = vmatmul.mubr.bf16.gmra.mxu0 %v2222
        %v2261 = vpop.f32.mrf.mxu0
        %v2262 = vadd.f32 0.0, %v2261
        %v2263 = vpop.f32.mrf.mxu0
        %v2264 = vpop.f32.mrf.mxu0
        %v2265 = vpop.f32.mrf.mxu0
        %2266 = vdwg.mxu0
        %v2267 = vpack.c.bf16 %v2060, %v2014
        %v2268 = vpack.c.bf16 %v2262, %v2216
        %v2269 = vld [vmem:[%s756] sm:$0xff]
        %v2270 = vld [vmem:[%s756 + $0x8] sm:$0xff]
        %v2271 = vld [vmem:[%s756 + $0x10] sm:$0xff]
        %v2272 = vld [vmem:[%s756 + $0x18] sm:$0xff]
        %v2273 = vld [vmem:[%s756 + $0x20] sm:$0xff]
        %v2274 = vld [vmem:[%s756 + $0x28] sm:$0xff]
        %v2275 = vld [vmem:[%s756 + $0x30] sm:$0xff]
        %v2276 = vld [vmem:[%s756 + $0x38] sm:$0xff]
        %v2277 = vld [vmem:[%s756 + $0x40] sm:$0xff]
        %v2278 = vld [vmem:[%s756 + $0x48] sm:$0xff]
        %v2279 = vld [vmem:[%s756 + $0x50] sm:$0xff]
        %v2280 = vld [vmem:[%s756 + $0x58] sm:$0xff]
        %v2281 = vld [vmem:[%s756 + $0x60] sm:$0xff]
        %v2282 = vld [vmem:[%s756 + $0x68] sm:$0xff]
        %v2283 = vld [vmem:[%s756 + $0x70] sm:$0xff]
        %v2284 = vld [vmem:[%s756 + $0x78] sm:$0xff]
        %v2285 = vld [vmem:[%s756 + $0x80] sm:$0xff]
        %v2286 = vld [vmem:[%s756 + $0x88] sm:$0xff]
        %v2287 = vld [vmem:[%s756 + $0x90] sm:$0xff]
        %v2288 = vld [vmem:[%s756 + $0x98] sm:$0xff]
        %v2289 = vld [vmem:[%s756 + $0xa0] sm:$0xff]
        %v2290 = vld [vmem:[%s756 + $0xa8] sm:$0xff]
        %v2291 = vld [vmem:[%s756 + $0xb0] sm:$0xff]
        %v2292 = vld [vmem:[%s756 + $0xb8] sm:$0xff]
        %v2293 = vld [vmem:[%s756 + $0xc0] sm:$0xff]
        %v2294 = vld [vmem:[%s756 + $0xc8] sm:$0xff]
        %v2295 = vld [vmem:[%s756 + $0xd0] sm:$0xff]
        %v2296 = vld [vmem:[%s756 + $0xd8] sm:$0xff]
        %v2297 = vld [vmem:[%s756 + $0xe0] sm:$0xff]
        %v2298 = vld [vmem:[%s756 + $0xe8] sm:$0xff]
        %v2299 = vld [vmem:[%s756 + $0xf0] sm:$0xff]
        %v2300 = vld [vmem:[%s756 + $0xf8] sm:$0xff]
        %v2301 = vld [vmem:[%s876] sm:$0x3]
        %v2303 = vlaneseq
        %v2304 = vshrl.u32 %v2303, 7
        %v2305 = vsub.s32 0, %v2304
        %v2306 = vrot.slane %v2301, %v2305
        %v2307 = vlaneseq
        %v2308 = vshrl.u32 %v2307, 7
        %v2309 = vsub.s32 1, %v2308
        %v2310 = vrot.slane %v2301, %v2309
        %v2345 = vunpack.c.l.b16 %v2269
        %v2346 = vunpack.c.h.b16 %v2269
        %v2347 = vunpack.c.l.b16 %v2270
        %v2348 = vunpack.c.h.b16 %v2270
        %v2349 = vunpack.c.l.b16 %v2271
        %v2350 = vunpack.c.h.b16 %v2271
        %v2351 = vunpack.c.l.b16 %v2272
        %v2352 = vunpack.c.h.b16 %v2272
        %v2353 = vunpack.c.l.b16 %v2273
        %v2354 = vunpack.c.h.b16 %v2273
        %v2355 = vunpack.c.l.b16 %v2274
        %v2356 = vunpack.c.h.b16 %v2274
        %v2357 = vunpack.c.l.b16 %v2275
        %v2358 = vunpack.c.h.b16 %v2275
        %v2359 = vunpack.c.l.b16 %v2276
        %v2360 = vunpack.c.h.b16 %v2276
        %v2361 = vunpack.c.l.b16 %v2277
        %v2362 = vunpack.c.h.b16 %v2277
        %v2363 = vunpack.c.l.b16 %v2278
        %v2364 = vunpack.c.h.b16 %v2278
        %v2365 = vunpack.c.l.b16 %v2279
        %v2366 = vunpack.c.h.b16 %v2279
        %v2367 = vunpack.c.l.b16 %v2280
        %v2368 = vunpack.c.h.b16 %v2280
        %v2369 = vunpack.c.l.b16 %v2281
        %v2370 = vunpack.c.h.b16 %v2281
        %v2371 = vunpack.c.l.b16 %v2282
        %v2372 = vunpack.c.h.b16 %v2282
        %v2373 = vunpack.c.l.b16 %v2283
        %v2374 = vunpack.c.h.b16 %v2283
        %v2375 = vunpack.c.l.b16 %v2284
        %v2376 = vunpack.c.h.b16 %v2284
        %v2377 = vunpack.c.l.b16 %v2285
        %v2378 = vunpack.c.h.b16 %v2285
        %v2379 = vunpack.c.l.b16 %v2286
        %v2380 = vunpack.c.h.b16 %v2286
        %v2381 = vunpack.c.l.b16 %v2287
        %v2382 = vunpack.c.h.b16 %v2287
        %v2383 = vunpack.c.l.b16 %v2288
        %v2384 = vunpack.c.h.b16 %v2288
        %v2385 = vunpack.c.l.b16 %v2289
        %v2386 = vunpack.c.h.b16 %v2289
        %v2387 = vunpack.c.l.b16 %v2290
        %v2388 = vunpack.c.h.b16 %v2290
        %v2389 = vunpack.c.l.b16 %v2291
        %v2390 = vunpack.c.h.b16 %v2291
        %v2391 = vunpack.c.l.b16 %v2292
        %v2392 = vunpack.c.h.b16 %v2292
        %v2393 = vunpack.c.l.b16 %v2293
        %v2394 = vunpack.c.h.b16 %v2293
        %v2395 = vunpack.c.l.b16 %v2294
        %v2396 = vunpack.c.h.b16 %v2294
        %v2397 = vunpack.c.l.b16 %v2295
        %v2398 = vunpack.c.h.b16 %v2295
        %v2399 = vunpack.c.l.b16 %v2296
        %v2400 = vunpack.c.h.b16 %v2296
        %v2401 = vunpack.c.l.b16 %v2297
        %v2402 = vunpack.c.h.b16 %v2297
        %v2403 = vunpack.c.l.b16 %v2298
        %v2404 = vunpack.c.h.b16 %v2298
        %v2405 = vunpack.c.l.b16 %v2299
        %v2406 = vunpack.c.h.b16 %v2299
        %v2407 = vunpack.c.l.b16 %v2300
        %v2408 = vunpack.c.h.b16 %v2300
        %v2409 = vpack.c.b16 %v2347, %v2345
        %v2410 = vpack.c.b16 %v2348, %v2346
        %v2411 = vpack.c.b16 %v2351, %v2349
        %v2412 = vpack.c.b16 %v2352, %v2350
        %v2413 = vpack.c.b16 %v2355, %v2353
        %v2414 = vpack.c.b16 %v2356, %v2354
        %v2415 = vpack.c.b16 %v2359, %v2357
        %v2416 = vpack.c.b16 %v2360, %v2358
        %v2417 = vpack.c.b16 %v2363, %v2361
        %v2418 = vpack.c.b16 %v2364, %v2362
        %v2419 = vpack.c.b16 %v2367, %v2365
        %v2420 = vpack.c.b16 %v2368, %v2366
        %v2421 = vpack.c.b16 %v2371, %v2369
        %v2422 = vpack.c.b16 %v2372, %v2370
        %v2423 = vpack.c.b16 %v2375, %v2373
        %v2424 = vpack.c.b16 %v2376, %v2374
        %v2425 = vpack.c.b16 %v2379, %v2377
        %v2426 = vpack.c.b16 %v2380, %v2378
        %v2427 = vpack.c.b16 %v2383, %v2381
        %v2428 = vpack.c.b16 %v2384, %v2382
        %v2429 = vpack.c.b16 %v2387, %v2385
        %v2430 = vpack.c.b16 %v2388, %v2386
        %v2431 = vpack.c.b16 %v2391, %v2389
        %v2432 = vpack.c.b16 %v2392, %v2390
        %v2433 = vpack.c.b16 %v2395, %v2393
        %v2434 = vpack.c.b16 %v2396, %v2394
        %v2435 = vpack.c.b16 %v2399, %v2397
        %v2436 = vpack.c.b16 %v2400, %v2398
        %v2437 = vpack.c.b16 %v2403, %v2401
        %v2438 = vpack.c.b16 %v2404, %v2402
        %v2439 = vpack.c.b16 %v2407, %v2405
        %v2440 = vpack.c.b16 %v2408, %v2406
        %2473 = vmatprep.subr.bf16.mxu0 %v2424
        %2474 = vmatpush1.bf16.msra.mxu0 %v2423
        %2475 = vmatprep.subr.bf16.mxu0 %v2422
        %2476 = vmatpush1.bf16.msra.mxu0 %v2421
        %2477 = vmatprep.subr.bf16.mxu0 %v2420
        %2478 = vmatpush1.bf16.msra.mxu0 %v2419
        %2479 = vmatprep.subr.bf16.mxu0 %v2418
        %2480 = vmatpush1.bf16.msra.mxu0 %v2417
        %2481 = vmatprep.subr.bf16.mxu0 %v2416
        %2482 = vmatpush1.bf16.msra.mxu0 %v2415
        %2483 = vmatprep.subr.bf16.mxu0 %v2414
        %2484 = vmatpush1.bf16.msra.mxu0 %v2413
        %2485 = vmatprep.subr.bf16.mxu0 %v2412
        %2486 = vmatpush1.bf16.msra.mxu0 %v2411
        %2487 = vmatprep.subr.bf16.mxu0 %v2410
        %2488 = vmatpush1.bf16.msra.mxu0 %v2409
        %2489 = vmatprep.subr.bf16.mxu0 %v2440
        %2490 = vmatpush2.bf16.msra.mxu0 %v2439
        %2491 = vmatprep.subr.bf16.mxu0 %v2438
        %2492 = vmatpush2.bf16.msra.mxu0 %v2437
        %2493 = vmatprep.subr.bf16.mxu0 %v2436
        %2494 = vmatpush2.bf16.msra.mxu0 %v2435
        %2495 = vmatprep.subr.bf16.mxu0 %v2434
        %2496 = vmatpush2.bf16.msra.mxu0 %v2433
        %2497 = vmatprep.subr.bf16.mxu0 %v2432
        %2498 = vmatpush2.bf16.msra.mxu0 %v2431
        %2499 = vmatprep.subr.bf16.mxu0 %v2430
        %2500 = vmatpush2.bf16.msra.mxu0 %v2429
        %2501 = vmatprep.subr.bf16.mxu0 %v2428
        %2502 = vmatpush2.bf16.msra.mxu0 %v2427
        %2503 = vmatprep.subr.bf16.mxu0 %v2426
        %2504 = vmatpush2.bf16.msra.mxu0 %v2425
        %2505 = vmatprep.mubr.bf16.mxu0 %v2268
        %2506 = vmatmul.mubr.bf16.gmra.mxu0 %v2267
        %v2507 = vpop.f32.mrf.mxu0
        %v2508 = vadd.f32 %v2306, %v2507
        %v2509 = vpop.f32.mrf.mxu0
        %v2510 = vadd.f32 %v2310, %v2509
        %v2511 = vpop.f32.mrf.mxu0
        %v2512 = vadd.f32 %v2306, %v2511
        %v2513 = vpop.f32.mrf.mxu0
        %v2514 = vadd.f32 %v2310, %v2513
        %2515 = vdwg.mxu0
        %v2516 = vadd.f32 %v1104, %v2508
        %v2517 = vadd.f32 %v1105, %v2510
        %v2518 = vadd.f32 %v1106, %v2512
        %v2519 = vadd.f32 %v1107, %v2514
        %v2520 = vld [vmem:[%s880] sm:$0x3]
        %v2521 = vld [vmem:[%s884] sm:$0x3]
        %v2522 = vadd.f32 %v2516, %v2517
        %2523 = vadd.xlane.f32.xlu0 %v2522
        %v2524 = vpop.xlane.xlu0 %2523
        %v2525 = vadd.f32 %v2518, %v2519
        %2526 = vadd.xlane.f32.xlu0 %v2525
        %v2527 = vpop.xlane.xlu0 %2526
        %v2528 = vrcp.pop 256.0
        %v2529 = vmul.f32 %v2524, %v2528
        %v2530 = vmul.f32 %v2527, %v2528
        %v2531 = vsub.f32 %v2516, %v2529
        %v2532 = vsub.f32 %v2517, %v2529
        %v2533 = vsub.f32 %v2518, %v2530
        %v2534 = vsub.f32 %v2519, %v2530
        %v2535 = vmul.f32 %v2531, %v2531
        %v2536 = vmul.f32 %v2532, %v2532
        %v2537 = vmul.f32 %v2533, %v2533
        %v2538 = vmul.f32 %v2534, %v2534
        %v2539 = vadd.f32 %v2535, %v2536
        %2540 = vadd.xlane.f32.xlu0 %v2539
        %v2541 = vpop.xlane.xlu0 %2540
        %v2542 = vadd.f32 %v2537, %v2538
        %2543 = vadd.xlane.f32.xlu0 %v2542
        %v2544 = vpop.xlane.xlu0 %2543
        %v2545 = vmul.f32 %v2541, %v2528
        %v2546 = vmul.f32 %v2544, %v2528
        %v2547 = vadd.f32 %v2545, 1e-12
        %v2548 = vadd.f32 %v2546, 1e-12
        %v2549 = vrsqrt.pop %v2547
        %v2550 = vrsqrt.pop %v2548
        %v2551 = vmul.f32 %v2531, %v2549
        %v2552 = vmul.f32 %v2532, %v2549
        %v2553 = vmul.f32 %v2533, %v2550
        %v2554 = vmul.f32 %v2534, %v2550
        %v2556 = vlaneseq
        %v2557 = vshrl.u32 %v2556, 7
        %v2558 = vsub.s32 0, %v2557
        %v2559 = vrot.slane %v2520, %v2558
        %v2560 = vlaneseq
        %v2561 = vshrl.u32 %v2560, 7
        %v2562 = vsub.s32 1, %v2561
        %v2563 = vrot.slane %v2520, %v2562
        %v2566 = vmul.f32 %v2551, %v2559
        %v2567 = vmul.f32 %v2552, %v2563
        %v2568 = vmul.f32 %v2553, %v2559
        %v2569 = vmul.f32 %v2554, %v2563
        %v2571 = vlaneseq
        %v2572 = vshrl.u32 %v2571, 7
        %v2573 = vsub.s32 0, %v2572
        %v2574 = vrot.slane %v2521, %v2573
        %v2575 = vlaneseq
        %v2576 = vshrl.u32 %v2575, 7
        %v2577 = vsub.s32 1, %v2576
        %v2578 = vrot.slane %v2521, %v2577
        %v2581 = vadd.f32 %v2566, %v2574
        %v2582 = vadd.f32 %v2567, %v2578
        %v2583 = vadd.f32 %v2568, %v2574
        %v2584 = vadd.f32 %v2569, %v2578
        %v2585 = vpack.c.bf16 %v2583, %v2581
        %v2586 = vpack.c.bf16 %v2584, %v2582
        %v2587 = vld [vmem:[%s765] sm:$0xff]
        %v2588 = vld [vmem:[%s765 + $0x8] sm:$0xff]
        %v2589 = vld [vmem:[%s765 + $0x10] sm:$0xff]
        %v2590 = vld [vmem:[%s765 + $0x18] sm:$0xff]
        %v2591 = vld [vmem:[%s765 + $0x20] sm:$0xff]
        %v2592 = vld [vmem:[%s765 + $0x28] sm:$0xff]
        %v2593 = vld [vmem:[%s765 + $0x30] sm:$0xff]
        %v2594 = vld [vmem:[%s765 + $0x38] sm:$0xff]
        %v2595 = vld [vmem:[%s765 + $0x40] sm:$0xff]
        %v2596 = vld [vmem:[%s765 + $0x48] sm:$0xff]
        %v2597 = vld [vmem:[%s765 + $0x50] sm:$0xff]
        %v2598 = vld [vmem:[%s765 + $0x58] sm:$0xff]
        %v2599 = vld [vmem:[%s765 + $0x60] sm:$0xff]
        %v2600 = vld [vmem:[%s765 + $0x68] sm:$0xff]
        %v2601 = vld [vmem:[%s765 + $0x70] sm:$0xff]
        %v2602 = vld [vmem:[%s765 + $0x78] sm:$0xff]
        %v2603 = vld [vmem:[%s765 + $0x80] sm:$0xff]
        %v2604 = vld [vmem:[%s765 + $0x88] sm:$0xff]
        %v2605 = vld [vmem:[%s765 + $0x90] sm:$0xff]
        %v2606 = vld [vmem:[%s765 + $0x98] sm:$0xff]
        %v2607 = vld [vmem:[%s765 + $0xa0] sm:$0xff]
        %v2608 = vld [vmem:[%s765 + $0xa8] sm:$0xff]
        %v2609 = vld [vmem:[%s765 + $0xb0] sm:$0xff]
        %v2610 = vld [vmem:[%s765 + $0xb8] sm:$0xff]
        %v2611 = vld [vmem:[%s765 + $0xc0] sm:$0xff]
        %v2612 = vld [vmem:[%s765 + $0xc8] sm:$0xff]
        %v2613 = vld [vmem:[%s765 + $0xd0] sm:$0xff]
        %v2614 = vld [vmem:[%s765 + $0xd8] sm:$0xff]
        %v2615 = vld [vmem:[%s765 + $0xe0] sm:$0xff]
        %v2616 = vld [vmem:[%s765 + $0xe8] sm:$0xff]
        %v2617 = vld [vmem:[%s765 + $0xf0] sm:$0xff]
        %v2618 = vld [vmem:[%s765 + $0xf8] sm:$0xff]
        %v2619 = vld [vmem:[%s765 + $0x100] sm:$0xff]
        %v2620 = vld [vmem:[%s765 + $0x108] sm:$0xff]
        %v2621 = vld [vmem:[%s765 + $0x110] sm:$0xff]
        %v2622 = vld [vmem:[%s765 + $0x118] sm:$0xff]
        %v2623 = vld [vmem:[%s765 + $0x120] sm:$0xff]
        %v2624 = vld [vmem:[%s765 + $0x128] sm:$0xff]
        %v2625 = vld [vmem:[%s765 + $0x130] sm:$0xff]
        %v2626 = vld [vmem:[%s765 + $0x138] sm:$0xff]
        %v2627 = vld [vmem:[%s765 + $0x140] sm:$0xff]
        %v2628 = vld [vmem:[%s765 + $0x148] sm:$0xff]
        %v2629 = vld [vmem:[%s765 + $0x150] sm:$0xff]
        %v2630 = vld [vmem:[%s765 + $0x158] sm:$0xff]
        %v2631 = vld [vmem:[%s765 + $0x160] sm:$0xff]
        %v2632 = vld [vmem:[%s765 + $0x168] sm:$0xff]
        %v2633 = vld [vmem:[%s765 + $0x170] sm:$0xff]
        %v2634 = vld [vmem:[%s765 + $0x178] sm:$0xff]
        %v2635 = vld [vmem:[%s765 + $0x180] sm:$0xff]
        %v2636 = vld [vmem:[%s765 + $0x188] sm:$0xff]
        %v2637 = vld [vmem:[%s765 + $0x190] sm:$0xff]
        %v2638 = vld [vmem:[%s765 + $0x198] sm:$0xff]
        %v2639 = vld [vmem:[%s765 + $0x1a0] sm:$0xff]
        %v2640 = vld [vmem:[%s765 + $0x1a8] sm:$0xff]
        %v2641 = vld [vmem:[%s765 + $0x1b0] sm:$0xff]
        %v2642 = vld [vmem:[%s765 + $0x1b8] sm:$0xff]
        %v2643 = vld [vmem:[%s765 + $0x1c0] sm:$0xff]
        %v2644 = vld [vmem:[%s765 + $0x1c8] sm:$0xff]
        %v2645 = vld [vmem:[%s765 + $0x1d0] sm:$0xff]
        %v2646 = vld [vmem:[%s765 + $0x1d8] sm:$0xff]
        %v2647 = vld [vmem:[%s765 + $0x1e0] sm:$0xff]
        %v2648 = vld [vmem:[%s765 + $0x1e8] sm:$0xff]
        %v2649 = vld [vmem:[%s765 + $0x1f0] sm:$0xff]
        %v2650 = vld [vmem:[%s765 + $0x1f8] sm:$0xff]
        %v2651 = vld [vmem:[%s888] sm:$0xf]
        %v2653 = vlaneseq
        %v2654 = vshrl.u32 %v2653, 7
        %v2655 = vsub.s32 0, %v2654
        %v2656 = vrot.slane %v2651, %v2655
        %v2657 = vlaneseq
        %v2658 = vshrl.u32 %v2657, 7
        %v2659 = vsub.s32 1, %v2658
        %v2660 = vrot.slane %v2651, %v2659
        %v2661 = vlaneseq
        %v2662 = vshrl.u32 %v2661, 7
        %v2663 = vsub.s32 2, %v2662
        %v2664 = vrot.slane %v2651, %v2663
        %v2665 = vlaneseq
        %v2666 = vshrl.u32 %v2665, 7
        %v2667 = vsub.s32 3, %v2666
        %v2668 = vrot.slane %v2651, %v2667
        %v2737 = vunpack.c.l.b16 %v2587
        %v2738 = vunpack.c.h.b16 %v2587
        %v2739 = vunpack.c.l.b16 %v2588
        %v2740 = vunpack.c.h.b16 %v2588
        %v2741 = vunpack.c.l.b16 %v2589
        %v2742 = vunpack.c.h.b16 %v2589
        %v2743 = vunpack.c.l.b16 %v2590
        %v2744 = vunpack.c.h.b16 %v2590
        %v2745 = vunpack.c.l.b16 %v2591
        %v2746 = vunpack.c.h.b16 %v2591
        %v2747 = vunpack.c.l.b16 %v2592
        %v2748 = vunpack.c.h.b16 %v2592
        %v2749 = vunpack.c.l.b16 %v2593
        %v2750 = vunpack.c.h.b16 %v2593
        %v2751 = vunpack.c.l.b16 %v2594
        %v2752 = vunpack.c.h.b16 %v2594
        %v2753 = vunpack.c.l.b16 %v2595
        %v2754 = vunpack.c.h.b16 %v2595
        %v2755 = vunpack.c.l.b16 %v2596
        %v2756 = vunpack.c.h.b16 %v2596
        %v2757 = vunpack.c.l.b16 %v2597
        %v2758 = vunpack.c.h.b16 %v2597
        %v2759 = vunpack.c.l.b16 %v2598
        %v2760 = vunpack.c.h.b16 %v2598
        %v2761 = vunpack.c.l.b16 %v2599
        %v2762 = vunpack.c.h.b16 %v2599
        %v2763 = vunpack.c.l.b16 %v2600
        %v2764 = vunpack.c.h.b16 %v2600
        %v2765 = vunpack.c.l.b16 %v2601
        %v2766 = vunpack.c.h.b16 %v2601
        %v2767 = vunpack.c.l.b16 %v2602
        %v2768 = vunpack.c.h.b16 %v2602
        %v2769 = vunpack.c.l.b16 %v2603
        %v2770 = vunpack.c.h.b16 %v2603
        %v2771 = vunpack.c.l.b16 %v2604
        %v2772 = vunpack.c.h.b16 %v2604
        %v2773 = vunpack.c.l.b16 %v2605
        %v2774 = vunpack.c.h.b16 %v2605
        %v2775 = vunpack.c.l.b16 %v2606
        %v2776 = vunpack.c.h.b16 %v2606
        %v2777 = vunpack.c.l.b16 %v2607
        %v2778 = vunpack.c.h.b16 %v2607
        %v2779 = vunpack.c.l.b16 %v2608
        %v2780 = vunpack.c.h.b16 %v2608
        %v2781 = vunpack.c.l.b16 %v2609
        %v2782 = vunpack.c.h.b16 %v2609
        %v2783 = vunpack.c.l.b16 %v2610
        %v2784 = vunpack.c.h.b16 %v2610
        %v2785 = vunpack.c.l.b16 %v2611
        %v2786 = vunpack.c.h.b16 %v2611
        %v2787 = vunpack.c.l.b16 %v2612
        %v2788 = vunpack.c.h.b16 %v2612
        %v2789 = vunpack.c.l.b16 %v2613
        %v2790 = vunpack.c.h.b16 %v2613
        %v2791 = vunpack.c.l.b16 %v2614
        %v2792 = vunpack.c.h.b16 %v2614
        %v2793 = vunpack.c.l.b16 %v2615
        %v2794 = vunpack.c.h.b16 %v2615
        %v2795 = vunpack.c.l.b16 %v2616
        %v2796 = vunpack.c.h.b16 %v2616
        %v2797 = vunpack.c.l.b16 %v2617
        %v2798 = vunpack.c.h.b16 %v2617
        %v2799 = vunpack.c.l.b16 %v2618
        %v2800 = vunpack.c.h.b16 %v2618
        %v2801 = vunpack.c.l.b16 %v2619
        %v2802 = vunpack.c.h.b16 %v2619
        %v2803 = vunpack.c.l.b16 %v2620
        %v2804 = vunpack.c.h.b16 %v2620
        %v2805 = vunpack.c.l.b16 %v2621
        %v2806 = vunpack.c.h.b16 %v2621
        %v2807 = vunpack.c.l.b16 %v2622
        %v2808 = vunpack.c.h.b16 %v2622
        %v2809 = vunpack.c.l.b16 %v2623
        %v2810 = vunpack.c.h.b16 %v2623
        %v2811 = vunpack.c.l.b16 %v2624
        %v2812 = vunpack.c.h.b16 %v2624
        %v2813 = vunpack.c.l.b16 %v2625
        %v2814 = vunpack.c.h.b16 %v2625
        %v2815 = vunpack.c.l.b16 %v2626
        %v2816 = vunpack.c.h.b16 %v2626
        %v2817 = vunpack.c.l.b16 %v2627
        %v2818 = vunpack.c.h.b16 %v2627
        %v2819 = vunpack.c.l.b16 %v2628
        %v2820 = vunpack.c.h.b16 %v2628
        %v2821 = vunpack.c.l.b16 %v2629
        %v2822 = vunpack.c.h.b16 %v2629
        %v2823 = vunpack.c.l.b16 %v2630
        %v2824 = vunpack.c.h.b16 %v2630
        %v2825 = vunpack.c.l.b16 %v2631
        %v2826 = vunpack.c.h.b16 %v2631
        %v2827 = vunpack.c.l.b16 %v2632
        %v2828 = vunpack.c.h.b16 %v2632
        %v2829 = vunpack.c.l.b16 %v2633
        %v2830 = vunpack.c.h.b16 %v2633
        %v2831 = vunpack.c.l.b16 %v2634
        %v2832 = vunpack.c.h.b16 %v2634
        %v2833 = vunpack.c.l.b16 %v2635
        %v2834 = vunpack.c.h.b16 %v2635
        %v2835 = vunpack.c.l.b16 %v2636
        %v2836 = vunpack.c.h.b16 %v2636
        %v2837 = vunpack.c.l.b16 %v2637
        %v2838 = vunpack.c.h.b16 %v2637
        %v2839 = vunpack.c.l.b16 %v2638
        %v2840 = vunpack.c.h.b16 %v2638
        %v2841 = vunpack.c.l.b16 %v2639
        %v2842 = vunpack.c.h.b16 %v2639
        %v2843 = vunpack.c.l.b16 %v2640
        %v2844 = vunpack.c.h.b16 %v2640
        %v2845 = vunpack.c.l.b16 %v2641
        %v2846 = vunpack.c.h.b16 %v2641
        %v2847 = vunpack.c.l.b16 %v2642
        %v2848 = vunpack.c.h.b16 %v2642
        %v2849 = vunpack.c.l.b16 %v2643
        %v2850 = vunpack.c.h.b16 %v2643
        %v2851 = vunpack.c.l.b16 %v2644
        %v2852 = vunpack.c.h.b16 %v2644
        %v2853 = vunpack.c.l.b16 %v2645
        %v2854 = vunpack.c.h.b16 %v2645
        %v2855 = vunpack.c.l.b16 %v2646
        %v2856 = vunpack.c.h.b16 %v2646
        %v2857 = vunpack.c.l.b16 %v2647
        %v2858 = vunpack.c.h.b16 %v2647
        %v2859 = vunpack.c.l.b16 %v2648
        %v2860 = vunpack.c.h.b16 %v2648
        %v2861 = vunpack.c.l.b16 %v2649
        %v2862 = vunpack.c.h.b16 %v2649
        %v2863 = vunpack.c.l.b16 %v2650
        %v2864 = vunpack.c.h.b16 %v2650
        %v2865 = vpack.c.b16 %v2741, %v2737
        %v2866 = vpack.c.b16 %v2742, %v2738
        %v2867 = vpack.c.b16 %v2743, %v2739
        %v2868 = vpack.c.b16 %v2744, %v2740
        %v2869 = vpack.c.b16 %v2749, %v2745
        %v2870 = vpack.c.b16 %v2750, %v2746
        %v2871 = vpack.c.b16 %v2751, %v2747
        %v2872 = vpack.c.b16 %v2752, %v2748
        %v2873 = vpack.c.b16 %v2757, %v2753
        %v2874 = vpack.c.b16 %v2758, %v2754
        %v2875 = vpack.c.b16 %v2759, %v2755
        %v2876 = vpack.c.b16 %v2760, %v2756
        %v2877 = vpack.c.b16 %v2765, %v2761
        %v2878 = vpack.c.b16 %v2766, %v2762
        %v2879 = vpack.c.b16 %v2767, %v2763
        %v2880 = vpack.c.b16 %v2768, %v2764
        %v2881 = vpack.c.b16 %v2773, %v2769
        %v2882 = vpack.c.b16 %v2774, %v2770
        %v2883 = vpack.c.b16 %v2775, %v2771
        %v2884 = vpack.c.b16 %v2776, %v2772
        %v2885 = vpack.c.b16 %v2781, %v2777
        %v2886 = vpack.c.b16 %v2782, %v2778
        %v2887 = vpack.c.b16 %v2783, %v2779
        %v2888 = vpack.c.b16 %v2784, %v2780
        %v2889 = vpack.c.b16 %v2789, %v2785
        %v2890 = vpack.c.b16 %v2790, %v2786
        %v2891 = vpack.c.b16 %v2791, %v2787
        %v2892 = vpack.c.b16 %v2792, %v2788
        %v2893 = vpack.c.b16 %v2797, %v2793
        %v2894 = vpack.c.b16 %v2798, %v2794
        %v2895 = vpack.c.b16 %v2799, %v2795
        %v2896 = vpack.c.b16 %v2800, %v2796
        %v2897 = vpack.c.b16 %v2805, %v2801
        %v2898 = vpack.c.b16 %v2806, %v2802
        %v2899 = vpack.c.b16 %v2807, %v2803
        %v2900 = vpack.c.b16 %v2808, %v2804
        %v2901 = vpack.c.b16 %v2813, %v2809
        %v2902 = vpack.c.b16 %v2814, %v2810
        %v2903 = vpack.c.b16 %v2815, %v2811
        %v2904 = vpack.c.b16 %v2816, %v2812
        %v2905 = vpack.c.b16 %v2821, %v2817
        %v2906 = vpack.c.b16 %v2822, %v2818
        %v2907 = vpack.c.b16 %v2823, %v2819
        %v2908 = vpack.c.b16 %v2824, %v2820
        %v2909 = vpack.c.b16 %v2829, %v2825
        %v2910 = vpack.c.b16 %v2830, %v2826
        %v2911 = vpack.c.b16 %v2831, %v2827
        %v2912 = vpack.c.b16 %v2832, %v2828
        %v2913 = vpack.c.b16 %v2837, %v2833
        %v2914 = vpack.c.b16 %v2838, %v2834
        %v2915 = vpack.c.b16 %v2839, %v2835
        %v2916 = vpack.c.b16 %v2840, %v2836
        %v2917 = vpack.c.b16 %v2845, %v2841
        %v2918 = vpack.c.b16 %v2846, %v2842
        %v2919 = vpack.c.b16 %v2847, %v2843
        %v2920 = vpack.c.b16 %v2848, %v2844
        %v2921 = vpack.c.b16 %v2853, %v2849
        %v2922 = vpack.c.b16 %v2854, %v2850
        %v2923 = vpack.c.b16 %v2855, %v2851
        %v2924 = vpack.c.b16 %v2856, %v2852
        %v2925 = vpack.c.b16 %v2861, %v2857
        %v2926 = vpack.c.b16 %v2862, %v2858
        %v2927 = vpack.c.b16 %v2863, %v2859
        %v2928 = vpack.c.b16 %v2864, %v2860
        %2993 = vmatprep.subr.bf16.mxu0 %v2894
        %2994 = vmatpush1.bf16.msra.mxu0 %v2893
        %2995 = vmatprep.subr.bf16.mxu0 %v2890
        %2996 = vmatpush1.bf16.msra.mxu0 %v2889
        %2997 = vmatprep.subr.bf16.mxu0 %v2886
        %2998 = vmatpush1.bf16.msra.mxu0 %v2885
        %2999 = vmatprep.subr.bf16.mxu0 %v2882
        %3000 = vmatpush1.bf16.msra.mxu0 %v2881
        %3001 = vmatprep.subr.bf16.mxu0 %v2878
        %3002 = vmatpush1.bf16.msra.mxu0 %v2877
        %3003 = vmatprep.subr.bf16.mxu0 %v2874
        %3004 = vmatpush1.bf16.msra.mxu0 %v2873
        %3005 = vmatprep.subr.bf16.mxu0 %v2870
        %3006 = vmatpush1.bf16.msra.mxu0 %v2869
        %3007 = vmatprep.subr.bf16.mxu0 %v2866
        %3008 = vmatpush1.bf16.msra.mxu0 %v2865
        %3009 = vmatprep.subr.bf16.mxu0 %v2926
        %3010 = vmatpush2.bf16.msra.mxu0 %v2925
        %3011 = vmatprep.subr.bf16.mxu0 %v2922
        %3012 = vmatpush2.bf16.msra.mxu0 %v2921
        %3013 = vmatprep.subr.bf16.mxu0 %v2918
        %3014 = vmatpush2.bf16.msra.mxu0 %v2917
        %3015 = vmatprep.subr.bf16.mxu0 %v2914
        %3016 = vmatpush2.bf16.msra.mxu0 %v2913
        %3017 = vmatprep.subr.bf16.mxu0 %v2910
        %3018 = vmatpush2.bf16.msra.mxu0 %v2909
        %3019 = vmatprep.subr.bf16.mxu0 %v2906
        %3020 = vmatpush2.bf16.msra.mxu0 %v2905
        %3021 = vmatprep.subr.bf16.mxu0 %v2902
        %3022 = vmatpush2.bf16.msra.mxu0 %v2901
        %3023 = vmatprep.subr.bf16.mxu0 %v2898
        %3024 = vmatpush2.bf16.msra.mxu0 %v2897
        %3025 = vmatprep.mubr.bf16.mxu0 %v2586
        %3026 = vmatmul.mubr.bf16.gmra.mxu0 %v2585
        %v3027 = vpop.f32.mrf.mxu0
        %v3028 = vadd.f32 %v2656, %v3027
        %v3029 = vpop.f32.mrf.mxu0
        %v3030 = vadd.f32 %v2660, %v3029
        %v3031 = vpop.f32.mrf.mxu0
        %v3032 = vadd.f32 %v2656, %v3031
        %v3033 = vpop.f32.mrf.mxu0
        %v3034 = vadd.f32 %v2660, %v3033
        %3035 = vdwg.mxu0
        %3036 = vmatprep.subr.bf16.mxu0 %v2896
        %3037 = vmatpush1.bf16.msra.mxu0 %v2895
        %3038 = vmatprep.subr.bf16.mxu0 %v2892
        %3039 = vmatpush1.bf16.msra.mxu0 %v2891
        %3040 = vmatprep.subr.bf16.mxu0 %v2888
        %3041 = vmatpush1.bf16.msra.mxu0 %v2887
        %3042 = vmatprep.subr.bf16.mxu0 %v2884
        %3043 = vmatpush1.bf16.msra.mxu0 %v2883
        %3044 = vmatprep.subr.bf16.mxu0 %v2880
        %3045 = vmatpush1.bf16.msra.mxu0 %v2879
        %3046 = vmatprep.subr.bf16.mxu0 %v2876
        %3047 = vmatpush1.bf16.msra.mxu0 %v2875
        %3048 = vmatprep.subr.bf16.mxu0 %v2872
        %3049 = vmatpush1.bf16.msra.mxu0 %v2871
        %3050 = vmatprep.subr.bf16.mxu0 %v2868
        %3051 = vmatpush1.bf16.msra.mxu0 %v2867
        %3052 = vmatprep.subr.bf16.mxu0 %v2928
        %3053 = vmatpush2.bf16.msra.mxu0 %v2927
        %3054 = vmatprep.subr.bf16.mxu0 %v2924
        %3055 = vmatpush2.bf16.msra.mxu0 %v2923
        %3056 = vmatprep.subr.bf16.mxu0 %v2920
        %3057 = vmatpush2.bf16.msra.mxu0 %v2919
        %3058 = vmatprep.subr.bf16.mxu0 %v2916
        %3059 = vmatpush2.bf16.msra.mxu0 %v2915
        %3060 = vmatprep.subr.bf16.mxu0 %v2912
        %3061 = vmatpush2.bf16.msra.mxu0 %v2911
        %3062 = vmatprep.subr.bf16.mxu0 %v2908
        %3063 = vmatpush2.bf16.msra.mxu0 %v2907
        %3064 = vmatprep.subr.bf16.mxu0 %v2904
        %3065 = vmatpush2.bf16.msra.mxu0 %v2903
        %3066 = vmatprep.subr.bf16.mxu0 %v2900
        %3067 = vmatpush2.bf16.msra.mxu0 %v2899
        %3068 = vmatprep.mubr.bf16.mxu0 %v2586
        %3069 = vmatmul.mubr.bf16.gmra.mxu0 %v2585
        %v3070 = vpop.f32.mrf.mxu0
        %v3071 = vadd.f32 %v2664, %v3070
        %v3072 = vpop.f32.mrf.mxu0
        %v3073 = vadd.f32 %v2668, %v3072
        %v3074 = vpop.f32.mrf.mxu0
        %v3075 = vadd.f32 %v2664, %v3074
        %v3076 = vpop.f32.mrf.mxu0
        %v3077 = vadd.f32 %v2668, %v3076
        %3078 = vdwg.mxu0
        %v3079 = vmul.f32 %v3028, 0.5
        %v3080 = vmul.f32 %v3030, 0.5
        %v3081 = vmul.f32 %v3071, 0.5
        %v3082 = vmul.f32 %v3073, 0.5
        %v3083 = vmul.f32 %v3032, 0.5
        %v3084 = vmul.f32 %v3034, 0.5
        %v3085 = vmul.f32 %v3075, 0.5
        %v3086 = vmul.f32 %v3077, 0.5
        %v3087 = vmul.f32 %v3028, 0.044715
        %v3088 = vmul.f32 %v3030, 0.044715
        %v3089 = vmul.f32 %v3071, 0.044715
        %v3090 = vmul.f32 %v3073, 0.044715
        %v3091 = vmul.f32 %v3032, 0.044715
        %v3092 = vmul.f32 %v3034, 0.044715
        %v3093 = vmul.f32 %v3075, 0.044715
        %v3094 = vmul.f32 %v3077, 0.044715
        %v3095 = vmul.f32 %v3087, %v3028
        %v3096 = vmul.f32 %v3088, %v3030
        %v3097 = vmul.f32 %v3089, %v3071
        %v3098 = vmul.f32 %v3090, %v3073
        %v3099 = vmul.f32 %v3091, %v3032
        %v3100 = vmul.f32 %v3092, %v3034
        %v3101 = vmul.f32 %v3093, %v3075
        %v3102 = vmul.f32 %v3094, %v3077
        %v3103 = vmul.f32 %v3095, %v3028
        %v3104 = vmul.f32 %v3096, %v3030
        %v3105 = vmul.f32 %v3097, %v3071
        %v3106 = vmul.f32 %v3098, %v3073
        %v3107 = vmul.f32 %v3099, %v3032
        %v3108 = vmul.f32 %v3100, %v3034
        %v3109 = vmul.f32 %v3101, %v3075
        %v3110 = vmul.f32 %v3102, %v3077
        %v3111 = vadd.f32 %v3028, %v3103
        %v3112 = vadd.f32 %v3030, %v3104
        %v3113 = vadd.f32 %v3071, %v3105
        %v3114 = vadd.f32 %v3073, %v3106
        %v3115 = vadd.f32 %v3032, %v3107
        %v3116 = vadd.f32 %v3034, %v3108
        %v3117 = vadd.f32 %v3075, %v3109
        %v3118 = vadd.f32 %v3077, %v3110
        %v3119 = vmul.f32 %v3111, 0.7978846
        %v3120 = vmul.f32 %v3112, 0.7978846
        %v3121 = vmul.f32 %v3113, 0.7978846
        %v3122 = vmul.f32 %v3114, 0.7978846
        %v3123 = vmul.f32 %v3115, 0.7978846
        %v3124 = vmul.f32 %v3116, 0.7978846
        %v3125 = vmul.f32 %v3117, 0.7978846
        %v3126 = vmul.f32 %v3118, 0.7978846
        %v3127 = vtanh.pop %v3119
        %v3128 = vtanh.pop %v3120
        %v3129 = vtanh.pop %v3121
        %v3130 = vtanh.pop %v3122
        %v3131 = vtanh.pop %v3123
        %v3132 = vtanh.pop %v3124
        %v3133 = vtanh.pop %v3125
        %v3134 = vtanh.pop %v3126
        %v3135 = vadd.f32 %v3127, 1.0
        %v3136 = vadd.f32 %v3128, 1.0
        %v3137 = vadd.f32 %v3129, 1.0
        %v3138 = vadd.f32 %v3130, 1.0
        %v3139 = vadd.f32 %v3131, 1.0
        %v3140 = vadd.f32 %v3132, 1.0
        %v3141 = vadd.f32 %v3133, 1.0
        %v3142 = vadd.f32 %v3134, 1.0
        %v3143 = vmul.f32 %v3079, %v3135
        %v3144 = vmul.f32 %v3080, %v3136
        %v3145 = vmul.f32 %v3081, %v3137
        %v3146 = vmul.f32 %v3082, %v3138
        %v3147 = vmul.f32 %v3083, %v3139
        %v3148 = vmul.f32 %v3084, %v3140
        %v3149 = vmul.f32 %v3085, %v3141
        %v3150 = vmul.f32 %v3086, %v3142
        %v3151 = vpack.c.bf16 %v3147, %v3143
        %v3152 = vpack.c.bf16 %v3148, %v3144
        %v3153 = vpack.c.bf16 %v3149, %v3145
        %v3154 = vpack.c.bf16 %v3150, %v3146
        %v3155 = vld [vmem:[%s774] sm:$0xff]
        %v3156 = vld [vmem:[%s774 + $0x8] sm:$0xff]
        %v3157 = vld [vmem:[%s774 + $0x10] sm:$0xff]
        %v3158 = vld [vmem:[%s774 + $0x18] sm:$0xff]
        %v3159 = vld [vmem:[%s774 + $0x20] sm:$0xff]
        %v3160 = vld [vmem:[%s774 + $0x28] sm:$0xff]
        %v3161 = vld [vmem:[%s774 + $0x30] sm:$0xff]
        %v3162 = vld [vmem:[%s774 + $0x38] sm:$0xff]
        %v3163 = vld [vmem:[%s774 + $0x40] sm:$0xff]
        %v3164 = vld [vmem:[%s774 + $0x48] sm:$0xff]
        %v3165 = vld [vmem:[%s774 + $0x50] sm:$0xff]
        %v3166 = vld [vmem:[%s774 + $0x58] sm:$0xff]
        %v3167 = vld [vmem:[%s774 + $0x60] sm:$0xff]
        %v3168 = vld [vmem:[%s774 + $0x68] sm:$0xff]
        %v3169 = vld [vmem:[%s774 + $0x70] sm:$0xff]
        %v3170 = vld [vmem:[%s774 + $0x78] sm:$0xff]
        %v3171 = vld [vmem:[%s774 + $0x80] sm:$0xff]
        %v3172 = vld [vmem:[%s774 + $0x88] sm:$0xff]
        %v3173 = vld [vmem:[%s774 + $0x90] sm:$0xff]
        %v3174 = vld [vmem:[%s774 + $0x98] sm:$0xff]
        %v3175 = vld [vmem:[%s774 + $0xa0] sm:$0xff]
        %v3176 = vld [vmem:[%s774 + $0xa8] sm:$0xff]
        %v3177 = vld [vmem:[%s774 + $0xb0] sm:$0xff]
        %v3178 = vld [vmem:[%s774 + $0xb8] sm:$0xff]
        %v3179 = vld [vmem:[%s774 + $0xc0] sm:$0xff]
        %v3180 = vld [vmem:[%s774 + $0xc8] sm:$0xff]
        %v3181 = vld [vmem:[%s774 + $0xd0] sm:$0xff]
        %v3182 = vld [vmem:[%s774 + $0xd8] sm:$0xff]
        %v3183 = vld [vmem:[%s774 + $0xe0] sm:$0xff]
        %v3184 = vld [vmem:[%s774 + $0xe8] sm:$0xff]
        %v3185 = vld [vmem:[%s774 + $0xf0] sm:$0xff]
        %v3186 = vld [vmem:[%s774 + $0xf8] sm:$0xff]
        %v3187 = vld [vmem:[%s774 + $0x100] sm:$0xff]
        %v3188 = vld [vmem:[%s774 + $0x108] sm:$0xff]
        %v3189 = vld [vmem:[%s774 + $0x110] sm:$0xff]
        %v3190 = vld [vmem:[%s774 + $0x118] sm:$0xff]
        %v3191 = vld [vmem:[%s774 + $0x120] sm:$0xff]
        %v3192 = vld [vmem:[%s774 + $0x128] sm:$0xff]
        %v3193 = vld [vmem:[%s774 + $0x130] sm:$0xff]
        %v3194 = vld [vmem:[%s774 + $0x138] sm:$0xff]
        %v3195 = vld [vmem:[%s774 + $0x140] sm:$0xff]
        %v3196 = vld [vmem:[%s774 + $0x148] sm:$0xff]
        %v3197 = vld [vmem:[%s774 + $0x150] sm:$0xff]
        %v3198 = vld [vmem:[%s774 + $0x158] sm:$0xff]
        %v3199 = vld [vmem:[%s774 + $0x160] sm:$0xff]
        %v3200 = vld [vmem:[%s774 + $0x168] sm:$0xff]
        %v3201 = vld [vmem:[%s774 + $0x170] sm:$0xff]
        %v3202 = vld [vmem:[%s774 + $0x178] sm:$0xff]
        %v3203 = vld [vmem:[%s774 + $0x180] sm:$0xff]
        %v3204 = vld [vmem:[%s774 + $0x188] sm:$0xff]
        %v3205 = vld [vmem:[%s774 + $0x190] sm:$0xff]
        %v3206 = vld [vmem:[%s774 + $0x198] sm:$0xff]
        %v3207 = vld [vmem:[%s774 + $0x1a0] sm:$0xff]
        %v3208 = vld [vmem:[%s774 + $0x1a8] sm:$0xff]
        %v3209 = vld [vmem:[%s774 + $0x1b0] sm:$0xff]
        %v3210 = vld [vmem:[%s774 + $0x1b8] sm:$0xff]
        %v3211 = vld [vmem:[%s774 + $0x1c0] sm:$0xff]
        %v3212 = vld [vmem:[%s774 + $0x1c8] sm:$0xff]
        %v3213 = vld [vmem:[%s774 + $0x1d0] sm:$0xff]
        %v3214 = vld [vmem:[%s774 + $0x1d8] sm:$0xff]
        %v3215 = vld [vmem:[%s774 + $0x1e0] sm:$0xff]
        %v3216 = vld [vmem:[%s774 + $0x1e8] sm:$0xff]
        %v3217 = vld [vmem:[%s774 + $0x1f0] sm:$0xff]
        %v3218 = vld [vmem:[%s774 + $0x1f8] sm:$0xff]
        %v3219 = vld [vmem:[%s892] sm:$0x3]
        %v3221 = vlaneseq
        %v3222 = vshrl.u32 %v3221, 7
        %v3223 = vsub.s32 0, %v3222
        %v3224 = vrot.slane %v3219, %v3223
        %v3225 = vlaneseq
        %v3226 = vshrl.u32 %v3225, 7
        %v3227 = vsub.s32 1, %v3226
        %v3228 = vrot.slane %v3219, %v3227
        %v3295 = vunpack.c.l.b16 %v3155
        %v3296 = vunpack.c.h.b16 %v3155
        %v3297 = vunpack.c.l.b16 %v3156
        %v3298 = vunpack.c.h.b16 %v3156
        %v3299 = vunpack.c.l.b16 %v3157
        %v3300 = vunpack.c.h.b16 %v3157
        %v3301 = vunpack.c.l.b16 %v3158
        %v3302 = vunpack.c.h.b16 %v3158
        %v3303 = vunpack.c.l.b16 %v3159
        %v3304 = vunpack.c.h.b16 %v3159
        %v3305 = vunpack.c.l.b16 %v3160
        %v3306 = vunpack.c.h.b16 %v3160
        %v3307 = vunpack.c.l.b16 %v3161
        %v3308 = vunpack.c.h.b16 %v3161
        %v3309 = vunpack.c.l.b16 %v3162
        %v3310 = vunpack.c.h.b16 %v3162
        %v3311 = vunpack.c.l.b16 %v3163
        %v3312 = vunpack.c.h.b16 %v3163
        %v3313 = vunpack.c.l.b16 %v3164
        %v3314 = vunpack.c.h.b16 %v3164
        %v3315 = vunpack.c.l.b16 %v3165
        %v3316 = vunpack.c.h.b16 %v3165
        %v3317 = vunpack.c.l.b16 %v3166
        %v3318 = vunpack.c.h.b16 %v3166
        %v3319 = vunpack.c.l.b16 %v3167
        %v3320 = vunpack.c.h.b16 %v3167
        %v3321 = vunpack.c.l.b16 %v3168
        %v3322 = vunpack.c.h.b16 %v3168
        %v3323 = vunpack.c.l.b16 %v3169
        %v3324 = vunpack.c.h.b16 %v3169
        %v3325 = vunpack.c.l.b16 %v3170
        %v3326 = vunpack.c.h.b16 %v3170
        %v3327 = vunpack.c.l.b16 %v3171
        %v3328 = vunpack.c.h.b16 %v3171
        %v3329 = vunpack.c.l.b16 %v3172
        %v3330 = vunpack.c.h.b16 %v3172
        %v3331 = vunpack.c.l.b16 %v3173
        %v3332 = vunpack.c.h.b16 %v3173
        %v3333 = vunpack.c.l.b16 %v3174
        %v3334 = vunpack.c.h.b16 %v3174
        %v3335 = vunpack.c.l.b16 %v3175
        %v3336 = vunpack.c.h.b16 %v3175
        %v3337 = vunpack.c.l.b16 %v3176
        %v3338 = vunpack.c.h.b16 %v3176
        %v3339 = vunpack.c.l.b16 %v3177
        %v3340 = vunpack.c.h.b16 %v3177
        %v3341 = vunpack.c.l.b16 %v3178
        %v3342 = vunpack.c.h.b16 %v3178
        %v3343 = vunpack.c.l.b16 %v3179
        %v3344 = vunpack.c.h.b16 %v3179
        %v3345 = vunpack.c.l.b16 %v3180
        %v3346 = vunpack.c.h.b16 %v3180
        %v3347 = vunpack.c.l.b16 %v3181
        %v3348 = vunpack.c.h.b16 %v3181
        %v3349 = vunpack.c.l.b16 %v3182
        %v3350 = vunpack.c.h.b16 %v3182
        %v3351 = vunpack.c.l.b16 %v3183
        %v3352 = vunpack.c.h.b16 %v3183
        %v3353 = vunpack.c.l.b16 %v3184
        %v3354 = vunpack.c.h.b16 %v3184
        %v3355 = vunpack.c.l.b16 %v3185
        %v3356 = vunpack.c.h.b16 %v3185
        %v3357 = vunpack.c.l.b16 %v3186
        %v3358 = vunpack.c.h.b16 %v3186
        %v3359 = vunpack.c.l.b16 %v3187
        %v3360 = vunpack.c.h.b16 %v3187
        %v3361 = vunpack.c.l.b16 %v3188
        %v3362 = vunpack.c.h.b16 %v3188
        %v3363 = vunpack.c.l.b16 %v3189
        %v3364 = vunpack.c.h.b16 %v3189
        %v3365 = vunpack.c.l.b16 %v3190
        %v3366 = vunpack.c.h.b16 %v3190
        %v3367 = vunpack.c.l.b16 %v3191
        %v3368 = vunpack.c.h.b16 %v3191
        %v3369 = vunpack.c.l.b16 %v3192
        %v3370 = vunpack.c.h.b16 %v3192
        %v3371 = vunpack.c.l.b16 %v3193
        %v3372 = vunpack.c.h.b16 %v3193
        %v3373 = vunpack.c.l.b16 %v3194
        %v3374 = vunpack.c.h.b16 %v3194
        %v3375 = vunpack.c.l.b16 %v3195
        %v3376 = vunpack.c.h.b16 %v3195
        %v3377 = vunpack.c.l.b16 %v3196
        %v3378 = vunpack.c.h.b16 %v3196
        %v3379 = vunpack.c.l.b16 %v3197
        %v3380 = vunpack.c.h.b16 %v3197
        %v3381 = vunpack.c.l.b16 %v3198
        %v3382 = vunpack.c.h.b16 %v3198
        %v3383 = vunpack.c.l.b16 %v3199
        %v3384 = vunpack.c.h.b16 %v3199
        %v3385 = vunpack.c.l.b16 %v3200
        %v3386 = vunpack.c.h.b16 %v3200
        %v3387 = vunpack.c.l.b16 %v3201
        %v3388 = vunpack.c.h.b16 %v3201
        %v3389 = vunpack.c.l.b16 %v3202
        %v3390 = vunpack.c.h.b16 %v3202
        %v3391 = vunpack.c.l.b16 %v3203
        %v3392 = vunpack.c.h.b16 %v3203
        %v3393 = vunpack.c.l.b16 %v3204
        %v3394 = vunpack.c.h.b16 %v3204
        %v3395 = vunpack.c.l.b16 %v3205
        %v3396 = vunpack.c.h.b16 %v3205
        %v3397 = vunpack.c.l.b16 %v3206
        %v3398 = vunpack.c.h.b16 %v3206
        %v3399 = vunpack.c.l.b16 %v3207
        %v3400 = vunpack.c.h.b16 %v3207
        %v3401 = vunpack.c.l.b16 %v3208
        %v3402 = vunpack.c.h.b16 %v3208
        %v3403 = vunpack.c.l.b16 %v3209
        %v3404 = vunpack.c.h.b16 %v3209
        %v3405 = vunpack.c.l.b16 %v3210
        %v3406 = vunpack.c.h.b16 %v3210
        %v3407 = vunpack.c.l.b16 %v3211
        %v3408 = vunpack.c.h.b16 %v3211
        %v3409 = vunpack.c.l.b16 %v3212
        %v3410 = vunpack.c.h.b16 %v3212
        %v3411 = vunpack.c.l.b16 %v3213
        %v3412 = vunpack.c.h.b16 %v3213
        %v3413 = vunpack.c.l.b16 %v3214
        %v3414 = vunpack.c.h.b16 %v3214
        %v3415 = vunpack.c.l.b16 %v3215
        %v3416 = vunpack.c.h.b16 %v3215
        %v3417 = vunpack.c.l.b16 %v3216
        %v3418 = vunpack.c.h.b16 %v3216
        %v3419 = vunpack.c.l.b16 %v3217
        %v3420 = vunpack.c.h.b16 %v3217
        %v3421 = vunpack.c.l.b16 %v3218
        %v3422 = vunpack.c.h.b16 %v3218
        %v3423 = vpack.c.b16 %v3297, %v3295
        %v3424 = vpack.c.b16 %v3298, %v3296
        %v3425 = vpack.c.b16 %v3301, %v3299
        %v3426 = vpack.c.b16 %v3302, %v3300
        %v3427 = vpack.c.b16 %v3305, %v3303
        %v3428 = vpack.c.b16 %v3306, %v3304
        %v3429 = vpack.c.b16 %v3309, %v3307
        %v3430 = vpack.c.b16 %v3310, %v3308
        %v3431 = vpack.c.b16 %v3313, %v3311
        %v3432 = vpack.c.b16 %v3314, %v3312
        %v3433 = vpack.c.b16 %v3317, %v3315
        %v3434 = vpack.c.b16 %v3318, %v3316
        %v3435 = vpack.c.b16 %v3321, %v3319
        %v3436 = vpack.c.b16 %v3322, %v3320
        %v3437 = vpack.c.b16 %v3325, %v3323
        %v3438 = vpack.c.b16 %v3326, %v3324
        %v3439 = vpack.c.b16 %v3329, %v3327
        %v3440 = vpack.c.b16 %v3330, %v3328
        %v3441 = vpack.c.b16 %v3333, %v3331
        %v3442 = vpack.c.b16 %v3334, %v3332
        %v3443 = vpack.c.b16 %v3337, %v3335
        %v3444 = vpack.c.b16 %v3338, %v3336
        %v3445 = vpack.c.b16 %v3341, %v3339
        %v3446 = vpack.c.b16 %v3342, %v3340
        %v3447 = vpack.c.b16 %v3345, %v3343
        %v3448 = vpack.c.b16 %v3346, %v3344
        %v3449 = vpack.c.b16 %v3349, %v3347
        %v3450 = vpack.c.b16 %v3350, %v3348
        %v3451 = vpack.c.b16 %v3353, %v3351
        %v3452 = vpack.c.b16 %v3354, %v3352
        %v3453 = vpack.c.b16 %v3357, %v3355
        %v3454 = vpack.c.b16 %v3358, %v3356
        %v3455 = vpack.c.b16 %v3361, %v3359
        %v3456 = vpack.c.b16 %v3362, %v3360
        %v3457 = vpack.c.b16 %v3365, %v3363
        %v3458 = vpack.c.b16 %v3366, %v3364
        %v3459 = vpack.c.b16 %v3369, %v3367
        %v3460 = vpack.c.b16 %v3370, %v3368
        %v3461 = vpack.c.b16 %v3373, %v3371
        %v3462 = vpack.c.b16 %v3374, %v3372
        %v3463 = vpack.c.b16 %v3377, %v3375
        %v3464 = vpack.c.b16 %v3378, %v3376
        %v3465 = vpack.c.b16 %v3381, %v3379
        %v3466 = vpack.c.b16 %v3382, %v3380
        %v3467 = vpack.c.b16 %v3385, %v3383
        %v3468 = vpack.c.b16 %v3386, %v3384
        %v3469 = vpack.c.b16 %v3389, %v3387
        %v3470 = vpack.c.b16 %v3390, %v3388
        %v3471 = vpack.c.b16 %v3393, %v3391
        %v3472 = vpack.c.b16 %v3394, %v3392
        %v3473 = vpack.c.b16 %v3397, %v3395
        %v3474 = vpack.c.b16 %v3398, %v3396
        %v3475 = vpack.c.b16 %v3401, %v3399
        %v3476 = vpack.c.b16 %v3402, %v3400
        %v3477 = vpack.c.b16 %v3405, %v3403
        %v3478 = vpack.c.b16 %v3406, %v3404
        %v3479 = vpack.c.b16 %v3409, %v3407
        %v3480 = vpack.c.b16 %v3410, %v3408
        %v3481 = vpack.c.b16 %v3413, %v3411
        %v3482 = vpack.c.b16 %v3414, %v3412
        %v3483 = vpack.c.b16 %v3417, %v3415
        %v3484 = vpack.c.b16 %v3418, %v3416
        %v3485 = vpack.c.b16 %v3421, %v3419
        %v3486 = vpack.c.b16 %v3422, %v3420
        %3551 = vmatprep.subr.bf16.mxu0 %v3438
        %3552 = vmatpush1.bf16.msra.mxu0 %v3437
        %3553 = vmatprep.subr.bf16.mxu0 %v3436
        %3554 = vmatpush1.bf16.msra.mxu0 %v3435
        %3555 = vmatprep.subr.bf16.mxu0 %v3434
        %3556 = vmatpush1.bf16.msra.mxu0 %v3433
        %3557 = vmatprep.subr.bf16.mxu0 %v3432
        %3558 = vmatpush1.bf16.msra.mxu0 %v3431
        %3559 = vmatprep.subr.bf16.mxu0 %v3430
        %3560 = vmatpush1.bf16.msra.mxu0 %v3429
        %3561 = vmatprep.subr.bf16.mxu0 %v3428
        %3562 = vmatpush1.bf16.msra.mxu0 %v3427
        %3563 = vmatprep.subr.bf16.mxu0 %v3426
        %3564 = vmatpush1.bf16.msra.mxu0 %v3425
        %3565 = vmatprep.subr.bf16.mxu0 %v3424
        %3566 = vmatpush1.bf16.msra.mxu0 %v3423
        %3567 = vmatprep.subr.bf16.mxu0 %v3454
        %3568 = vmatpush2.bf16.msra.mxu0 %v3453
        %3569 = vmatprep.subr.bf16.mxu0 %v3452
        %3570 = vmatpush2.bf16.msra.mxu0 %v3451
        %3571 = vmatprep.subr.bf16.mxu0 %v3450
        %3572 = vmatpush2.bf16.msra.mxu0 %v3449
        %3573 = vmatprep.subr.bf16.mxu0 %v3448
        %3574 = vmatpush2.bf16.msra.mxu0 %v3447
        %3575 = vmatprep.subr.bf16.mxu0 %v3446
        %3576 = vmatpush2.bf16.msra.mxu0 %v3445
        %3577 = vmatprep.subr.bf16.mxu0 %v3444
        %3578 = vmatpush2.bf16.msra.mxu0 %v3443
        %3579 = vmatprep.subr.bf16.mxu0 %v3442
        %3580 = vmatpush2.bf16.msra.mxu0 %v3441
        %3581 = vmatprep.subr.bf16.mxu0 %v3440
        %3582 = vmatpush2.bf16.msra.mxu0 %v3439
        %3583 = vmatprep.mubr.bf16.mxu0 %v3152
        %3584 = vmatmul.mubr.bf16.gmra.mxu0 %v3151
        %v3585 = vpop.f32.mrf.mxu0
        %v3586 = vadd.f32 %v3224, %v3585
        %v3587 = vpop.f32.mrf.mxu0
        %v3588 = vadd.f32 %v3228, %v3587
        %v3589 = vpop.f32.mrf.mxu0
        %v3590 = vadd.f32 %v3224, %v3589
        %v3591 = vpop.f32.mrf.mxu0
        %v3592 = vadd.f32 %v3228, %v3591
        %3593 = vdwg.mxu0
        %3594 = vmatprep.subr.bf16.mxu0 %v3470
        %3595 = vmatpush1.bf16.msra.mxu0 %v3469
        %3596 = vmatprep.subr.bf16.mxu0 %v3468
        %3597 = vmatpush1.bf16.msra.mxu0 %v3467
        %3598 = vmatprep.subr.bf16.mxu0 %v3466
        %3599 = vmatpush1.bf16.msra.mxu0 %v3465
        %3600 = vmatprep.subr.bf16.mxu0 %v3464
        %3601 = vmatpush1.bf16.msra.mxu0 %v3463
        %3602 = vmatprep.subr.bf16.mxu0 %v3462
        %3603 = vmatpush1.bf16.msra.mxu0 %v3461
        %3604 = vmatprep.subr.bf16.mxu0 %v3460
        %3605 = vmatpush1.bf16.msra.mxu0 %v3459
        %3606 = vmatprep.subr.bf16.mxu0 %v3458
        %3607 = vmatpush1.bf16.msra.mxu0 %v3457
        %3608 = vmatprep.subr.bf16.mxu0 %v3456
        %3609 = vmatpush1.bf16.msra.mxu0 %v3455
        %3610 = vmatprep.subr.bf16.mxu0 %v3486
        %3611 = vmatpush2.bf16.msra.mxu0 %v3485
        %3612 = vmatprep.subr.bf16.mxu0 %v3484
        %3613 = vmatpush2.bf16.msra.mxu0 %v3483
        %3614 = vmatprep.subr.bf16.mxu0 %v3482
        %3615 = vmatpush2.bf16.msra.mxu0 %v3481
        %3616 = vmatprep.subr.bf16.mxu0 %v3480
        %3617 = vmatpush2.bf16.msra.mxu0 %v3479
        %3618 = vmatprep.subr.bf16.mxu0 %v3478
        %3619 = vmatpush2.bf16.msra.mxu0 %v3477
        %3620 = vmatprep.subr.bf16.mxu0 %v3476
        %3621 = vmatpush2.bf16.msra.mxu0 %v3475
        %3622 = vmatprep.subr.bf16.mxu0 %v3474
        %3623 = vmatpush2.bf16.msra.mxu0 %v3473
        %3624 = vmatprep.subr.bf16.mxu0 %v3472
        %3625 = vmatpush2.bf16.msra.mxu0 %v3471
        %3626 = vmatprep.mubr.bf16.mxu0 %v3154
        %3627 = vmatmul.mubr.bf16.gmra.mxu0 %v3153
        %v3628 = vpop.f32.mrf.mxu0
        %v3629 = vadd.f32 %v3586, %v3628
        %v3630 = vpop.f32.mrf.mxu0
        %v3631 = vadd.f32 %v3588, %v3630
        %v3632 = vpop.f32.mrf.mxu0
        %v3633 = vadd.f32 %v3590, %v3632
        %v3634 = vpop.f32.mrf.mxu0
        %v3635 = vadd.f32 %v3592, %v3634
        %3636 = vdwg.mxu0
        %v3637 = vadd.f32 %v2581, %v3629
        %v3638 = vadd.f32 %v2582, %v3631
        %v3639 = vadd.f32 %v2583, %v3633
        %v3640 = vadd.f32 %v2584, %v3635
        %v3641 = vld [vmem:[%s896] sm:$0x3]
        %v3642 = vld [vmem:[%s900] sm:$0x3]
        %v3643 = vadd.f32 %v3637, %v3638
        %3644 = vadd.xlane.f32.xlu0 %v3643
        %v3645 = vpop.xlane.xlu0 %3644
        %v3646 = vadd.f32 %v3639, %v3640
        %3647 = vadd.xlane.f32.xlu0 %v3646
        %v3648 = vpop.xlane.xlu0 %3647
        %v3649 = vmul.f32 %v3645, %v2528
        %v3650 = vmul.f32 %v3648, %v2528
        %v3651 = vsub.f32 %v3637, %v3649
        %v3652 = vsub.f32 %v3638, %v3649
        %v3653 = vsub.f32 %v3639, %v3650
        %v3654 = vsub.f32 %v3640, %v3650
        %v3655 = vmul.f32 %v3651, %v3651
        %v3656 = vmul.f32 %v3652, %v3652
        %v3657 = vmul.f32 %v3653, %v3653
        %v3658 = vmul.f32 %v3654, %v3654
        %v3659 = vadd.f32 %v3655, %v3656
        %3660 = vadd.xlane.f32.xlu0 %v3659
        %v3661 = vpop.xlane.xlu0 %3660
        %v3662 = vadd.f32 %v3657, %v3658
        %3663 = vadd.xlane.f32.xlu0 %v3662
        %v3664 = vpop.xlane.xlu0 %3663
        %v3665 = vmul.f32 %v3661, %v2528
        %v3666 = vmul.f32 %v3664, %v2528
        %v3667 = vadd.f32 %v3665, 1e-12
        %v3668 = vadd.f32 %v3666, 1e-12
        %v3669 = vrsqrt.pop %v3667
        %v3670 = vrsqrt.pop %v3668
        %v3671 = vmul.f32 %v3651, %v3669
        %v3672 = vmul.f32 %v3652, %v3669
        %v3673 = vmul.f32 %v3653, %v3670
        %v3674 = vmul.f32 %v3654, %v3670
        %v3676 = vlaneseq
        %v3677 = vshrl.u32 %v3676, 7
        %v3678 = vsub.s32 0, %v3677
        %v3679 = vrot.slane %v3641, %v3678
        %v3680 = vlaneseq
        %v3681 = vshrl.u32 %v3680, 7
        %v3682 = vsub.s32 1, %v3681
        %v3683 = vrot.slane %v3641, %v3682
        %v3686 = vmul.f32 %v3671, %v3679
        %v3687 = vmul.f32 %v3672, %v3683
        %v3688 = vmul.f32 %v3673, %v3679
        %v3689 = vmul.f32 %v3674, %v3683
        %v3691 = vlaneseq
        %v3692 = vshrl.u32 %v3691, 7
        %v3693 = vsub.s32 0, %v3692
        %v3694 = vrot.slane %v3642, %v3693
        %v3695 = vlaneseq
        %v3696 = vshrl.u32 %v3695, 7
        %v3697 = vsub.s32 1, %v3696
        %v3698 = vrot.slane %v3642, %v3697
        %v3701 = vadd.f32 %v3686, %v3694
        %v3702 = vadd.f32 %v3687, %v3698
        %v3703 = vadd.f32 %v3688, %v3694
        %v3704 = vadd.f32 %v3689, %v3698
        %p3705 = scmp.lt.s32.totalorder %s39, 1
        // Predicated region
        $region133: #{tpu_custom_call.1} parent=91 // pred_check
          %p3706 = pneg %p3705
        $region134: #{tpu_custom_call.1} parent=91 // pred_check_branch
          %3708 = sbr.rel (%p3706) target = $region136
        $region135: #{tpu_custom_call.1} parent=91 // pred_region
          %3709 = vst [vmem:[#allocation2] sm:$0xff] %v3701
          %3710 = vst [vmem:[#allocation2 + $0x8] sm:$0xff] %v3702
          %3711 = vst [vmem:[#allocation2 + $0x10] sm:$0xff] %v3703
          %3712 = vst [vmem:[#allocation2 + $0x18] sm:$0xff] %v3704
        $region136: #{tpu_custom_call.1} parent=91 // pred_fallthru
          _
        %p3713 = scmp.eq.s32.totalorder %s39, 1
        // Predicated region
        $region137: #{tpu_custom_call.1} parent=91 // pred_check
          %p3714 = pneg %p3713
        $region138: #{tpu_custom_call.1} parent=91 // pred_check_branch
          %3716 = sbr.rel (%p3714) target = $region140
        $region139: #{tpu_custom_call.1} parent=91 // pred_region
          %3717 = vst [vmem:[#allocation18] sm:$0xff] %v3701
          %3718 = vst [vmem:[#allocation18 + $0x8] sm:$0xff] %v3702
          %3719 = vst [vmem:[#allocation18 + $0x10] sm:$0xff] %v3703
          %3720 = vst [vmem:[#allocation18 + $0x18] sm:$0xff] %v3704
        $region140: #{tpu_custom_call.1} parent=91 // pred_fallthru
          _
        // Predicated region
        $region141: #{tpu_custom_call.1} parent=91 // pred_check
          %p3721 = pneg %p490
        $region142: #{tpu_custom_call.1} parent=91 // pred_check_branch
          %3723 = sbr.rel (%p3721) target = $region144
        $region143: #{tpu_custom_call.1} parent=91 // pred_region
          %s3725 = ssub.s32 512, 512
          %3726 = vsyncadd [#allocation5], %s3725
          %s3727 = sshll.u32 [#allocation18], 4
          %s3728 = int_to_ptr.vmem [resolvable:$true] %s3727
          %3733 = dma.vmem_to_hbm [thread:$0]  %s3728, 512, %s18, [#allocation5], 256, 256, 16
        $region144: #{tpu_custom_call.1} parent=91 // pred_fallthru
          _
        // Predicated region
        $region145: #{tpu_custom_call.1} parent=91 // pred_check
          %p3734 = pneg %p490
        $region146: #{tpu_custom_call.1} parent=91 // pred_check_branch
          %3736 = sbr.rel (%p3734) target = $region148
        $region147: #{tpu_custom_call.1} parent=91 // pred_region
          %3737 = dma.done [#allocation5], 512
        $region148: #{tpu_custom_call.1} parent=91 // pred_fallthru
          _
      $region92: #{tpu_custom_call.1} parent=5 // pred_fallthru
        _
      %p3738 = scmp.le.s32.totalorder 2, %s34
      // Predicated region
      $region149: #{tpu_custom_call.1} parent=5 // pred_check
        %p3739 = pneg %p3738
      $region150: #{tpu_custom_call.1} parent=5 // pred_check_branch
        %3741 = sbr.rel (%p3739) target = $region152
      $region151: #{tpu_custom_call.1} parent=5 // pred_region
        %s3742 = ssub.s32 %s34, 2
      $region152: #{tpu_custom_call.1} parent=5 // pred_fallthru
        _
    $region6: #{tpu_custom_call.1} parent=1 // loop_footer
      %s38 = sadd.s32 1, %s34
    $region7: #{tpu_custom_call.1} parent=1 // loop_footer_branch
      %33 = sbr.rel target = $region3
    $region8: #{tpu_custom_call.1} parent=1 // loop_exit
      _
    %3743 = vsyncpa [#allocation4], 1
    %s3744 = scalar_lea.sflag [#allocation4], 1
    %3745 = vsyncpa %s3744, 1
    %3746 = vsyncpa [#allocation7], 1
    %3747 = vsyncpa [#allocation10], 1
    %3748 = vsyncpa [#allocation13], 1
    %s3749 = scalar_lea.sflag [#allocation13], 1
    %3750 = vsyncpa %s3749, 1
    %3751 = vsyncpa [#allocation16], 1
    %s3752 = scalar_lea.sflag [#allocation16], 1
    %3753 = vsyncpa %s3752, 1
    %3754 = vsyncpa [#allocation5], 1
    %s3755 = scalar_lea.sflag [#allocation5], 1
    %3756 = vsyncpa %s3755, 1

</llo_original>
